<compile_context>
chip_gen: v5e
topology: v5e:2x2
jax: 0.10.0
libtpu: 0.0.40
codegen_flags: <defaults>
</compile_context>

<pallas_src>
import math
import numpy as np

import jax
import jax.numpy as jnp
from jax.experimental import pallas as pl
from jax.experimental.pallas import tpu as pltpu  # noqa: F401  (TPU backend)

# ----------------------- configuration (small RANF) -----------------------
HIDDEN = 32                 # hidden_features (must be even)
HIDDEN_LAYERS = 1
SPEC_HIDDEN_LAYERS = 1
ITD_HIDDEN_LAYERS = 1
CONV_IN = 2
EMB_IN = 3
N_LISTENERS = 8
LORA_RANK = 1
ITD_SCALE = math.pi / 45.0
PRELU_ALPHA = 0.25
LN_EPS = 1e-5

# (stride, padding) per conv layer; kernel sizes come from the weight shapes.
SPEC_ENC_CFG = [(1, 1), (2, 2), (2, 2)]
SPEC_DEC_CFG = [(2, 2), (2, 2), (1, 1)]


# --------------------------- in-kernel helpers -----------------------------
def _erf(x):
    # Abramowitz & Stegun 7.1.26 (|err| < 1.5e-7): only exp/mul/add/where.
    a = jnp.abs(x)
    t = 1.0 / (1.0 + 0.3275911 * a)
    poly = t * (0.254829592 + t * (-0.284496736 + t * (1.421413741
               + t * (-1.453152027 + t * 1.061405429))))
    e = 1.0 - poly * jnp.exp(-a * a)
    return jnp.where(x >= 0.0, e, -e)


def _gelu(x):
    return 0.5 * x * (1.0 + _erf(x * 0.7071067811865476))


# ------------------------- host-side weight packing -------------------------
class _Slab:
    """Row-stacked weight slab with a fixed lane width and static offsets."""

    def __init__(self, width):
        self.width = width
        self._rows = []
        self.off = {}           # name -> (row_offset, n_rows, n_cols)
        self._n = 0

    def add(self, name, mat):
        mat = np.asarray(mat, np.float32)
        if mat.ndim == 1:
            mat = mat[None, :]
        r, c = mat.shape
        assert c <= self.width, (name, c, self.width)
        buf = np.zeros((r, self.width), np.float32)
        buf[:, :c] = mat
        self._rows.append(buf)
        self.off[name] = (self._n, r, c)
        self._n += r

    def build(self):
        return jnp.asarray(np.concatenate(self._rows, axis=0))


def _blockdiag(w, n):
    return np.kron(np.eye(n, dtype=np.float32), np.asarray(w, np.float32))


def pack_params(params, batch, K, nch, nfreq):
    """Pack all weights (block-diagonal, lane-dense) once, outside jit."""
    H, Hh = HIDDEN, HIDDEN // 2
    B = batch
    BK = B * K
    WX = BK * H           # 128 : main activation lane width
    WH = B * H            # 64  : lane width after the K-mean
    L_in = nfreq - 1
    assert params["spec_enc"][0]["w"].shape[1] == nch

    arrays = {}
    cfg = dict(B=B, K=K, BK=BK, H=H, Hh=Hh, WX=WX, WH=WH, L_in=L_in,
               n_spec=SPEC_HIDDEN_LAYERS, n_itd=ITD_HIDDEN_LAYERS)

    # ------------------------------ encoder ------------------------------
    emb_w = np.asarray(params["emb_w"], np.float32)        # [2H, H]
    emb_b = np.asarray(params["emb_b"], np.float32)        # [2H]
    embW = np.zeros((WX, 2 * WX), np.float32)
    embB = np.zeros((1, 2 * WX), np.float32)
    for bk in range(BK):
        r0 = bk * H
        embW[r0:r0 + H, r0:r0 + H] = emb_w[:H, :].T                 # emb0
        embW[r0:r0 + H, WX + r0:WX + r0 + H] = emb_w[H:, :].T       # emb1
        embB[0, r0:r0 + H] = emb_b[:H]
        embB[0, WX + r0:WX + r0 + H] = emb_b[H:]
    arrays["emb_w"] = jnp.asarray(embW)
    arrays["emb_b"] = jnp.asarray(embB)

    enc_w = _Slab(WX)
    enc_a = _Slab(L_in)
    enc_rows = _Slab(WX)
    enc_layers = []
    L = L_in
    for li, (lp, (s, p)) in enumerate(zip(params["spec_enc"], SPEC_ENC_CFG)):
        w = np.asarray(lp["w"], np.float32)                  # [Cout, Cin, ks]
        bias = np.asarray(lp["b"], np.float32)
        alpha = float(np.asarray(lp["a"])[0])
        Cout, Cin, ks = w.shape
        Lout = (L + 2 * p - ks) // s + 1
        for kk in range(ks):
            enc_w.add(f"w{li}_{kk}", _blockdiag(w[:, :, kk].T, BK))
            A = np.zeros((Lout, L), np.float32)              # row-select matrix
            for j in range(Lout):
                i = j * s + kk - p
                if 0 <= i < L:
                    A[j, i] = 1.0
            enc_a.add(f"a{li}_{kk}", A)
        enc_rows.add(f"b{li}", np.tile(bias, BK))
        enc_rows.add(f"al{li}", np.full((BK * Cout,), alpha, np.float32))
        enc_layers.append(dict(li=li, ks=ks, L_in=L, L_out=Lout,
                               cin=BK * Cin, cout=BK * Cout))
        L = Lout
    L_enc = L
    F = L_enc + 2
    arrays["enc_w"] = enc_w.build()
    arrays["enc_a"] = enc_a.build()
    arrays["enc_rows"] = enc_rows.build()
    cfg.update(enc_layers=enc_layers, enc_w_off=enc_w.off, enc_a_off=enc_a.off,
               enc_rows_off=enc_rows.off, L_enc=L_enc, F=F)

    # --------------------------- hidden blocks ---------------------------
    arrays["J"] = jnp.asarray(np.eye(F, dtype=np.float32)[::-1].copy())
    hs_a, hs_b, hs_rows = [], [], []
    for n in range(HIDDEN_LAYERS):
        hp = params["hidden"][n]
        lstm = hp["lstm"]
        wih_f = np.asarray(lstm["w_ih_f"], np.float32)       # [4Hh, H]
        wih_b = np.asarray(lstm["w_ih_b"], np.float32)
        whh_f = np.asarray(lstm["w_hh_f"], np.float32)       # [4Hh, Hh]
        whh_b = np.asarray(lstm["w_hh_b"], np.float32)
        bf = (np.asarray(lstm["b_ih_f"], np.float32)
              + np.asarray(lstm["b_hh_f"], np.float32))
        bb = (np.asarray(lstm["b_ih_b"], np.float32)
              + np.asarray(lstm["b_hh_b"], np.float32))
        # gate column layout: [i | f | g | o] blocks of 128, each block uses
        # the state lane layout (bk*32 + [fwd 0:16 | bwd 16:32]).
        WihF = np.zeros((WX, 4 * WX), np.float32)
        WihB = np.zeros((WX, 4 * WX), np.float32)
        Whh = np.zeros((WX, 4 * WX), np.float32)
        brow = np.zeros((1, 4 * WX), np.float32)
        for bk in range(BK):
            for G in range(4):
                cf = G * WX + bk * H            # fwd gate columns
                cb = cf + Hh                    # bwd gate columns
                WihF[bk * H:(bk + 1) * H, cf:cf + Hh] = wih_f[G * Hh:(G + 1) * Hh, :].T
                WihB[bk * H:(bk + 1) * H, cb:cb + Hh] = wih_b[G * Hh:(G + 1) * Hh, :].T
                Whh[bk * H:bk * H + Hh, cf:cf + Hh] = whh_f[G * Hh:(G + 1) * Hh, :].T
                Whh[bk * H + Hh:(bk + 1) * H, cb:cb + Hh] = whh_b[G * Hh:(G + 1) * Hh, :].T
                brow[0, cf:cf + Hh] = bf[G * Hh:(G + 1) * Hh]
                brow[0, cb:cb + Hh] = bb[G * Hh:(G + 1) * Hh]
        slab_a = np.concatenate([WihF, WihB, Whh, brow], axis=0)   # [3*WX+1, 4*WX]

        # merged pass|ave in-linear with the TAC mean-over-K folded in
        wp = np.asarray(hp["w_pass"], np.float32)
        bp = np.asarray(hp["b_pass"], np.float32)
        wa = np.asarray(hp["w_ave"], np.float32)
        ba = np.asarray(hp["b_ave"], np.float32)
        WinT = np.zeros((WX, WX), np.float32)
        binr = np.zeros((1, WX), np.float32)
        for b_ in range(B):
            for ki in range(K):
                bki = b_ * K + ki
                WinT[bki * H:(bki + 1) * H, bki * H:bki * H + Hh] = wp.T
                for ko in range(K):
                    bko = b_ * K + ko
                    WinT[bki * H:(bki + 1) * H, bko * H + Hh:(bko + 1) * H] += wa.T / K
        for bk in range(BK):
            binr[0, bk * H:bk * H + Hh] = bp
            binr[0, bk * H + Hh:(bk + 1) * H] = ba
        Wout = _blockdiag(np.asarray(hp["w_out"], np.float32).T, BK)
        bout = np.tile(np.asarray(hp["b_out"], np.float32), BK)[None, :]
        Sseg = _blockdiag(np.ones((H, H), np.float32), BK)   # per-bk segment sums
        slab_b = np.concatenate([WinT, Wout, Sseg], axis=0)  # [3*WX, WX]

        g_row = np.tile(np.asarray(hp["ln_g"], np.float32), BK)[None, :]
        beta_row = np.tile(np.asarray(hp["ln_b"], np.float32), BK)[None, :]
        fwd_mask = np.tile(np.concatenate([np.ones((Hh,), np.float32),
                                           np.zeros((Hh,), np.float32)]),
                           BK)[None, :]
        rows = np.concatenate([binr, bout, g_row, beta_row, fwd_mask], axis=0)

        hs_a.append(jnp.asarray(slab_a))
        hs_b.append(jnp.asarray(slab_b))
        hs_rows.append(jnp.asarray(rows))
    arrays["hid_a"] = hs_a
    arrays["hid_b"] = hs_b
    arrays["hid_rows"] = hs_rows

    # -------------------------------- head --------------------------------
    # K-mean as an F-independent lane-space fold matrix [BK*H, B*H]
    Mk = _blockdiag(np.kron(np.ones((K, 1), np.float32) / K,
                            np.eye(H, dtype=np.float32)), B)
    arrays["mk"] = jnp.asarray(Mk)

    slab64 = _Slab(WH)
    rows64 = _Slab(WH)
    slab64.add("sseg", _blockdiag(np.ones((H, H), np.float32), B))
    for n in range(SPEC_HIDDEN_LAYERS):
        sp = params["spec_hidden"][n]
        slab64.add(f"spec_w{n}", _blockdiag(np.asarray(sp["w"], np.float32).T, B))
        rows64.add(f"spec_b{n}", np.tile(np.asarray(sp["b"], np.float32), B))
    for n in range(ITD_HIDDEN_LAYERS):
        ip = params["itd_hidden"][n]
        slab64.add(f"itd_w{n}", _blockdiag(np.asarray(ip["w"], np.float32).T, B))
        rows64.add(f"itd_b{n}", np.tile(np.asarray(ip["b"], np.float32), B))
    slab64.add("itd1_w", _blockdiag(np.asarray(params["itd1_w"], np.float32).T, B))
    slab64.add("itd2_w", _blockdiag(np.asarray(params["itd2_w"], np.float32).T, B))
    rows64.add("itd1_b", np.tile(np.asarray(params["itd1_b"], np.float32), B))
    rows64.add("itd2_b", np.tile(np.asarray(params["itd2_b"], np.float32), B))

    # decoder geometry (needed for the A-slab lane width)
    Ls = [L_enc]
    for lp, (s, p) in zip(params["spec_dec"], SPEC_DEC_CFG):
        ks = int(np.asarray(lp["w"]).shape[-1])
        Ls.append((Ls[-1] - 1) * s - 2 * p + ks)
    dec_w = _Slab(WH)
    dec_a = _Slab(max(Ls[:-1]))
    dec_layers = []
    L = L_enc
    for li, (lp, (s, p)) in enumerate(zip(params["spec_dec"], SPEC_DEC_CFG)):
        w = np.asarray(lp["w"], np.float32)                  # [Cin, Cout, ks]
        bias = np.asarray(lp["b"], np.float32)
        alpha = float(np.asarray(lp["a"])[0])
        Cin, Cout, ks = w.shape
        Lout = (L - 1) * s - 2 * p + ks
        for m in range(ks):
            dec_w.add(f"dw{li}_{m}", _blockdiag(w[:, :, m], B))
            A = np.zeros((Lout, L), np.float32)              # row-scatter matrix
            for i in range(L):
                j = i * s + m - p
                if 0 <= j < Lout:
                    A[j, i] = 1.0
            dec_a.add(f"da{li}_{m}", A)
        rows64.add(f"dec_b{li}", np.tile(bias, B))
        rows64.add(f"dec_al{li}", np.full((B * Cout,), alpha, np.float32))
        dec_layers.append(dict(li=li, ks=ks, L_in=L, L_out=Lout,
                               cin=B * Cin, cout=B * Cout))
        L = Lout
    L_dec = L
    assert L_dec == L_in, (L_dec, L_in)
    arrays["slab64"] = slab64.build()
    arrays["rows64"] = rows64.build()
    arrays["dec_w"] = dec_w.build()
    arrays["dec_a"] = dec_a.build()
    cfg.update(dec_layers=dec_layers, dec_w_off=dec_w.off, dec_a_off=dec_a.off,
               slab64_off=slab64.off, rows64_off=rows64.off,
               L_dec=L_dec, est_w=dec_layers[-1]["cout"])

    # raw params still needed by the tiny in-jit glue (runtime-dependent)
    arrays["bmat"] = params["bmat"]
    arrays["loc_bmat"] = params["loc_bmat"]
    arrays["lorau"] = list(params["lorau"])
    arrays["lorav"] = list(params["lorav"])
    return arrays, cfg


# ------------------------------ fused kernels ------------------------------
def _make_encoder_kernel(cfg):
    WX = cfg["WX"]
    F = cfg["F"]
    L_enc = cfg["L_enc"]
    layers = cfg["enc_layers"]
    w_off = cfg["enc_w_off"]
    a_off = cfg["enc_a_off"]
    r_off = cfg["enc_rows_off"]

    def kernel(emb_ref, xs_ref, embw_ref, embb_ref, wslab_ref, aslab_ref,
               rows_ref, out_ref):
        # embedding MLP (exact GELU); rows 0 and F-1 of the feature tensor
        e = jnp.dot(emb_ref[...], embw_ref[...],
                    preferred_element_type=jnp.float32) + embb_ref[...]
        e = _gelu(e)
        out_ref[0:1, :] = e[:, 0:WX]
        out_ref[F - 1:F, :] = e[:, WX:2 * WX]

        # Conv1d stack: per-tap (row-select @ x @ channel-weight) accumulation
        y = xs_ref[...]                                   # [L_in, BK*Cin0]
        for lc in layers:
            li, ks = lc["li"], lc["ks"]
            Lout, cout = lc["L_out"], lc["cout"]
            acc = jnp.zeros((Lout, cout), jnp.float32)
            for kk in range(ks):
                wo, wn, wc = w_off[f"w{li}_{kk}"]
                ao, an, ac = a_off[f"a{li}_{kk}"]
                w = wslab_ref[wo:wo + wn, 0:wc]
                a = aslab_ref[ao:ao + an, 0:ac]
                acc = acc + jnp.dot(
                    jnp.dot(a, y, preferred_element_type=jnp.float32),
                    w, preferred_element_type=jnp.float32)
            bo, _, bc = r_off[f"b{li}"]
            po, _, pc = r_off[f"al{li}"]
            acc = acc + rows_ref[bo:bo + 1, 0:bc]
            alpha = rows_ref[po:po + 1, 0:pc]
            y = jnp.where(acc >= 0.0, acc, alpha * acc)    # PReLU
        out_ref[1:1 + L_enc, :] = y

    return kernel


def _make_hidden_kernel(cfg):
    WX = cfg["WX"]
    F = cfg["F"]
    H = cfg["H"]

    def kernel(x_ref, slab_a_ref, slab_b_ref, rows_ref, dyn_ref, j_ref, o_ref):
        x = x_ref[...]                                     # [F, 128]
        J = j_ref[...]                                     # [F, F] row reversal
        xr = jnp.dot(J, x, preferred_element_type=jnp.float32)

        wih_f = slab_a_ref[0:WX, :]
        wih_b = slab_a_ref[WX:2 * WX, :]
        whh = slab_a_ref[2 * WX:3 * WX, :]
        gbias = slab_a_ref[3 * WX:3 * WX + 1, :]
        # hoisted input projection for BOTH directions (backward rows reversed)
        xproj = (jnp.dot(x, wih_f, preferred_element_type=jnp.float32)
                 + jnp.dot(xr, wih_b, preferred_element_type=jnp.float32)
                 + gbias)                                  # [F, 512]

        h = jnp.zeros((1, WX), jnp.float32)
        c = jnp.zeros((1, WX), jnp.float32)
        hs = []
        for s in range(F):
            # ONE fused (1,128)x(128,512) MXU op per step: both directions,
            # all four gates; gate slices are whole 128-lane vreg slices.
            pre = xproj[s:s + 1, :] + jnp.dot(
                h, whh, preferred_element_type=jnp.float32)
            gi = jax.nn.sigmoid(pre[:, 0:WX])
            gf = jax.nn.sigmoid(pre[:, WX:2 * WX])
            gg = jnp.tanh(pre[:, 2 * WX:3 * WX])
            go = jax.nn.sigmoid(pre[:, 3 * WX:4 * WX])
            c = gf * c + gi * gg
            h = go * jnp.tanh(c)
            hs.append(h)
        h_all = jnp.concatenate(hs, axis=0)                # step-ordered states
        h_rev = jnp.dot(J, h_all, preferred_element_type=jnp.float32)
        fwd_m = rows_ref[4:5, :]
        lstm = h_all * fwd_m + h_rev * (1.0 - fwd_m)       # BiLSTM output [F,128]

        win = slab_b_ref[0:WX, :]
        wout = slab_b_ref[WX:2 * WX, :]
        sseg = slab_b_ref[2 * WX:3 * WX, :]
        bin_r = rows_ref[0:1, :]
        bout_r = rows_ref[1:2, :]
        g_r = rows_ref[2:3, :]
        beta_r = rows_ref[3:4, :]
        u_r = dyn_ref[0:1, :]
        v_r = dyn_ref[1:2, :]

        # pass|ave in-linear with TAC mean-over-K folded into the weight
        xact = _gelu(jnp.dot(lstm, win, preferred_element_type=jnp.float32)
                     + bin_r)
        # rank-1 LoRA: z = u * mean_h(v * x)  (per-bk segment sums on the MXU)
        z = u_r * (jnp.dot(xact * v_r, sseg,
                           preferred_element_type=jnp.float32) * (1.0 / H))
        xo = _gelu(jnp.dot(xact, wout, preferred_element_type=jnp.float32)
                   + bout_r + z)
        # LayerNorm over the per-(b,k) feature segment
        mu = jnp.dot(xo, sseg, preferred_element_type=jnp.float32) * (1.0 / H)
        xc = xo - mu
        var = jnp.dot(xc * xc, sseg,
                      preferred_element_type=jnp.float32) * (1.0 / H)
        ln = xc * jax.lax.rsqrt(var + LN_EPS) * g_r + beta_r
        o_ref[...] = x + ln                                # residual

    return kernel


def _make_head_kernel(cfg):
    H = cfg["H"]
    F = cfg["F"]
    n_spec = cfg["n_spec"]
    n_itd = cfg["n_itd"]
    L_dec = cfg["L_dec"]
    dec_layers = cfg["dec_layers"]
    s64 = cfg["slab64_off"]
    r64 = cfg["rows64_off"]
    dwo = cfg["dec_w_off"]
    dao = cfg["dec_a_off"]

    def kernel(x_ref, mk_ref, slab64_ref, decw_ref, deca_ref, rows_ref,
               dyn_ref, est_ref, itd_ref):
        # mean over the K retrievals (lane-space fold matrix, MXU)
        xm = jnp.dot(x_ref[...], mk_ref[...],
                     preferred_element_type=jnp.float32)       # [F, B*H]
        x_itd = xm[0:1, :] + xm[F - 1:F, :]
        xs = xm[1:F - 1, :]

        so, sn, sc = s64["sseg"]
        sseg = slab64_ref[so:so + sn, 0:sc]

        # spec-hidden LoRA MLP layers
        for n in range(n_spec):
            wo, wn, wc = s64[f"spec_w{n}"]
            bo, _, bc = r64[f"spec_b{n}"]
            w = slab64_ref[wo:wo + wn, 0:wc]
            brow = rows_ref[bo:bo + 1, 0:bc]
            u = dyn_ref[2 * n:2 * n + 1, :]
            v = dyn_ref[2 * n + 1:2 * n + 2, :]
            z = u * (jnp.dot(xs * v, sseg,
                             preferred_element_type=jnp.float32) * (1.0 / H))
            xs = _gelu(jnp.dot(xs, w, preferred_element_type=jnp.float32)
                       + brow + z)

        # ConvTranspose1d decoder via per-tap scatter matmuls + PReLU
        y = xs
        for lc in dec_layers:
            li, ks = lc["li"], lc["ks"]
            Lout, cout = lc["L_out"], lc["cout"]
            acc = jnp.zeros((Lout, cout), jnp.float32)
            for m in range(ks):
                wo, wn, wc = dwo[f"dw{li}_{m}"]
                ao, an, ac = dao[f"da{li}_{m}"]
                w = decw_ref[wo:wo + wn, 0:wc]
                a = deca_ref[ao:ao + an, 0:ac]
                acc = acc + jnp.dot(
                    a, jnp.dot(y, w, preferred_element_type=jnp.float32),
                    preferred_element_type=jnp.float32)
            bo, _, bc = r64[f"dec_b{li}"]
            po, _, pc = r64[f"dec_al{li}"]
            acc = acc + rows_ref[bo:bo + 1, 0:bc]
            alpha = rows_ref[po:po + 1, 0:pc]
            y = jnp.where(acc >= 0.0, acc, alpha * acc)
        # replicate-pad the last frequency; store straight into the output
        est_ref[0:L_dec, :] = y
        est_ref[L_dec:L_dec + 1, :] = y[L_dec - 1:L_dec, :]

        # ITD path: LoRA MLP, skip connection, 2-layer head
        xi = x_itd
        for n in range(n_itd):
            wo, wn, wc = s64[f"itd_w{n}"]
            bo, _, bc = r64[f"itd_b{n}"]
            w = slab64_ref[wo:wo + wn, 0:wc]
            brow = rows_ref[bo:bo + 1, 0:bc]
            u = dyn_ref[2 * n_spec + 2 * n:2 * n_spec + 2 * n + 1, :]
            v = dyn_ref[2 * n_spec + 2 * n + 1:2 * n_spec + 2 * n + 2, :]
            z = u * (jnp.dot(xi * v, sseg,
                             preferred_element_type=jnp.float32) * (1.0 / H))
            xi = _gelu(jnp.dot(xi, w, preferred_element_type=jnp.float32)
                       + brow + z)
        loc = dyn_ref[2 * n_spec + 2 * n_itd:2 * n_spec + 2 * n_itd + 1, :]
        xi = xi + loc
        w1o, w1n, w1c = s64["itd1_w"]
        w2o, w2n, w2c = s64["itd2_w"]
        b1o, _, b1c = r64["itd1_b"]
        b2o, _, b2c = r64["itd2_b"]
        h1 = _gelu(jnp.dot(xi, slab64_ref[w1o:w1o + w1n, 0:w1c],
                           preferred_element_type=jnp.float32)
                   + rows_ref[b1o:b1o + 1, 0:b1c])
        itd_ref[...] = (jnp.dot(h1, slab64_ref[w2o:w2o + w2n, 0:w2c],
                                preferred_element_type=jnp.float32)
                        + rows_ref[b2o:b2o + 1, 0:b2c])

    return kernel


# ------------------------------ RANF forward -------------------------------
def build_ranf(params, batch, K, nch, nfreq):
    arrays, cfg = pack_params(params, batch, K, nch, nfreq)
    H = cfg["H"]
    B, BK = cfg["B"], cfg["BK"]
    F, WX, WH, L_in = cfg["F"], cfg["WX"], cfg["WH"], cfg["L_in"]
    L_dec = cfg["L_dec"]

    enc_call = pl.pallas_call(
        _make_encoder_kernel(cfg),
        out_shape=jax.ShapeDtypeStruct((F, WX), jnp.float32))
    hid_call = pl.pallas_call(
        _make_hidden_kernel(cfg),
        out_shape=jax.ShapeDtypeStruct((F, WX), jnp.float32),
        input_output_aliases={0: 0})
    head_call = pl.pallas_call(
        _make_head_kernel(cfg),
        out_shape=(jax.ShapeDtypeStruct((L_dec + 1, cfg["est_w"]), jnp.float32),
                   jax.ShapeDtypeStruct((1, B), jnp.float32)))

    def forward(ret_specs_db, ret_itds, tgt_loc, tgt_sidx, ret_sidxs):
        tgt_onehot = jax.nn.one_hot(tgt_sidx, N_LISTENERS, dtype=jnp.float32)
        ret_onehot = jax.nn.one_hot(ret_sidxs, N_LISTENERS, dtype=jnp.float32)

        # Fourier positional embedding for the retrievals (tiny glue)
        az = jnp.tile(tgt_loc[:, :1], (1, K))
        el = jnp.tile(tgt_loc[:, 1:2], (1, K))
        emb = jnp.stack([az, el, ITD_SCALE * ret_itds], -1)
        emb = jnp.concatenate([jnp.sin(emb), jnp.cos(emb)], -1)
        emb = jnp.einsum("bkn,mn->bkm", emb, arrays["bmat"])
        emb = jnp.concatenate([jnp.sin(emb), jnp.cos(emb)], -1)     # [B, K, H]
        emb_row = emb.reshape(1, BK * H)

        # spectra as freq-major rows, lanes = (b, k, ch)
        xs_rows = jnp.transpose(ret_specs_db[..., :L_in],
                                (3, 0, 1, 2)).reshape(L_in, BK * nch)

        # ---- kernel 1: emb MLP + Conv1d spec encoder -> [F, BK*H] ----
        x = enc_call(emb_row, xs_rows, arrays["emb_w"], arrays["emb_b"],
                     arrays["enc_w"], arrays["enc_a"], arrays["enc_rows"])

        # ---- kernel 2: LSTMLoRATAC hidden blocks (residual inside) ----
        for n in range(HIDDEN_LAYERS):
            u_row = jnp.tile((tgt_onehot @ arrays["lorau"][n].T)[:, None, :],
                             (1, K, 1)).reshape(1, BK * H)
            v_row = (ret_onehot @ arrays["lorav"][n].T).reshape(1, BK * H)
            dyn = jnp.concatenate([u_row, v_row], axis=0)
            x = hid_call(x, arrays["hid_a"][n], arrays["hid_b"][n],
                         arrays["hid_rows"][n], dyn, arrays["J"])

        # ---- kernel 3: K-mean + spec decoder + ITD head ----
        dyn_rows = []
        for n in range(SPEC_HIDDEN_LAYERS):
            m = HIDDEN_LAYERS + n
            dyn_rows.append((tgt_onehot @ arrays["lorau"][m].T).reshape(1, WH))
            dyn_rows.append((tgt_onehot @ arrays["lorav"][m].T).reshape(1, WH))
        for n in range(ITD_HIDDEN_LAYERS):
            m = HIDDEN_LAYERS + SPEC_HIDDEN_LAYERS + n
            dyn_rows.append((tgt_onehot @ arrays["lorau"][m].T).reshape(1, WH))
            dyn_rows.append((tgt_onehot @ arrays["lorav"][m].T).reshape(1, WH))
        loc = jnp.stack([jnp.sin(tgt_loc[:, 0]), jnp.cos(tgt_loc[:, 0]),
                         jnp.sin(tgt_loc[:, 1]), jnp.cos(tgt_loc[:, 1])], -1)
        loc_emb = loc @ arrays["loc_bmat"].T
        loc_emb = jnp.concatenate([jnp.sin(loc_emb), jnp.cos(loc_emb)], -1)
        dyn_rows.append(loc_emb.reshape(1, WH))
        head_dyn = jnp.concatenate(dyn_rows, axis=0)

        est2d, itd2d = head_call(x, arrays["mk"], arrays["slab64"],
                                 arrays["dec_w"], arrays["dec_a"],
                                 arrays["rows64"], head_dyn)

        estimate = jnp.transpose(
            est2d.reshape(L_dec + 1, B, cfg["est_w"] // B), (1, 2, 0))
        itd = itd2d.reshape(B, 1)
        return estimate, itd

    return jax.jit(forward)


# ------------------------------- parameters --------------------------------
def init_params(key):
    H, H2 = HIDDEN, HIDDEN // 2
    counter = [0]

    def nrm(shape, scale=0.1):
        counter[0] += 1
        return scale * jax.random.normal(jax.random.fold_in(key, counter[0]),
                                         shape, jnp.float32)

    def prelu():
        return jnp.full((1,), PRELU_ALPHA, jnp.float32)

    p = {
        "bmat": nrm((H2, EMB_IN * 2), 1.0),
        "loc_bmat": nrm((H2, 4), 1.0),
        "emb_w": nrm((2 * H, H)), "emb_b": nrm((2 * H,)),
        "itd1_w": nrm((H2, H)), "itd1_b": nrm((H2,)),
        "itd2_w": nrm((1, H2)), "itd2_b": nrm((1,)),
        "spec_enc": [
            dict(w=nrm((H2, CONV_IN, 3)), b=nrm((H2,)), a=prelu()),
            dict(w=nrm((H2, H2, 5)), b=nrm((H2,)), a=prelu()),
            dict(w=nrm((H, H2, 5)), b=nrm((H,)), a=prelu()),
        ],
        "spec_dec": [
            dict(w=nrm((H, H2, 6)), b=nrm((H2,)), a=prelu()),
            dict(w=nrm((H2, H2, 6)), b=nrm((H2,)), a=prelu()),
            dict(w=nrm((H2, 2, 3)), b=nrm((2,)), a=prelu()),
        ],
    }
    p["hidden"] = []
    for _ in range(HIDDEN_LAYERS):
        p["hidden"].append(dict(
            lstm=dict(
                w_ih_f=nrm((4 * H2, H)), w_hh_f=nrm((4 * H2, H2)),
                b_ih_f=nrm((4 * H2,)), b_hh_f=nrm((4 * H2,)),
                w_ih_b=nrm((4 * H2, H)), w_hh_b=nrm((4 * H2, H2)),
                b_ih_b=nrm((4 * H2,)), b_hh_b=nrm((4 * H2,)),
            ),
            w_pass=nrm((H2, H)), b_pass=nrm((H2,)),
            w_ave=nrm((H2, H)), b_ave=nrm((H2,)),
            w_out=nrm((H, H)), b_out=nrm((H,)),
            ln_g=jnp.ones((H,), jnp.float32), ln_b=jnp.zeros((H,), jnp.float32),
        ))
    p["spec_hidden"] = [dict(w=nrm((H, H)), b=nrm((H,)))
                        for _ in range(SPEC_HIDDEN_LAYERS)]
    p["itd_hidden"] = [dict(w=nrm((H, H)), b=nrm((H,)))
                       for _ in range(ITD_HIDDEN_LAYERS)]
    nuv = HIDDEN_LAYERS + SPEC_HIDDEN_LAYERS + ITD_HIDDEN_LAYERS
    # NOTE: the torch module zero-inits lorau (so LoRA contributions vanish at
    # init); small random values are used so the LoRA path is exercised.
    p["lorau"] = [nrm((H * LORA_RANK, N_LISTENERS)) for _ in range(nuv)]
    p["lorav"] = [nrm((H * LORA_RANK, N_LISTENERS)) for _ in range(nuv)]
    return p


# ---------------------------------- main ------------------------------------
if __name__ == "__main__":
    key = jax.random.PRNGKey(0)
    kparam, kdata = jax.random.split(key)
    params = init_params(kparam)

    batch, K, nch, nfreq = 2, 2, 2, 17
    k1, k2, k3, k4, k5 = jax.random.split(kdata, 5)
    ret_specs_db = jax.random.normal(k1, (batch, K, nch, nfreq), jnp.float32)
    ret_itds = jax.random.normal(k2, (batch, K), jnp.float32)
    tgt_loc = jax.random.normal(k3, (batch, 3), jnp.float32)
    tgt_sidx = jax.random.randint(k4, (batch,), 0, N_LISTENERS)
    ret_sidxs = jax.random.randint(k5, (batch, K), 0, N_LISTENERS)

    fwd = build_ranf(params, batch, K, nch, nfreq)
    estimate, itd = fwd(ret_specs_db, ret_itds, tgt_loc, tgt_sidx, ret_sidxs)
    jax.block_until_ready((estimate, itd))

    assert estimate.shape == (batch, 2, nfreq), estimate.shape
    assert itd.shape == (batch, 1), itd.shape
    assert jnp.all(jnp.isfinite(estimate)) and jnp.all(jnp.isfinite(itd))
    print("KERNEL_OK")
</pallas_src>

<mosaic_0001>
module attributes {stable_mosaic.version = 11 : i64} {
  func.func @kernel(%arg0: memref<6x128xf32, #tpu.memory_space<vmem>>, %arg1: memref<385x512xf32, #tpu.memory_space<vmem>>, %arg2: memref<384x128xf32, #tpu.memory_space<vmem>>, %arg3: memref<5x128xf32, #tpu.memory_space<vmem>>, %arg4: memref<2x128xf32, #tpu.memory_space<vmem>>, %arg5: memref<6x6xf32, #tpu.memory_space<vmem>>, %arg6: memref<6x128xf32, #tpu.memory_space<vmem>>) attributes {dimension_semantics = [], scalar_prefetch = 0 : i64, scratch_operands = 0 : i64, tpu.core_type = #tpu.core_type<tc>} {
    %c0 = arith.constant 0 : index
    %c0_0 = arith.constant 0 : index
    %0 = vector.load %arg0[%c0, %c0_0] : memref<6x128xf32, #tpu.memory_space<vmem>>, vector<6x128xf32>
    %c0_1 = arith.constant 0 : index
    %c0_2 = arith.constant 0 : index
    %1 = vector.load %arg5[%c0_1, %c0_2] : memref<6x6xf32, #tpu.memory_space<vmem>>, vector<6x6xf32>
    %cst = arith.constant dense<0.000000e+00> : vector<6x128xf32>
    %2 = tpu.matmul %1, %0, %cst {dimension_numbers = #tpu.dot_dimension_numbers<[1], [0], [0], [1], [0, 0, 1, 1], [], []>} : vector<6x6xf32>, vector<6x128xf32>, vector<6x128xf32> -> vector<6x128xf32>
    %c0_3 = arith.constant 0 : index
    %c0_4 = arith.constant 0 : index
    %3 = vector.load %arg1[%c0_3, %c0_4] : memref<385x512xf32, #tpu.memory_space<vmem>>, vector<128x512xf32>
    %c128 = arith.constant 128 : index
    %c0_5 = arith.constant 0 : index
    %4 = vector.load %arg1[%c128, %c0_5] : memref<385x512xf32, #tpu.memory_space<vmem>>, vector<128x512xf32>
    %c256 = arith.constant 256 : index
    %c0_6 = arith.constant 0 : index
    %5 = vector.load %arg1[%c256, %c0_6] : memref<385x512xf32, #tpu.memory_space<vmem>>, vector<128x512xf32>
    %c384 = arith.constant 384 : index
    %c0_7 = arith.constant 0 : index
    %6 = vector.load %arg1[%c384, %c0_7] : memref<385x512xf32, #tpu.memory_space<vmem>>, vector<1x512xf32>
    %cst_8 = arith.constant dense<0.000000e+00> : vector<6x512xf32>
    %7 = tpu.matmul %0, %3, %cst_8 {dimension_numbers = #tpu.dot_dimension_numbers<[1], [0], [0], [1], [0, 0, 1, 1], [], []>} : vector<6x128xf32>, vector<128x512xf32>, vector<6x512xf32> -> vector<6x512xf32>
    %cst_9 = arith.constant dense<0.000000e+00> : vector<6x512xf32>
    %8 = tpu.matmul %2, %4, %cst_9 {dimension_numbers = #tpu.dot_dimension_numbers<[1], [0], [0], [1], [0, 0, 1, 1], [], []>} : vector<6x128xf32>, vector<128x512xf32>, vector<6x512xf32> -> vector<6x512xf32>
    %9 = arith.addf %7, %8 : vector<6x512xf32>
    %10 = vector.broadcast %6 : vector<1x512xf32> to vector<6x512xf32>
    %11 = arith.addf %9, %10 : vector<6x512xf32>
    %cst_10 = arith.constant 0.000000e+00 : f32
    %12 = vector.broadcast %cst_10 : f32 to vector<1x128xf32>
    %cst_11 = arith.constant 0.000000e+00 : f32
    %13 = vector.broadcast %cst_11 : f32 to vector<1x128xf32>
    %14 = vector.extract_strided_slice %11 {offsets = [0, 0], sizes = [1, 512], strides = [1, 1]} : vector<6x512xf32> to vector<1x512xf32>
    %cst_12 = arith.constant dense<0.000000e+00> : vector<1x512xf32>
    %15 = tpu.matmul %12, %5, %cst_12 {dimension_numbers = #tpu.dot_dimension_numbers<[1], [0], [0], [1], [0, 0, 1, 1], [], []>} : vector<1x128xf32>, vector<128x512xf32>, vector<1x512xf32> -> vector<1x512xf32>
    %16 = arith.addf %14, %15 : vector<1x512xf32>
    %17 = vector.extract_strided_slice %16 {offsets = [0, 0], sizes = [1, 128], strides = [1, 1]} : vector<1x512xf32> to vector<1x128xf32>
    %18 = arith.negf %17 : vector<1x128xf32>
    %19 = math.exp %18 : vector<1x128xf32>
    %cst_13 = arith.constant 1.000000e+00 : f32
    %20 = vector.broadcast %cst_13 : f32 to vector<1x128xf32>
    %21 = arith.addf %20, %19 : vector<1x128xf32>
    %22 = arith.divf %20, %21 : vector<1x128xf32>
    %23 = vector.extract_strided_slice %16 {offsets = [0, 128], sizes = [1, 128], strides = [1, 1]} : vector<1x512xf32> to vector<1x128xf32>
    %24 = arith.negf %23 : vector<1x128xf32>
    %25 = math.exp %24 : vector<1x128xf32>
    %cst_14 = arith.constant 1.000000e+00 : f32
    %26 = vector.broadcast %cst_14 : f32 to vector<1x128xf32>
    %27 = arith.addf %26, %25 : vector<1x128xf32>
    %28 = arith.divf %26, %27 : vector<1x128xf32>
    %29 = vector.extract_strided_slice %16 {offsets = [0, 256], sizes = [1, 128], strides = [1, 1]} : vector<1x512xf32> to vector<1x128xf32>
    %30 = math.tanh %29 : vector<1x128xf32>
    %31 = vector.extract_strided_slice %16 {offsets = [0, 384], sizes = [1, 128], strides = [1, 1]} : vector<1x512xf32> to vector<1x128xf32>
    %32 = arith.negf %31 : vector<1x128xf32>
    %33 = math.exp %32 : vector<1x128xf32>
    %cst_15 = arith.constant 1.000000e+00 : f32
    %34 = vector.broadcast %cst_15 : f32 to vector<1x128xf32>
    %35 = arith.addf %34, %33 : vector<1x128xf32>
    %36 = arith.divf %34, %35 : vector<1x128xf32>
    %37 = arith.mulf %28, %13 : vector<1x128xf32>
    %38 = arith.mulf %22, %30 : vector<1x128xf32>
    %39 = arith.addf %37, %38 : vector<1x128xf32>
    %40 = math.tanh %39 : vector<1x128xf32>
    %41 = arith.mulf %36, %40 : vector<1x128xf32>
    %42 = vector.extract_strided_slice %11 {offsets = [1, 0], sizes = [1, 512], strides = [1, 1]} : vector<6x512xf32> to vector<1x512xf32>
    %cst_16 = arith.constant dense<0.000000e+00> : vector<1x512xf32>
    %43 = tpu.matmul %41, %5, %cst_16 {dimension_numbers = #tpu.dot_dimension_numbers<[1], [0], [0], [1], [0, 0, 1, 1], [], []>} : vector<1x128xf32>, vector<128x512xf32>, vector<1x512xf32> -> vector<1x512xf32>
    %44 = arith.addf %42, %43 : vector<1x512xf32>
    %45 = vector.extract_strided_slice %44 {offsets = [0, 0], sizes = [1, 128], strides = [1, 1]} : vector<1x512xf32> to vector<1x128xf32>
    %46 = arith.negf %45 : vector<1x128xf32>
    %47 = math.exp %46 : vector<1x128xf32>
    %cst_17 = arith.constant 1.000000e+00 : f32
    %48 = vector.broadcast %cst_17 : f32 to vector<1x128xf32>
    %49 = arith.addf %48, %47 : vector<1x128xf32>
    %50 = arith.divf %48, %49 : vector<1x128xf32>
    %51 = vector.extract_strided_slice %44 {offsets = [0, 128], sizes = [1, 128], strides = [1, 1]} : vector<1x512xf32> to vector<1x128xf32>
    %52 = arith.negf %51 : vector<1x128xf32>
    %53 = math.exp %52 : vector<1x128xf32>
    %cst_18 = arith.constant 1.000000e+00 : f32
    %54 = vector.broadcast %cst_18 : f32 to vector<1x128xf32>
    %55 = arith.addf %54, %53 : vector<1x128xf32>
    %56 = arith.divf %54, %55 : vector<1x128xf32>
    %57 = vector.extract_strided_slice %44 {offsets = [0, 256], sizes = [1, 128], strides = [1, 1]} : vector<1x512xf32> to vector<1x128xf32>
    %58 = math.tanh %57 : vector<1x128xf32>
    %59 = vector.extract_strided_slice %44 {offsets = [0, 384], sizes = [1, 128], strides = [1, 1]} : vector<1x512xf32> to vector<1x128xf32>
    %60 = arith.negf %59 : vector<1x128xf32>
    %61 = math.exp %60 : vector<1x128xf32>
    %cst_19 = arith.constant 1.000000e+00 : f32
    %62 = vector.broadcast %cst_19 : f32 to vector<1x128xf32>
    %63 = arith.addf %62, %61 : vector<1x128xf32>
    %64 = arith.divf %62, %63 : vector<1x128xf32>
    %65 = arith.mulf %56, %39 : vector<1x128xf32>
    %66 = arith.mulf %50, %58 : vector<1x128xf32>
    %67 = arith.addf %65, %66 : vector<1x128xf32>
    %68 = math.tanh %67 : vector<1x128xf32>
    %69 = arith.mulf %64, %68 : vector<1x128xf32>
    %70 = vector.extract_strided_slice %11 {offsets = [2, 0], sizes = [1, 512], strides = [1, 1]} : vector<6x512xf32> to vector<1x512xf32>
    %cst_20 = arith.constant dense<0.000000e+00> : vector<1x512xf32>
    %71 = tpu.matmul %69, %5, %cst_20 {dimension_numbers = #tpu.dot_dimension_numbers<[1], [0], [0], [1], [0, 0, 1, 1], [], []>} : vector<1x128xf32>, vector<128x512xf32>, vector<1x512xf32> -> vector<1x512xf32>
    %72 = arith.addf %70, %71 : vector<1x512xf32>
    %73 = vector.extract_strided_slice %72 {offsets = [0, 0], sizes = [1, 128], strides = [1, 1]} : vector<1x512xf32> to vector<1x128xf32>
    %74 = arith.negf %73 : vector<1x128xf32>
    %75 = math.exp %74 : vector<1x128xf32>
    %cst_21 = arith.constant 1.000000e+00 : f32
    %76 = vector.broadcast %cst_21 : f32 to vector<1x128xf32>
    %77 = arith.addf %76, %75 : vector<1x128xf32>
    %78 = arith.divf %76, %77 : vector<1x128xf32>
    %79 = vector.extract_strided_slice %72 {offsets = [0, 128], sizes = [1, 128], strides = [1, 1]} : vector<1x512xf32> to vector<1x128xf32>
    %80 = arith.negf %79 : vector<1x128xf32>
    %81 = math.exp %80 : vector<1x128xf32>
    %cst_22 = arith.constant 1.000000e+00 : f32
    %82 = vector.broadcast %cst_22 : f32 to vector<1x128xf32>
    %83 = arith.addf %82, %81 : vector<1x128xf32>
    %84 = arith.divf %82, %83 : vector<1x128xf32>
    %85 = vector.extract_strided_slice %72 {offsets = [0, 256], sizes = [1, 128], strides = [1, 1]} : vector<1x512xf32> to vector<1x128xf32>
    %86 = math.tanh %85 : vector<1x128xf32>
    %87 = vector.extract_strided_slice %72 {offsets = [0, 384], sizes = [1, 128], strides = [1, 1]} : vector<1x512xf32> to vector<1x128xf32>
    %88 = arith.negf %87 : vector<1x128xf32>
    %89 = math.exp %88 : vector<1x128xf32>
    %cst_23 = arith.constant 1.000000e+00 : f32
    %90 = vector.broadcast %cst_23 : f32 to vector<1x128xf32>
    %91 = arith.addf %90, %89 : vector<1x128xf32>
    %92 = arith.divf %90, %91 : vector<1x128xf32>
    %93 = arith.mulf %84, %67 : vector<1x128xf32>
    %94 = arith.mulf %78, %86 : vector<1x128xf32>
    %95 = arith.addf %93, %94 : vector<1x128xf32>
    %96 = math.tanh %95 : vector<1x128xf32>
    %97 = arith.mulf %92, %96 : vector<1x128xf32>
    %98 = vector.extract_strided_slice %11 {offsets = [3, 0], sizes = [1, 512], strides = [1, 1]} : vector<6x512xf32> to vector<1x512xf32>
    %cst_24 = arith.constant dense<0.000000e+00> : vector<1x512xf32>
    %99 = tpu.matmul %97, %5, %cst_24 {dimension_numbers = #tpu.dot_dimension_numbers<[1], [0], [0], [1], [0, 0, 1, 1], [], []>} : vector<1x128xf32>, vector<128x512xf32>, vector<1x512xf32> -> vector<1x512xf32>
    %100 = arith.addf %98, %99 : vector<1x512xf32>
    %101 = vector.extract_strided_slice %100 {offsets = [0, 0], sizes = [1, 128], strides = [1, 1]} : vector<1x512xf32> to vector<1x128xf32>
    %102 = arith.negf %101 : vector<1x128xf32>
    %103 = math.exp %102 : vector<1x128xf32>
    %cst_25 = arith.constant 1.000000e+00 : f32
    %104 = vector.broadcast %cst_25 : f32 to vector<1x128xf32>
    %105 = arith.addf %104, %103 : vector<1x128xf32>
    %106 = arith.divf %104, %105 : vector<1x128xf32>
    %107 = vector.extract_strided_slice %100 {offsets = [0, 128], sizes = [1, 128], strides = [1, 1]} : vector<1x512xf32> to vector<1x128xf32>
    %108 = arith.negf %107 : vector<1x128xf32>
    %109 = math.exp %108 : vector<1x128xf32>
    %cst_26 = arith.constant 1.000000e+00 : f32
    %110 = vector.broadcast %cst_26 : f32 to vector<1x128xf32>
    %111 = arith.addf %110, %109 : vector<1x128xf32>
    %112 = arith.divf %110, %111 : vector<1x128xf32>
    %113 = vector.extract_strided_slice %100 {offsets = [0, 256], sizes = [1, 128], strides = [1, 1]} : vector<1x512xf32> to vector<1x128xf32>
    %114 = math.tanh %113 : vector<1x128xf32>
    %115 = vector.extract_strided_slice %100 {offsets = [0, 384], sizes = [1, 128], strides = [1, 1]} : vector<1x512xf32> to vector<1x128xf32>
    %116 = arith.negf %115 : vector<1x128xf32>
    %117 = math.exp %116 : vector<1x128xf32>
    %cst_27 = arith.constant 1.000000e+00 : f32
    %118 = vector.broadcast %cst_27 : f32 to vector<1x128xf32>
    %119 = arith.addf %118, %117 : vector<1x128xf32>
    %120 = arith.divf %118, %119 : vector<1x128xf32>
    %121 = arith.mulf %112, %95 : vector<1x128xf32>
    %122 = arith.mulf %106, %114 : vector<1x128xf32>
    %123 = arith.addf %121, %122 : vector<1x128xf32>
    %124 = math.tanh %123 : vector<1x128xf32>
    %125 = arith.mulf %120, %124 : vector<1x128xf32>
    %126 = vector.extract_strided_slice %11 {offsets = [4, 0], sizes = [1, 512], strides = [1, 1]} : vector<6x512xf32> to vector<1x512xf32>
    %cst_28 = arith.constant dense<0.000000e+00> : vector<1x512xf32>
    %127 = tpu.matmul %125, %5, %cst_28 {dimension_numbers = #tpu.dot_dimension_numbers<[1], [0], [0], [1], [0, 0, 1, 1], [], []>} : vector<1x128xf32>, vector<128x512xf32>, vector<1x512xf32> -> vector<1x512xf32>
    %128 = arith.addf %126, %127 : vector<1x512xf32>
    %129 = vector.extract_strided_slice %128 {offsets = [0, 0], sizes = [1, 128], strides = [1, 1]} : vector<1x512xf32> to vector<1x128xf32>
    %130 = arith.negf %129 : vector<1x128xf32>
    %131 = math.exp %130 : vector<1x128xf32>
    %cst_29 = arith.constant 1.000000e+00 : f32
    %132 = vector.broadcast %cst_29 : f32 to vector<1x128xf32>
    %133 = arith.addf %132, %131 : vector<1x128xf32>
    %134 = arith.divf %132, %133 : vector<1x128xf32>
    %135 = vector.extract_strided_slice %128 {offsets = [0, 128], sizes = [1, 128], strides = [1, 1]} : vector<1x512xf32> to vector<1x128xf32>
    %136 = arith.negf %135 : vector<1x128xf32>
    %137 = math.exp %136 : vector<1x128xf32>
    %cst_30 = arith.constant 1.000000e+00 : f32
    %138 = vector.broadcast %cst_30 : f32 to vector<1x128xf32>
    %139 = arith.addf %138, %137 : vector<1x128xf32>
    %140 = arith.divf %138, %139 : vector<1x128xf32>
    %141 = vector.extract_strided_slice %128 {offsets = [0, 256], sizes = [1, 128], strides = [1, 1]} : vector<1x512xf32> to vector<1x128xf32>
    %142 = math.tanh %141 : vector<1x128xf32>
    %143 = vector.extract_strided_slice %128 {offsets = [0, 384], sizes = [1, 128], strides = [1, 1]} : vector<1x512xf32> to vector<1x128xf32>
    %144 = arith.negf %143 : vector<1x128xf32>
    %145 = math.exp %144 : vector<1x128xf32>
    %cst_31 = arith.constant 1.000000e+00 : f32
    %146 = vector.broadcast %cst_31 : f32 to vector<1x128xf32>
    %147 = arith.addf %146, %145 : vector<1x128xf32>
    %148 = arith.divf %146, %147 : vector<1x128xf32>
    %149 = arith.mulf %140, %123 : vector<1x128xf32>
    %150 = arith.mulf %134, %142 : vector<1x128xf32>
    %151 = arith.addf %149, %150 : vector<1x128xf32>
    %152 = math.tanh %151 : vector<1x128xf32>
    %153 = arith.mulf %148, %152 : vector<1x128xf32>
    %154 = vector.extract_strided_slice %11 {offsets = [5, 0], sizes = [1, 512], strides = [1, 1]} : vector<6x512xf32> to vector<1x512xf32>
    %cst_32 = arith.constant dense<0.000000e+00> : vector<1x512xf32>
    %155 = tpu.matmul %153, %5, %cst_32 {dimension_numbers = #tpu.dot_dimension_numbers<[1], [0], [0], [1], [0, 0, 1, 1], [], []>} : vector<1x128xf32>, vector<128x512xf32>, vector<1x512xf32> -> vector<1x512xf32>
    %156 = arith.addf %154, %155 : vector<1x512xf32>
    %157 = vector.extract_strided_slice %156 {offsets = [0, 0], sizes = [1, 128], strides = [1, 1]} : vector<1x512xf32> to vector<1x128xf32>
    %158 = arith.negf %157 : vector<1x128xf32>
    %159 = math.exp %158 : vector<1x128xf32>
    %cst_33 = arith.constant 1.000000e+00 : f32
    %160 = vector.broadcast %cst_33 : f32 to vector<1x128xf32>
    %161 = arith.addf %160, %159 : vector<1x128xf32>
    %162 = arith.divf %160, %161 : vector<1x128xf32>
    %163 = vector.extract_strided_slice %156 {offsets = [0, 128], sizes = [1, 128], strides = [1, 1]} : vector<1x512xf32> to vector<1x128xf32>
    %164 = arith.negf %163 : vector<1x128xf32>
    %165 = math.exp %164 : vector<1x128xf32>
    %cst_34 = arith.constant 1.000000e+00 : f32
    %166 = vector.broadcast %cst_34 : f32 to vector<1x128xf32>
    %167 = arith.addf %166, %165 : vector<1x128xf32>
    %168 = arith.divf %166, %167 : vector<1x128xf32>
    %169 = vector.extract_strided_slice %156 {offsets = [0, 256], sizes = [1, 128], strides = [1, 1]} : vector<1x512xf32> to vector<1x128xf32>
    %170 = math.tanh %169 : vector<1x128xf32>
    %171 = vector.extract_strided_slice %156 {offsets = [0, 384], sizes = [1, 128], strides = [1, 1]} : vector<1x512xf32> to vector<1x128xf32>
    %172 = arith.negf %171 : vector<1x128xf32>
    %173 = math.exp %172 : vector<1x128xf32>
    %cst_35 = arith.constant 1.000000e+00 : f32
    %174 = vector.broadcast %cst_35 : f32 to vector<1x128xf32>
    %175 = arith.addf %174, %173 : vector<1x128xf32>
    %176 = arith.divf %174, %175 : vector<1x128xf32>
    %177 = arith.mulf %168, %151 : vector<1x128xf32>
    %178 = arith.mulf %162, %170 : vector<1x128xf32>
    %179 = arith.addf %177, %178 : vector<1x128xf32>
    %180 = math.tanh %179 : vector<1x128xf32>
    %181 = arith.mulf %176, %180 : vector<1x128xf32>
    %182 = tpu.concatenate %41, %69, %97, %125, %153, %181 in 0 : vector<1x128xf32>, vector<1x128xf32>, vector<1x128xf32>, vector<1x128xf32>, vector<1x128xf32>, vector<1x128xf32> -> vector<6x128xf32>
    %cst_36 = arith.constant dense<0.000000e+00> : vector<6x128xf32>
    %183 = tpu.matmul %1, %182, %cst_36 {dimension_numbers = #tpu.dot_dimension_numbers<[1], [0], [0], [1], [0, 0, 1, 1], [], []>} : vector<6x6xf32>, vector<6x128xf32>, vector<6x128xf32> -> vector<6x128xf32>
    %c4 = arith.constant 4 : index
    %c0_37 = arith.constant 0 : index
    %184 = vector.load %arg3[%c4, %c0_37] : memref<5x128xf32, #tpu.memory_space<vmem>>, vector<1x128xf32>
    %185 = vector.broadcast %184 : vector<1x128xf32> to vector<6x128xf32>
    %186 = arith.mulf %182, %185 : vector<6x128xf32>
    %cst_38 = arith.constant 1.000000e+00 : f32
    %187 = vector.broadcast %cst_38 : f32 to vector<1x128xf32>
    %188 = arith.subf %187, %184 : vector<1x128xf32>
    %189 = vector.broadcast %188 : vector<1x128xf32> to vector<6x128xf32>
    %190 = arith.mulf %183, %189 : vector<6x128xf32>
    %191 = arith.addf %186, %190 : vector<6x128xf32>
    %c0_39 = arith.constant 0 : index
    %c0_40 = arith.constant 0 : index
    %192 = vector.load %arg2[%c0_39, %c0_40] : memref<384x128xf32, #tpu.memory_space<vmem>>, vector<128x128xf32>
    %c128_41 = arith.constant 128 : index
    %c0_42 = arith.constant 0 : index
    %193 = vector.load %arg2[%c128_41, %c0_42] : memref<384x128xf32, #tpu.memory_space<vmem>>, vector<128x128xf32>
    %c256_43 = arith.constant 256 : index
    %c0_44 = arith.constant 0 : index
    %194 = vector.load %arg2[%c256_43, %c0_44] : memref<384x128xf32, #tpu.memory_space<vmem>>, vector<128x128xf32>
    %c0_45 = arith.constant 0 : index
    %c0_46 = arith.constant 0 : index
    %195 = vector.load %arg3[%c0_45, %c0_46] : memref<5x128xf32, #tpu.memory_space<vmem>>, vector<1x128xf32>
    %c1 = arith.constant 1 : index
    %c0_47 = arith.constant 0 : index
    %196 = vector.load %arg3[%c1, %c0_47] : memref<5x128xf32, #tpu.memory_space<vmem>>, vector<1x128xf32>
    %c2 = arith.constant 2 : index
    %c0_48 = arith.constant 0 : index
    %197 = vector.load %arg3[%c2, %c0_48] : memref<5x128xf32, #tpu.memory_space<vmem>>, vector<1x128xf32>
    %c3 = arith.constant 3 : index
    %c0_49 = arith.constant 0 : index
    %198 = vector.load %arg3[%c3, %c0_49] : memref<5x128xf32, #tpu.memory_space<vmem>>, vector<1x128xf32>
    %c0_50 = arith.constant 0 : index
    %c0_51 = arith.constant 0 : index
    %199 = vector.load %arg4[%c0_50, %c0_51] : memref<2x128xf32, #tpu.memory_space<vmem>>, vector<1x128xf32>
    %c1_52 = arith.constant 1 : index
    %c0_53 = arith.constant 0 : index
    %200 = vector.load %arg4[%c1_52, %c0_53] : memref<2x128xf32, #tpu.memory_space<vmem>>, vector<1x128xf32>
    %cst_54 = arith.constant dense<0.000000e+00> : vector<6x128xf32>
    %201 = tpu.matmul %191, %192, %cst_54 {dimension_numbers = #tpu.dot_dimension_numbers<[1], [0], [0], [1], [0, 0, 1, 1], [], []>} : vector<6x128xf32>, vector<128x128xf32>, vector<6x128xf32> -> vector<6x128xf32>
    %202 = vector.broadcast %195 : vector<1x128xf32> to vector<6x128xf32>
    %203 = arith.addf %201, %202 : vector<6x128xf32>
    %cst_55 = arith.constant 5.000000e-01 : f32
    %204 = vector.broadcast %cst_55 : f32 to vector<6x128xf32>
    %205 = arith.mulf %204, %203 : vector<6x128xf32>
    %cst_56 = arith.constant 0.707106769 : f32
    %206 = vector.broadcast %cst_56 : f32 to vector<6x128xf32>
    %207 = arith.mulf %203, %206 : vector<6x128xf32>
    %208 = math.absf %207 : vector<6x128xf32>
    %cst_57 = arith.constant 0.327591091 : f32
    %209 = vector.broadcast %cst_57 : f32 to vector<6x128xf32>
    %210 = arith.mulf %209, %208 : vector<6x128xf32>
    %cst_58 = arith.constant 1.000000e+00 : f32
    %211 = vector.broadcast %cst_58 : f32 to vector<6x128xf32>
    %212 = arith.addf %211, %210 : vector<6x128xf32>
    %cst_59 = arith.constant 1.000000e+00 : f32
    %213 = vector.broadcast %cst_59 : f32 to vector<6x128xf32>
    %214 = arith.divf %213, %212 : vector<6x128xf32>
    %cst_60 = arith.constant 1.06140542 : f32
    %215 = vector.broadcast %cst_60 : f32 to vector<6x128xf32>
    %216 = arith.mulf %214, %215 : vector<6x128xf32>
    %cst_61 = arith.constant -1.45315206 : f32
    %217 = vector.broadcast %cst_61 : f32 to vector<6x128xf32>
    %218 = arith.addf %217, %216 : vector<6x128xf32>
    %219 = arith.mulf %214, %218 : vector<6x128xf32>
    %cst_62 = arith.constant 1.42141378 : f32
    %220 = vector.broadcast %cst_62 : f32 to vector<6x128xf32>
    %221 = arith.addf %220, %219 : vector<6x128xf32>
    %222 = arith.mulf %214, %221 : vector<6x128xf32>
    %cst_63 = arith.constant -0.284496725 : f32
    %223 = vector.broadcast %cst_63 : f32 to vector<6x128xf32>
    %224 = arith.addf %223, %222 : vector<6x128xf32>
    %225 = arith.mulf %214, %224 : vector<6x128xf32>
    %cst_64 = arith.constant 0.254829586 : f32
    %226 = vector.broadcast %cst_64 : f32 to vector<6x128xf32>
    %227 = arith.addf %226, %225 : vector<6x128xf32>
    %228 = arith.mulf %214, %227 : vector<6x128xf32>
    %cst_65 = arith.constant 0.000000e+00 : f32
    %229 = vector.broadcast %cst_65 : f32 to vector<6x128xf32>
    %230 = arith.subf %229, %208 : vector<6x128xf32>
    %231 = arith.mulf %230, %208 : vector<6x128xf32>
    %232 = math.exp %231 : vector<6x128xf32>
    %233 = arith.mulf %228, %232 : vector<6x128xf32>
    %cst_66 = arith.constant 1.000000e+00 : f32
    %234 = vector.broadcast %cst_66 : f32 to vector<6x128xf32>
    %235 = arith.subf %234, %233 : vector<6x128xf32>
    %cst_67 = arith.constant 0.000000e+00 : f32
    %236 = vector.broadcast %cst_67 : f32 to vector<6x128xf32>
    %237 = arith.cmpf oge, %207, %236 : vector<6x128xf32>
    %cst_68 = arith.constant 0.000000e+00 : f32
    %238 = vector.broadcast %cst_68 : f32 to vector<6x128xf32>
    %239 = arith.subf %238, %235 : vector<6x128xf32>
    %240 = arith.select %237, %235, %239 : vector<6x128xi1>, vector<6x128xf32>
    %cst_69 = arith.constant 1.000000e+00 : f32
    %241 = vector.broadcast %cst_69 : f32 to vector<6x128xf32>
    %242 = arith.addf %241, %240 : vector<6x128xf32>
    %243 = arith.mulf %205, %242 : vector<6x128xf32>
    %244 = vector.broadcast %200 : vector<1x128xf32> to vector<6x128xf32>
    %245 = arith.mulf %243, %244 : vector<6x128xf32>
    %cst_70 = arith.constant dense<0.000000e+00> : vector<6x128xf32>
    %246 = tpu.matmul %245, %194, %cst_70 {dimension_numbers = #tpu.dot_dimension_numbers<[1], [0], [0], [1], [0, 0, 1, 1], [], []>} : vector<6x128xf32>, vector<128x128xf32>, vector<6x128xf32> -> vector<6x128xf32>
    %cst_71 = arith.constant 3.125000e-02 : f32
    %247 = vector.broadcast %cst_71 : f32 to vector<6x128xf32>
    %248 = arith.mulf %246, %247 : vector<6x128xf32>
    %249 = vector.broadcast %199 : vector<1x128xf32> to vector<6x128xf32>
    %250 = arith.mulf %249, %248 : vector<6x128xf32>
    %cst_72 = arith.constant dense<0.000000e+00> : vector<6x128xf32>
    %251 = tpu.matmul %243, %193, %cst_72 {dimension_numbers = #tpu.dot_dimension_numbers<[1], [0], [0], [1], [0, 0, 1, 1], [], []>} : vector<6x128xf32>, vector<128x128xf32>, vector<6x128xf32> -> vector<6x128xf32>
    %252 = vector.broadcast %196 : vector<1x128xf32> to vector<6x128xf32>
    %253 = arith.addf %251, %252 : vector<6x128xf32>
    %254 = arith.addf %253, %250 : vector<6x128xf32>
    %cst_73 = arith.constant 5.000000e-01 : f32
    %255 = vector.broadcast %cst_73 : f32 to vector<6x128xf32>
    %256 = arith.mulf %255, %254 : vector<6x128xf32>
    %cst_74 = arith.constant 0.707106769 : f32
    %257 = vector.broadcast %cst_74 : f32 to vector<6x128xf32>
    %258 = arith.mulf %254, %257 : vector<6x128xf32>
    %259 = math.absf %258 : vector<6x128xf32>
    %cst_75 = arith.constant 0.327591091 : f32
    %260 = vector.broadcast %cst_75 : f32 to vector<6x128xf32>
    %261 = arith.mulf %260, %259 : vector<6x128xf32>
    %cst_76 = arith.constant 1.000000e+00 : f32
    %262 = vector.broadcast %cst_76 : f32 to vector<6x128xf32>
    %263 = arith.addf %262, %261 : vector<6x128xf32>
    %cst_77 = arith.constant 1.000000e+00 : f32
    %264 = vector.broadcast %cst_77 : f32 to vector<6x128xf32>
    %265 = arith.divf %264, %263 : vector<6x128xf32>
    %cst_78 = arith.constant 1.06140542 : f32
    %266 = vector.broadcast %cst_78 : f32 to vector<6x128xf32>
    %267 = arith.mulf %265, %266 : vector<6x128xf32>
    %cst_79 = arith.constant -1.45315206 : f32
    %268 = vector.broadcast %cst_79 : f32 to vector<6x128xf32>
    %269 = arith.addf %268, %267 : vector<6x128xf32>
    %270 = arith.mulf %265, %269 : vector<6x128xf32>
    %cst_80 = arith.constant 1.42141378 : f32
    %271 = vector.broadcast %cst_80 : f32 to vector<6x128xf32>
    %272 = arith.addf %271, %270 : vector<6x128xf32>
    %273 = arith.mulf %265, %272 : vector<6x128xf32>
    %cst_81 = arith.constant -0.284496725 : f32
    %274 = vector.broadcast %cst_81 : f32 to vector<6x128xf32>
    %275 = arith.addf %274, %273 : vector<6x128xf32>
    %276 = arith.mulf %265, %275 : vector<6x128xf32>
    %cst_82 = arith.constant 0.254829586 : f32
    %277 = vector.broadcast %cst_82 : f32 to vector<6x128xf32>
    %278 = arith.addf %277, %276 : vector<6x128xf32>
    %279 = arith.mulf %265, %278 : vector<6x128xf32>
    %cst_83 = arith.constant 0.000000e+00 : f32
    %280 = vector.broadcast %cst_83 : f32 to vector<6x128xf32>
    %281 = arith.subf %280, %259 : vector<6x128xf32>
    %282 = arith.mulf %281, %259 : vector<6x128xf32>
    %283 = math.exp %282 : vector<6x128xf32>
    %284 = arith.mulf %279, %283 : vector<6x128xf32>
    %cst_84 = arith.constant 1.000000e+00 : f32
    %285 = vector.broadcast %cst_84 : f32 to vector<6x128xf32>
    %286 = arith.subf %285, %284 : vector<6x128xf32>
    %cst_85 = arith.constant 0.000000e+00 : f32
    %287 = vector.broadcast %cst_85 : f32 to vector<6x128xf32>
    %288 = arith.cmpf oge, %258, %287 : vector<6x128xf32>
    %cst_86 = arith.constant 0.000000e+00 : f32
    %289 = vector.broadcast %cst_86 : f32 to vector<6x128xf32>
    %290 = arith.subf %289, %286 : vector<6x128xf32>
    %291 = arith.select %288, %286, %290 : vector<6x128xi1>, vector<6x128xf32>
    %cst_87 = arith.constant 1.000000e+00 : f32
    %292 = vector.broadcast %cst_87 : f32 to vector<6x128xf32>
    %293 = arith.addf %292, %291 : vector<6x128xf32>
    %294 = arith.mulf %256, %293 : vector<6x128xf32>
    %cst_88 = arith.constant dense<0.000000e+00> : vector<6x128xf32>
    %295 = tpu.matmul %294, %194, %cst_88 {dimension_numbers = #tpu.dot_dimension_numbers<[1], [0], [0], [1], [0, 0, 1, 1], [], []>} : vector<6x128xf32>, vector<128x128xf32>, vector<6x128xf32> -> vector<6x128xf32>
    %cst_89 = arith.constant 3.125000e-02 : f32
    %296 = vector.broadcast %cst_89 : f32 to vector<6x128xf32>
    %297 = arith.mulf %295, %296 : vector<6x128xf32>
    %298 = arith.subf %294, %297 : vector<6x128xf32>
    %299 = arith.mulf %298, %298 : vector<6x128xf32>
    %cst_90 = arith.constant dense<0.000000e+00> : vector<6x128xf32>
    %300 = tpu.matmul %299, %194, %cst_90 {dimension_numbers = #tpu.dot_dimension_numbers<[1], [0], [0], [1], [0, 0, 1, 1], [], []>} : vector<6x128xf32>, vector<128x128xf32>, vector<6x128xf32> -> vector<6x128xf32>
    %cst_91 = arith.constant 3.125000e-02 : f32
    %301 = vector.broadcast %cst_91 : f32 to vector<6x128xf32>
    %302 = arith.mulf %300, %301 : vector<6x128xf32>
    %cst_92 = arith.constant 9.99999974E-6 : f32
    %303 = vector.broadcast %cst_92 : f32 to vector<6x128xf32>
    %304 = arith.addf %302, %303 : vector<6x128xf32>
    %305 = math.rsqrt %304 : vector<6x128xf32>
    %306 = arith.mulf %298, %305 : vector<6x128xf32>
    %307 = vector.broadcast %197 : vector<1x128xf32> to vector<6x128xf32>
    %308 = arith.mulf %306, %307 : vector<6x128xf32>
    %309 = vector.broadcast %198 : vector<1x128xf32> to vector<6x128xf32>
    %310 = arith.addf %308, %309 : vector<6x128xf32>
    %311 = arith.addf %0, %310 : vector<6x128xf32>
    %c0_93 = arith.constant 0 : index
    %c0_94 = arith.constant 0 : index
    %312 = vector.load %arg6[%c0_93, %c0_94] : memref<6x128xf32, #tpu.memory_space<vmem>>, vector<6x128xf32>
    tpu.vector_store %arg6[%c0_93, %c0_94], %311 {strides = array<i32>} : memref<6x128xf32, #tpu.memory_space<vmem>>, vector<6x128xf32>,
    return
  }
}

module attributes {stable_mosaic.version = 11 : i64} {
  func.func @kernel(%arg0: memref<1x128xf32, #tpu.memory_space<vmem>>, %arg1: memref<16x8xf32, #tpu.memory_space<vmem>>, %arg2: memref<128x256xf32, #tpu.memory_space<vmem>>, %arg3: memref<1x256xf32, #tpu.memory_space<vmem>>, %arg4: memref<664x128xf32, #tpu.memory_space<vmem>>, %arg5: memref<108x16xf32, #tpu.memory_space<vmem>>, %arg6: memref<6x128xf32, #tpu.memory_space<vmem>>, %arg7: memref<6x128xf32, #tpu.memory_space<vmem>>) attributes {dimension_semantics = [], scalar_prefetch = 0 : i64, scratch_operands = 0 : i64, tpu.core_type = #tpu.core_type<tc>} {
    %c0 = arith.constant 0 : index
    %c0_0 = arith.constant 0 : index
    %0 = vector.load %arg0[%c0, %c0_0] : memref<1x128xf32, #tpu.memory_space<vmem>>, vector<1x128xf32>
    %c0_1 = arith.constant 0 : index
    %c0_2 = arith.constant 0 : index
    %1 = vector.load %arg2[%c0_1, %c0_2] : memref<128x256xf32, #tpu.memory_space<vmem>>, vector<128x256xf32>
    %cst = arith.constant dense<0.000000e+00> : vector<1x256xf32>
    %2 = tpu.matmul %0, %1, %cst {dimension_numbers = #tpu.dot_dimension_numbers<[1], [0], [0], [1], [0, 0, 1, 1], [], []>} : vector<1x128xf32>, vector<128x256xf32>, vector<1x256xf32> -> vector<1x256xf32>
    %c0_3 = arith.constant 0 : index
    %c0_4 = arith.constant 0 : index
    %3 = vector.load %arg3[%c0_3, %c0_4] : memref<1x256xf32, #tpu.memory_space<vmem>>, vector<1x256xf32>
    %4 = arith.addf %2, %3 : vector<1x256xf32>
    %cst_5 = arith.constant 5.000000e-01 : f32
    %5 = vector.broadcast %cst_5 : f32 to vector<1x256xf32>
    %6 = arith.mulf %5, %4 : vector<1x256xf32>
    %cst_6 = arith.constant 0.707106769 : f32
    %7 = vector.broadcast %cst_6 : f32 to vector<1x256xf32>
    %8 = arith.mulf %4, %7 : vector<1x256xf32>
    %9 = math.absf %8 : vector<1x256xf32>
    %cst_7 = arith.constant 0.327591091 : f32
    %10 = vector.broadcast %cst_7 : f32 to vector<1x256xf32>
    %11 = arith.mulf %10, %9 : vector<1x256xf32>
    %cst_8 = arith.constant 1.000000e+00 : f32
    %12 = vector.broadcast %cst_8 : f32 to vector<1x256xf32>
    %13 = arith.addf %12, %11 : vector<1x256xf32>
    %cst_9 = arith.constant 1.000000e+00 : f32
    %14 = vector.broadcast %cst_9 : f32 to vector<1x256xf32>
    %15 = arith.divf %14, %13 : vector<1x256xf32>
    %cst_10 = arith.constant 1.06140542 : f32
    %16 = vector.broadcast %cst_10 : f32 to vector<1x256xf32>
    %17 = arith.mulf %15, %16 : vector<1x256xf32>
    %cst_11 = arith.constant -1.45315206 : f32
    %18 = vector.broadcast %cst_11 : f32 to vector<1x256xf32>
    %19 = arith.addf %18, %17 : vector<1x256xf32>
    %20 = arith.mulf %15, %19 : vector<1x256xf32>
    %cst_12 = arith.constant 1.42141378 : f32
    %21 = vector.broadcast %cst_12 : f32 to vector<1x256xf32>
    %22 = arith.addf %21, %20 : vector<1x256xf32>
    %23 = arith.mulf %15, %22 : vector<1x256xf32>
    %cst_13 = arith.constant -0.284496725 : f32
    %24 = vector.broadcast %cst_13 : f32 to vector<1x256xf32>
    %25 = arith.addf %24, %23 : vector<1x256xf32>
    %26 = arith.mulf %15, %25 : vector<1x256xf32>
    %cst_14 = arith.constant 0.254829586 : f32
    %27 = vector.broadcast %cst_14 : f32 to vector<1x256xf32>
    %28 = arith.addf %27, %26 : vector<1x256xf32>
    %29 = arith.mulf %15, %28 : vector<1x256xf32>
    %cst_15 = arith.constant 0.000000e+00 : f32
    %30 = vector.broadcast %cst_15 : f32 to vector<1x256xf32>
    %31 = arith.subf %30, %9 : vector<1x256xf32>
    %32 = arith.mulf %31, %9 : vector<1x256xf32>
    %33 = math.exp %32 : vector<1x256xf32>
    %34 = arith.mulf %29, %33 : vector<1x256xf32>
    %cst_16 = arith.constant 1.000000e+00 : f32
    %35 = vector.broadcast %cst_16 : f32 to vector<1x256xf32>
    %36 = arith.subf %35, %34 : vector<1x256xf32>
    %cst_17 = arith.constant 0.000000e+00 : f32
    %37 = vector.broadcast %cst_17 : f32 to vector<1x256xf32>
    %38 = arith.cmpf oge, %8, %37 : vector<1x256xf32>
    %cst_18 = arith.constant 0.000000e+00 : f32
    %39 = vector.broadcast %cst_18 : f32 to vector<1x256xf32>
    %40 = arith.subf %39, %36 : vector<1x256xf32>
    %41 = arith.select %38, %36, %40 : vector<1x256xi1>, vector<1x256xf32>
    %cst_19 = arith.constant 1.000000e+00 : f32
    %42 = vector.broadcast %cst_19 : f32 to vector<1x256xf32>
    %43 = arith.addf %42, %41 : vector<1x256xf32>
    %44 = arith.mulf %6, %43 : vector<1x256xf32>
    %45 = vector.extract_strided_slice %44 {offsets = [0, 0], sizes = [1, 128], strides = [1, 1]} : vector<1x256xf32> to vector<1x128xf32>
    %c0_20 = arith.constant 0 : index
    %c0_21 = arith.constant 0 : index
    %46 = vector.load %arg7[%c0_20, %c0_21] : memref<6x128xf32, #tpu.memory_space<vmem>>, vector<1x128xf32>
    tpu.vector_store %arg7[%c0_20, %c0_21], %45 {strides = array<i32>} : memref<6x128xf32, #tpu.memory_space<vmem>>, vector<1x128xf32>,
    %47 = vector.extract_strided_slice %44 {offsets = [0, 128], sizes = [1, 128], strides = [1, 1]} : vector<1x256xf32> to vector<1x128xf32>
    %c5 = arith.constant 5 : index
    %c0_22 = arith.constant 0 : index
    %48 = vector.load %arg7[%c5, %c0_22] : memref<6x128xf32, #tpu.memory_space<vmem>>, vector<1x128xf32>
    tpu.vector_store %arg7[%c5, %c0_22], %47 {strides = array<i32>} : memref<6x128xf32, #tpu.memory_space<vmem>>, vector<1x128xf32>,
    %c0_23 = arith.constant 0 : index
    %c0_24 = arith.constant 0 : index
    %49 = vector.load %arg1[%c0_23, %c0_24] : memref<16x8xf32, #tpu.memory_space<vmem>>, vector<16x8xf32>
    %cst_25 = arith.constant 0.000000e+00 : f32
    %50 = vector.broadcast %cst_25 : f32 to vector<16x64xf32>
    %c0_26 = arith.constant 0 : index
    %c0_27 = arith.constant 0 : index
    %51 = vector.load %arg4[%c0_26, %c0_27] : memref<664x128xf32, #tpu.memory_space<vmem>>, vector<8x64xf32>
    %c0_28 = arith.constant 0 : index
    %c0_29 = arith.constant 0 : index
    %52 = vector.load %arg5[%c0_28, %c0_29] : memref<108x16xf32, #tpu.memory_space<vmem>>, vector<16x16xf32>
    %cst_30 = arith.constant dense<0.000000e+00> : vector<16x8xf32>
    %53 = tpu.matmul %52, %49, %cst_30 {dimension_numbers = #tpu.dot_dimension_numbers<[1], [0], [0], [1], [0, 0, 1, 1], [], []>} : vector<16x16xf32>, vector<16x8xf32>, vector<16x8xf32> -> vector<16x8xf32>
    %cst_31 = arith.constant dense<0.000000e+00> : vector<16x64xf32>
    %54 = tpu.matmul %53, %51, %cst_31 {dimension_numbers = #tpu.dot_dimension_numbers<[1], [0], [0], [1], [0, 0, 1, 1], [], []>} : vector<16x8xf32>, vector<8x64xf32>, vector<16x64xf32> -> vector<16x64xf32>
    %55 = arith.addf %50, %54 : vector<16x64xf32>
    %c8 = arith.constant 8 : index
    %c0_32 = arith.constant 0 : index
    %56 = vector.load %arg4[%c8, %c0_32] : memref<664x128xf32, #tpu.memory_space<vmem>>, vector<8x64xf32>
    %c16 = arith.constant 16 : index
    %c0_33 = arith.constant 0 : index
    %57 = vector.load %arg5[%c16, %c0_33] : memref<108x16xf32, #tpu.memory_space<vmem>>, vector<16x16xf32>
    %cst_34 = arith.constant dense<0.000000e+00> : vector<16x8xf32>
    %58 = tpu.matmul %57, %49, %cst_34 {dimension_numbers = #tpu.dot_dimension_numbers<[1], [0], [0], [1], [0, 0, 1, 1], [], []>} : vector<16x16xf32>, vector<16x8xf32>, vector<16x8xf32> -> vector<16x8xf32>
    %cst_35 = arith.constant dense<0.000000e+00> : vector<16x64xf32>
    %59 = tpu.matmul %58, %56, %cst_35 {dimension_numbers = #tpu.dot_dimension_numbers<[1], [0], [0], [1], [0, 0, 1, 1], [], []>} : vector<16x8xf32>, vector<8x64xf32>, vector<16x64xf32> -> vector<16x64xf32>
    %60 = arith.addf %55, %59 : vector<16x64xf32>
    %c16_36 = arith.constant 16 : index
    %c0_37 = arith.constant 0 : index
    %61 = vector.load %arg4[%c16_36, %c0_37] : memref<664x128xf32, #tpu.memory_space<vmem>>, vector<8x64xf32>
    %c32 = arith.constant 32 : index
    %c0_38 = arith.constant 0 : index
    %62 = vector.load %arg5[%c32, %c0_38] : memref<108x16xf32, #tpu.memory_space<vmem>>, vector<16x16xf32>
    %cst_39 = arith.constant dense<0.000000e+00> : vector<16x8xf32>
    %63 = tpu.matmul %62, %49, %cst_39 {dimension_numbers = #tpu.dot_dimension_numbers<[1], [0], [0], [1], [0, 0, 1, 1], [], []>} : vector<16x16xf32>, vector<16x8xf32>, vector<16x8xf32> -> vector<16x8xf32>
    %cst_40 = arith.constant dense<0.000000e+00> : vector<16x64xf32>
    %64 = tpu.matmul %63, %61, %cst_40 {dimension_numbers = #tpu.dot_dimension_numbers<[1], [0], [0], [1], [0, 0, 1, 1], [], []>} : vector<16x8xf32>, vector<8x64xf32>, vector<16x64xf32> -> vector<16x64xf32>
    %65 = arith.addf %60, %64 : vector<16x64xf32>
    %c0_41 = arith.constant 0 : index
    %c0_42 = arith.constant 0 : index
    %66 = vector.load %arg6[%c0_41, %c0_42] : memref<6x128xf32, #tpu.memory_space<vmem>>, vector<1x64xf32>
    %67 = vector.broadcast %66 : vector<1x64xf32> to vector<16x64xf32>
    %68 = arith.addf %65, %67 : vector<16x64xf32>
    %c1 = arith.constant 1 : index
    %c0_43 = arith.constant 0 : index
    %69 = vector.load %arg6[%c1, %c0_43] : memref<6x128xf32, #tpu.memory_space<vmem>>, vector<1x64xf32>
    %cst_44 = arith.constant 0.000000e+00 : f32
    %70 = vector.broadcast %cst_44 : f32 to vector<16x64xf32>
    %71 = arith.cmpf oge, %68, %70 : vector<16x64xf32>
    %72 = vector.broadcast %69 : vector<1x64xf32> to vector<16x64xf32>
    %73 = arith.mulf %72, %68 : vector<16x64xf32>
    %74 = arith.select %71, %68, %73 : vector<16x64xi1>, vector<16x64xf32>
    %cst_45 = arith.constant 0.000000e+00 : f32
    %75 = vector.broadcast %cst_45 : f32 to vector<8x64xf32>
    %c24 = arith.constant 24 : index
    %c0_46 = arith.constant 0 : index
    %76 = vector.load %arg4[%c24, %c0_46] : memref<664x128xf32, #tpu.memory_space<vmem>>, vector<64x64xf32>
    %c48 = arith.constant 48 : index
    %c0_47 = arith.constant 0 : index
    %77 = vector.load %arg5[%c48, %c0_47] : memref<108x16xf32, #tpu.memory_space<vmem>>, vector<8x16xf32>
    %cst_48 = arith.constant dense<0.000000e+00> : vector<8x64xf32>
    %78 = tpu.matmul %77, %74, %cst_48 {dimension_numbers = #tpu.dot_dimension_numbers<[1], [0], [0], [1], [0, 0, 1, 1], [], []>} : vector<8x16xf32>, vector<16x64xf32>, vector<8x64xf32> -> vector<8x64xf32>
    %cst_49 = arith.constant dense<0.000000e+00> : vector<8x64xf32>
    %79 = tpu.matmul %78, %76, %cst_49 {dimension_numbers = #tpu.dot_dimension_numbers<[1], [0], [0], [1], [0, 0, 1, 1], [], []>} : vector<8x64xf32>, vector<64x64xf32>, vector<8x64xf32> -> vector<8x64xf32>
    %80 = arith.addf %75, %79 : vector<8x64xf32>
    %c88 = arith.constant 88 : index
    %c0_50 = arith.constant 0 : index
    %81 = vector.load %arg4[%c88, %c0_50] : memref<664x128xf32, #tpu.memory_space<vmem>>, vector<64x64xf32>
    %c56 = arith.constant 56 : index
    %c0_51 = arith.constant 0 : index
    %82 = vector.load %arg5[%c56, %c0_51] : memref<108x16xf32, #tpu.memory_space<vmem>>, vector<8x16xf32>
    %cst_52 = arith.constant dense<0.000000e+00> : vector<8x64xf32>
    %83 = tpu.matmul %82, %74, %cst_52 {dimension_numbers = #tpu.dot_dimension_numbers<[1], [0], [0], [1], [0, 0, 1, 1], [], []>} : vector<8x16xf32>, vector<16x64xf32>, vector<8x64xf32> -> vector<8x64xf32>
    %cst_53 = arith.constant dense<0.000000e+00> : vector<8x64xf32>
    %84 = tpu.matmul %83, %81, %cst_53 {dimension_numbers = #tpu.dot_dimension_numbers<[1], [0], [0], [1], [0, 0, 1, 1], [], []>} : vector<8x64xf32>, vector<64x64xf32>, vector<8x64xf32> -> vector<8x64xf32>
    %85 = arith.addf %80, %84 : vector<8x64xf32>
    %c152 = arith.constant 152 : index
    %c0_54 = arith.constant 0 : index
    %86 = vector.load %arg4[%c152, %c0_54] : memref<664x128xf32, #tpu.memory_space<vmem>>, vector<64x64xf32>
    %c64 = arith.constant 64 : index
    %c0_55 = arith.constant 0 : index
    %87 = vector.load %arg5[%c64, %c0_55] : memref<108x16xf32, #tpu.memory_space<vmem>>, vector<8x16xf32>
    %cst_56 = arith.constant dense<0.000000e+00> : vector<8x64xf32>
    %88 = tpu.matmul %87, %74, %cst_56 {dimension_numbers = #tpu.dot_dimension_numbers<[1], [0], [0], [1], [0, 0, 1, 1], [], []>} : vector<8x16xf32>, vector<16x64xf32>, vector<8x64xf32> -> vector<8x64xf32>
    %cst_57 = arith.constant dense<0.000000e+00> : vector<8x64xf32>
    %89 = tpu.matmul %88, %86, %cst_57 {dimension_numbers = #tpu.dot_dimension_numbers<[1], [0], [0], [1], [0, 0, 1, 1], [], []>} : vector<8x64xf32>, vector<64x64xf32>, vector<8x64xf32> -> vector<8x64xf32>
    %90 = arith.addf %85, %89 : vector<8x64xf32>
    %c216 = arith.constant 216 : index
    %c0_58 = arith.constant 0 : index
    %91 = vector.load %arg4[%c216, %c0_58] : memref<664x128xf32, #tpu.memory_space<vmem>>, vector<64x64xf32>
    %c72 = arith.constant 72 : index
    %c0_59 = arith.constant 0 : index
    %92 = vector.load %arg5[%c72, %c0_59] : memref<108x16xf32, #tpu.memory_space<vmem>>, vector<8x16xf32>
    %cst_60 = arith.constant dense<0.000000e+00> : vector<8x64xf32>
    %93 = tpu.matmul %92, %74, %cst_60 {dimension_numbers = #tpu.dot_dimension_numbers<[1], [0], [0], [1], [0, 0, 1, 1], [], []>} : vector<8x16xf32>, vector<16x64xf32>, vector<8x64xf32> -> vector<8x64xf32>
    %cst_61 = arith.constant dense<0.000000e+00> : vector<8x64xf32>
    %94 = tpu.matmul %93, %91, %cst_61 {dimension_numbers = #tpu.dot_dimension_numbers<[1], [0], [0], [1], [0, 0, 1, 1], [], []>} : vector<8x64xf32>, vector<64x64xf32>, vector<8x64xf32> -> vector<8x64xf32>
    %95 = arith.addf %90, %94 : vector<8x64xf32>
    %c280 = arith.constant 280 : index
    %c0_62 = arith.constant 0 : index
    %96 = vector.load %arg4[%c280, %c0_62] : memref<664x128xf32, #tpu.memory_space<vmem>>, vector<64x64xf32>
    %c80 = arith.constant 80 : index
    %c0_63 = arith.constant 0 : index
    %97 = vector.load %arg5[%c80, %c0_63] : memref<108x16xf32, #tpu.memory_space<vmem>>, vector<8x16xf32>
    %cst_64 = arith.constant dense<0.000000e+00> : vector<8x64xf32>
    %98 = tpu.matmul %97, %74, %cst_64 {dimension_numbers = #tpu.dot_dimension_numbers<[1], [0], [0], [1], [0, 0, 1, 1], [], []>} : vector<8x16xf32>, vector<16x64xf32>, vector<8x64xf32> -> vector<8x64xf32>
    %cst_65 = arith.constant dense<0.000000e+00> : vector<8x64xf32>
    %99 = tpu.matmul %98, %96, %cst_65 {dimension_numbers = #tpu.dot_dimension_numbers<[1], [0], [0], [1], [0, 0, 1, 1], [], []>} : vector<8x64xf32>, vector<64x64xf32>, vector<8x64xf32> -> vector<8x64xf32>
    %100 = arith.addf %95, %99 : vector<8x64xf32>
    %c2 = arith.constant 2 : index
    %c0_66 = arith.constant 0 : index
    %101 = vector.load %arg6[%c2, %c0_66] : memref<6x128xf32, #tpu.memory_space<vmem>>, vector<1x64xf32>
    %102 = vector.broadcast %101 : vector<1x64xf32> to vector<8x64xf32>
    %103 = arith.addf %100, %102 : vector<8x64xf32>
    %c3 = arith.constant 3 : index
    %c0_67 = arith.constant 0 : index
    %104 = vector.load %arg6[%c3, %c0_67] : memref<6x128xf32, #tpu.memory_space<vmem>>, vector<1x64xf32>
    %cst_68 = arith.constant 0.000000e+00 : f32
    %105 = vector.broadcast %cst_68 : f32 to vector<8x64xf32>
    %106 = arith.cmpf oge, %103, %105 : vector<8x64xf32>
    %107 = vector.broadcast %104 : vector<1x64xf32> to vector<8x64xf32>
    %108 = arith.mulf %107, %103 : vector<8x64xf32>
    %109 = arith.select %106, %103, %108 : vector<8x64xi1>, vector<8x64xf32>
    %cst_69 = arith.constant 0.000000e+00 : f32
    %110 = vector.broadcast %cst_69 : f32 to vector<4x128xf32>
    %c344 = arith.constant 344 : index
    %c0_70 = arith.constant 0 : index
    %111 = vector.load %arg4[%c344, %c0_70] : memref<664x128xf32, #tpu.memory_space<vmem>>, vector<64x128xf32>
    %c88_71 = arith.constant 88 : index
    %c0_72 = arith.constant 0 : index
    %112 = vector.load %arg5[%c88_71, %c0_72] : memref<108x16xf32, #tpu.memory_space<vmem>>, vector<4x8xf32>
    %cst_73 = arith.constant dense<0.000000e+00> : vector<4x64xf32>
    %113 = tpu.matmul %112, %109, %cst_73 {dimension_numbers = #tpu.dot_dimension_numbers<[1], [0], [0], [1], [0, 0, 1, 1], [], []>} : vector<4x8xf32>, vector<8x64xf32>, vector<4x64xf32> -> vector<4x64xf32>
    %cst_74 = arith.constant dense<0.000000e+00> : vector<4x128xf32>
    %114 = tpu.matmul %113, %111, %cst_74 {dimension_numbers = #tpu.dot_dimension_numbers<[1], [0], [0], [1], [0, 0, 1, 1], [], []>} : vector<4x64xf32>, vector<64x128xf32>, vector<4x128xf32> -> vector<4x128xf32>
    %115 = arith.addf %110, %114 : vector<4x128xf32>
    %c408 = arith.constant 408 : index
    %c0_75 = arith.constant 0 : index
    %116 = vector.load %arg4[%c408, %c0_75] : memref<664x128xf32, #tpu.memory_space<vmem>>, vector<64x128xf32>
    %c92 = arith.constant 92 : index
    %c0_76 = arith.constant 0 : index
    %117 = vector.load %arg5[%c92, %c0_76] : memref<108x16xf32, #tpu.memory_space<vmem>>, vector<4x8xf32>
    %cst_77 = arith.constant dense<0.000000e+00> : vector<4x64xf32>
    %118 = tpu.matmul %117, %109, %cst_77 {dimension_numbers = #tpu.dot_dimension_numbers<[1], [0], [0], [1], [0, 0, 1, 1], [], []>} : vector<4x8xf32>, vector<8x64xf32>, vector<4x64xf32> -> vector<4x64xf32>
    %cst_78 = arith.constant dense<0.000000e+00> : vector<4x128xf32>
    %119 = tpu.matmul %118, %116, %cst_78 {dimension_numbers = #tpu.dot_dimension_numbers<[1], [0], [0], [1], [0, 0, 1, 1], [], []>} : vector<4x64xf32>, vector<64x128xf32>, vector<4x128xf32> -> vector<4x128xf32>
    %120 = arith.addf %115, %119 : vector<4x128xf32>
    %c472 = arith.constant 472 : index
    %c0_79 = arith.constant 0 : index
    %121 = vector.load %arg4[%c472, %c0_79] : memref<664x128xf32, #tpu.memory_space<vmem>>, vector<64x128xf32>
    %c96 = arith.constant 96 : index
    %c0_80 = arith.constant 0 : index
    %122 = vector.load %arg5[%c96, %c0_80] : memref<108x16xf32, #tpu.memory_space<vmem>>, vector<4x8xf32>
    %cst_81 = arith.constant dense<0.000000e+00> : vector<4x64xf32>
    %123 = tpu.matmul %122, %109, %cst_81 {dimension_numbers = #tpu.dot_dimension_numbers<[1], [0], [0], [1], [0, 0, 1, 1], [], []>} : vector<4x8xf32>, vector<8x64xf32>, vector<4x64xf32> -> vector<4x64xf32>
    %cst_82 = arith.constant dense<0.000000e+00> : vector<4x128xf32>
    %124 = tpu.matmul %123, %121, %cst_82 {dimension_numbers = #tpu.dot_dimension_numbers<[1], [0], [0], [1], [0, 0, 1, 1], [], []>} : vector<4x64xf32>, vector<64x128xf32>, vector<4x128xf32> -> vector<4x128xf32>
    %125 = arith.addf %120, %124 : vector<4x128xf32>
    %c536 = arith.constant 536 : index
    %c0_83 = arith.constant 0 : index
    %126 = vector.load %arg4[%c536, %c0_83] : memref<664x128xf32, #tpu.memory_space<vmem>>, vector<64x128xf32>
    %c100 = arith.constant 100 : index
    %c0_84 = arith.constant 0 : index
    %127 = vector.load %arg5[%c100, %c0_84] : memref<108x16xf32, #tpu.memory_space<vmem>>, vector<4x8xf32>
    %cst_85 = arith.constant dense<0.000000e+00> : vector<4x64xf32>
    %128 = tpu.matmul %127, %109, %cst_85 {dimension_numbers = #tpu.dot_dimension_numbers<[1], [0], [0], [1], [0, 0, 1, 1], [], []>} : vector<4x8xf32>, vector<8x64xf32>, vector<4x64xf32> -> vector<4x64xf32>
    %cst_86 = arith.constant dense<0.000000e+00> : vector<4x128xf32>
    %129 = tpu.matmul %128, %126, %cst_86 {dimension_numbers = #tpu.dot_dimension_numbers<[1], [0], [0], [1], [0, 0, 1, 1], [], []>} : vector<4x64xf32>, vector<64x128xf32>, vector<4x128xf32> -> vector<4x128xf32>
    %130 = arith.addf %125, %129 : vector<4x128xf32>
    %c600 = arith.constant 600 : index
    %c0_87 = arith.constant 0 : index
    %131 = vector.load %arg4[%c600, %c0_87] : memref<664x128xf32, #tpu.memory_space<vmem>>, vector<64x128xf32>
    %c104 = arith.constant 104 : index
    %c0_88 = arith.constant 0 : index
    %132 = vector.load %arg5[%c104, %c0_88] : memref<108x16xf32, #tpu.memory_space<vmem>>, vector<4x8xf32>
    %cst_89 = arith.constant dense<0.000000e+00> : vector<4x64xf32>
    %133 = tpu.matmul %132, %109, %cst_89 {dimension_numbers = #tpu.dot_dimension_numbers<[1], [0], [0], [1], [0, 0, 1, 1], [], []>} : vector<4x8xf32>, vector<8x64xf32>, vector<4x64xf32> -> vector<4x64xf32>
    %cst_90 = arith.constant dense<0.000000e+00> : vector<4x128xf32>
    %134 = tpu.matmul %133, %131, %cst_90 {dimension_numbers = #tpu.dot_dimension_numbers<[1], [0], [0], [1], [0, 0, 1, 1], [], []>} : vector<4x64xf32>, vector<64x128xf32>, vector<4x128xf32> -> vector<4x128xf32>
    %135 = arith.addf %130, %134 : vector<4x128xf32>
    %c4 = arith.constant 4 : index
    %c0_91 = arith.constant 0 : index
    %136 = vector.load %arg6[%c4, %c0_91] : memref<6x128xf32, #tpu.memory_space<vmem>>, vector<1x128xf32>
    %137 = vector.broadcast %136 : vector<1x128xf32> to vector<4x128xf32>
    %138 = arith.addf %135, %137 : vector<4x128xf32>
    %c5_92 = arith.constant 5 : index
    %c0_93 = arith.constant 0 : index
    %139 = vector.load %arg6[%c5_92, %c0_93] : memref<6x128xf32, #tpu.memory_space<vmem>>, vector<1x128xf32>
    %cst_94 = arith.constant 0.000000e+00 : f32
    %140 = vector.broadcast %cst_94 : f32 to vector<4x128xf32>
    %141 = arith.cmpf oge, %138, %140 : vector<4x128xf32>
    %142 = vector.broadcast %139 : vector<1x128xf32> to vector<4x128xf32>
    %143 = arith.mulf %142, %138 : vector<4x128xf32>
    %144 = arith.select %141, %138, %143 : vector<4x128xi1>, vector<4x128xf32>
    %c1_95 = arith.constant 1 : index
    %c0_96 = arith.constant 0 : index
    %145 = vector.load %arg7[%c1_95, %c0_96] : memref<6x128xf32, #tpu.memory_space<vmem>>, vector<4x128xf32>
    tpu.vector_store %arg7[%c1_95, %c0_96], %144 {strides = array<i32>} : memref<6x128xf32, #tpu.memory_space<vmem>>, vector<4x128xf32>,
    return
  }
}

module attributes {stable_mosaic.version = 11 : i64} {
  func.func @kernel(%arg0: memref<6x128xf32, #tpu.memory_space<vmem>>, %arg1: memref<128x64xf32, #tpu.memory_space<vmem>>, %arg2: memref<288x64xf32, #tpu.memory_space<vmem>>, %arg3: memref<672x64xf32, #tpu.memory_space<vmem>>, %arg4: memref<192x16xf32, #tpu.memory_space<vmem>>, %arg5: memref<10x64xf32, #tpu.memory_space<vmem>>, %arg6: memref<5x64xf32, #tpu.memory_space<vmem>>, %arg7: memref<17x4xf32, #tpu.memory_space<vmem>>, %arg8: memref<1x2xf32, #tpu.memory_space<vmem>>) attributes {dimension_semantics = [], scalar_prefetch = 0 : i64, scratch_operands = 0 : i64, tpu.core_type = #tpu.core_type<tc>} {
    %c0 = arith.constant 0 : index
    %c0_0 = arith.constant 0 : index
    %0 = vector.load %arg0[%c0, %c0_0] : memref<6x128xf32, #tpu.memory_space<vmem>>, vector<6x128xf32>
    %c0_1 = arith.constant 0 : index
    %c0_2 = arith.constant 0 : index
    %1 = vector.load %arg1[%c0_1, %c0_2] : memref<128x64xf32, #tpu.memory_space<vmem>>, vector<128x64xf32>
    %cst = arith.constant dense<0.000000e+00> : vector<6x64xf32>
    %2 = tpu.matmul %0, %1, %cst {dimension_numbers = #tpu.dot_dimension_numbers<[1], [0], [0], [1], [0, 0, 1, 1], [], []>} : vector<6x128xf32>, vector<128x64xf32>, vector<6x64xf32> -> vector<6x64xf32>
    %3 = vector.extract_strided_slice %2 {offsets = [0, 0], sizes = [1, 64], strides = [1, 1]} : vector<6x64xf32> to vector<1x64xf32>
    %4 = vector.extract_strided_slice %2 {offsets = [5, 0], sizes = [1, 64], strides = [1, 1]} : vector<6x64xf32> to vector<1x64xf32>
    %5 = arith.addf %3, %4 : vector<1x64xf32>
    %6 = vector.extract_strided_slice %2 {offsets = [1, 0], sizes = [4, 64], strides = [1, 1]} : vector<6x64xf32> to vector<4x64xf32>
    %c0_3 = arith.constant 0 : index
    %c0_4 = arith.constant 0 : index
    %7 = vector.load %arg2[%c0_3, %c0_4] : memref<288x64xf32, #tpu.memory_space<vmem>>, vector<64x64xf32>
    %c64 = arith.constant 64 : index
    %c0_5 = arith.constant 0 : index
    %8 = vector.load %arg2[%c64, %c0_5] : memref<288x64xf32, #tpu.memory_space<vmem>>, vector<64x64xf32>
    %c0_6 = arith.constant 0 : index
    %c0_7 = arith.constant 0 : index
    %9 = vector.load %arg5[%c0_6, %c0_7] : memref<10x64xf32, #tpu.memory_space<vmem>>, vector<1x64xf32>
    %c0_8 = arith.constant 0 : index
    %c0_9 = arith.constant 0 : index
    %10 = vector.load %arg6[%c0_8, %c0_9] : memref<5x64xf32, #tpu.memory_space<vmem>>, vector<1x64xf32>
    %c1 = arith.constant 1 : index
    %c0_10 = arith.constant 0 : index
    %11 = vector.load %arg6[%c1, %c0_10] : memref<5x64xf32, #tpu.memory_space<vmem>>, vector<1x64xf32>
    %12 = vector.broadcast %11 : vector<1x64xf32> to vector<4x64xf32>
    %13 = arith.mulf %6, %12 : vector<4x64xf32>
    %cst_11 = arith.constant dense<0.000000e+00> : vector<4x64xf32>
    %14 = tpu.matmul %13, %7, %cst_11 {dimension_numbers = #tpu.dot_dimension_numbers<[1], [0], [0], [1], [0, 0, 1, 1], [], []>} : vector<4x64xf32>, vector<64x64xf32>, vector<4x64xf32> -> vector<4x64xf32>
    %cst_12 = arith.constant 3.125000e-02 : f32
    %15 = vector.broadcast %cst_12 : f32 to vector<4x64xf32>
    %16 = arith.mulf %14, %15 : vector<4x64xf32>
    %17 = vector.broadcast %10 : vector<1x64xf32> to vector<4x64xf32>
    %18 = arith.mulf %17, %16 : vector<4x64xf32>
    %cst_13 = arith.constant dense<0.000000e+00> : vector<4x64xf32>
    %19 = tpu.matmul %6, %8, %cst_13 {dimension_numbers = #tpu.dot_dimension_numbers<[1], [0], [0], [1], [0, 0, 1, 1], [], []>} : vector<4x64xf32>, vector<64x64xf32>, vector<4x64xf32> -> vector<4x64xf32>
    %20 = vector.broadcast %9 : vector<1x64xf32> to vector<4x64xf32>
    %21 = arith.addf %19, %20 : vector<4x64xf32>
    %22 = arith.addf %21, %18 : vector<4x64xf32>
    %cst_14 = arith.constant 5.000000e-01 : f32
    %23 = vector.broadcast %cst_14 : f32 to vector<4x64xf32>
    %24 = arith.mulf %23, %22 : vector<4x64xf32>
    %cst_15 = arith.constant 0.707106769 : f32
    %25 = vector.broadcast %cst_15 : f32 to vector<4x64xf32>
    %26 = arith.mulf %22, %25 : vector<4x64xf32>
    %27 = math.absf %26 : vector<4x64xf32>
    %cst_16 = arith.constant 0.327591091 : f32
    %28 = vector.broadcast %cst_16 : f32 to vector<4x64xf32>
    %29 = arith.mulf %28, %27 : vector<4x64xf32>
    %cst_17 = arith.constant 1.000000e+00 : f32
    %30 = vector.broadcast %cst_17 : f32 to vector<4x64xf32>
    %31 = arith.addf %30, %29 : vector<4x64xf32>
    %cst_18 = arith.constant 1.000000e+00 : f32
    %32 = vector.broadcast %cst_18 : f32 to vector<4x64xf32>
    %33 = arith.divf %32, %31 : vector<4x64xf32>
    %cst_19 = arith.constant 1.06140542 : f32
    %34 = vector.broadcast %cst_19 : f32 to vector<4x64xf32>
    %35 = arith.mulf %33, %34 : vector<4x64xf32>
    %cst_20 = arith.constant -1.45315206 : f32
    %36 = vector.broadcast %cst_20 : f32 to vector<4x64xf32>
    %37 = arith.addf %36, %35 : vector<4x64xf32>
    %38 = arith.mulf %33, %37 : vector<4x64xf32>
    %cst_21 = arith.constant 1.42141378 : f32
    %39 = vector.broadcast %cst_21 : f32 to vector<4x64xf32>
    %40 = arith.addf %39, %38 : vector<4x64xf32>
    %41 = arith.mulf %33, %40 : vector<4x64xf32>
    %cst_22 = arith.constant -0.284496725 : f32
    %42 = vector.broadcast %cst_22 : f32 to vector<4x64xf32>
    %43 = arith.addf %42, %41 : vector<4x64xf32>
    %44 = arith.mulf %33, %43 : vector<4x64xf32>
    %cst_23 = arith.constant 0.254829586 : f32
    %45 = vector.broadcast %cst_23 : f32 to vector<4x64xf32>
    %46 = arith.addf %45, %44 : vector<4x64xf32>
    %47 = arith.mulf %33, %46 : vector<4x64xf32>
    %cst_24 = arith.constant 0.000000e+00 : f32
    %48 = vector.broadcast %cst_24 : f32 to vector<4x64xf32>
    %49 = arith.subf %48, %27 : vector<4x64xf32>
    %50 = arith.mulf %49, %27 : vector<4x64xf32>
    %51 = math.exp %50 : vector<4x64xf32>
    %52 = arith.mulf %47, %51 : vector<4x64xf32>
    %cst_25 = arith.constant 1.000000e+00 : f32
    %53 = vector.broadcast %cst_25 : f32 to vector<4x64xf32>
    %54 = arith.subf %53, %52 : vector<4x64xf32>
    %cst_26 = arith.constant 0.000000e+00 : f32
    %55 = vector.broadcast %cst_26 : f32 to vector<4x64xf32>
    %56 = arith.cmpf oge, %26, %55 : vector<4x64xf32>
    %cst_27 = arith.constant 0.000000e+00 : f32
    %57 = vector.broadcast %cst_27 : f32 to vector<4x64xf32>
    %58 = arith.subf %57, %54 : vector<4x64xf32>
    %59 = arith.select %56, %54, %58 : vector<4x64xi1>, vector<4x64xf32>
    %cst_28 = arith.constant 1.000000e+00 : f32
    %60 = vector.broadcast %cst_28 : f32 to vector<4x64xf32>
    %61 = arith.addf %60, %59 : vector<4x64xf32>
    %62 = arith.mulf %24, %61 : vector<4x64xf32>
    %cst_29 = arith.constant 0.000000e+00 : f32
    %63 = vector.broadcast %cst_29 : f32 to vector<8x32xf32>
    %c0_30 = arith.constant 0 : index
    %c0_31 = arith.constant 0 : index
    %64 = vector.load %arg3[%c0_30, %c0_31] : memref<672x64xf32, #tpu.memory_space<vmem>>, vector<64x32xf32>
    %c0_32 = arith.constant 0 : index
    %c0_33 = arith.constant 0 : index
    %65 = vector.load %arg4[%c0_32, %c0_33] : memref<192x16xf32, #tpu.memory_space<vmem>>, vector<8x4xf32>
    %cst_34 = arith.constant dense<0.000000e+00> : vector<4x32xf32>
    %66 = tpu.matmul %62, %64, %cst_34 {dimension_numbers = #tpu.dot_dimension_numbers<[1], [0], [0], [1], [0, 0, 1, 1], [], []>} : vector<4x64xf32>, vector<64x32xf32>, vector<4x32xf32> -> vector<4x32xf32>
    %cst_35 = arith.constant dense<0.000000e+00> : vector<8x32xf32>
    %67 = tpu.matmul %65, %66, %cst_35 {dimension_numbers = #tpu.dot_dimension_numbers<[1], [0], [0], [1], [0, 0, 1, 1], [], []>} : vector<8x4xf32>, vector<4x32xf32>, vector<8x32xf32> -> vector<8x32xf32>
    %68 = arith.addf %63, %67 : vector<8x32xf32>
    %c64_36 = arith.constant 64 : index
    %c0_37 = arith.constant 0 : index
    %69 = vector.load %arg3[%c64_36, %c0_37] : memref<672x64xf32, #tpu.memory_space<vmem>>, vector<64x32xf32>
    %c8 = arith.constant 8 : index
    %c0_38 = arith.constant 0 : index
    %70 = vector.load %arg4[%c8, %c0_38] : memref<192x16xf32, #tpu.memory_space<vmem>>, vector<8x4xf32>
    %cst_39 = arith.constant dense<0.000000e+00> : vector<4x32xf32>
    %71 = tpu.matmul %62, %69, %cst_39 {dimension_numbers = #tpu.dot_dimension_numbers<[1], [0], [0], [1], [0, 0, 1, 1], [], []>} : vector<4x64xf32>, vector<64x32xf32>, vector<4x32xf32> -> vector<4x32xf32>
    %cst_40 = arith.constant dense<0.000000e+00> : vector<8x32xf32>
    %72 = tpu.matmul %70, %71, %cst_40 {dimension_numbers = #tpu.dot_dimension_numbers<[1], [0], [0], [1], [0, 0, 1, 1], [], []>} : vector<8x4xf32>, vector<4x32xf32>, vector<8x32xf32> -> vector<8x32xf32>
    %73 = arith.addf %68, %72 : vector<8x32xf32>
    %c128 = arith.constant 128 : index
    %c0_41 = arith.constant 0 : index
    %74 = vector.load %arg3[%c128, %c0_41] : memref<672x64xf32, #tpu.memory_space<vmem>>, vector<64x32xf32>
    %c16 = arith.constant 16 : index
    %c0_42 = arith.constant 0 : index
    %75 = vector.load %arg4[%c16, %c0_42] : memref<192x16xf32, #tpu.memory_space<vmem>>, vector<8x4xf32>
    %cst_43 = arith.constant dense<0.000000e+00> : vector<4x32xf32>
    %76 = tpu.matmul %62, %74, %cst_43 {dimension_numbers = #tpu.dot_dimension_numbers<[1], [0], [0], [1], [0, 0, 1, 1], [], []>} : vector<4x64xf32>, vector<64x32xf32>, vector<4x32xf32> -> vector<4x32xf32>
    %cst_44 = arith.constant dense<0.000000e+00> : vector<8x32xf32>
    %77 = tpu.matmul %75, %76, %cst_44 {dimension_numbers = #tpu.dot_dimension_numbers<[1], [0], [0], [1], [0, 0, 1, 1], [], []>} : vector<8x4xf32>, vector<4x32xf32>, vector<8x32xf32> -> vector<8x32xf32>
    %78 = arith.addf %73, %77 : vector<8x32xf32>
    %c192 = arith.constant 192 : index
    %c0_45 = arith.constant 0 : index
    %79 = vector.load %arg3[%c192, %c0_45] : memref<672x64xf32, #tpu.memory_space<vmem>>, vector<64x32xf32>
    %c24 = arith.constant 24 : index
    %c0_46 = arith.constant 0 : index
    %80 = vector.load %arg4[%c24, %c0_46] : memref<192x16xf32, #tpu.memory_space<vmem>>, vector<8x4xf32>
    %cst_47 = arith.constant dense<0.000000e+00> : vector<4x32xf32>
    %81 = tpu.matmul %62, %79, %cst_47 {dimension_numbers = #tpu.dot_dimension_numbers<[1], [0], [0], [1], [0, 0, 1, 1], [], []>} : vector<4x64xf32>, vector<64x32xf32>, vector<4x32xf32> -> vector<4x32xf32>
    %cst_48 = arith.constant dense<0.000000e+00> : vector<8x32xf32>
    %82 = tpu.matmul %80, %81, %cst_48 {dimension_numbers = #tpu.dot_dimension_numbers<[1], [0], [0], [1], [0, 0, 1, 1], [], []>} : vector<8x4xf32>, vector<4x32xf32>, vector<8x32xf32> -> vector<8x32xf32>
    %83 = arith.addf %78, %82 : vector<8x32xf32>
    %c256 = arith.constant 256 : index
    %c0_49 = arith.constant 0 : index
    %84 = vector.load %arg3[%c256, %c0_49] : memref<672x64xf32, #tpu.memory_space<vmem>>, vector<64x32xf32>
    %c32 = arith.constant 32 : index
    %c0_50 = arith.constant 0 : index
    %85 = vector.load %arg4[%c32, %c0_50] : memref<192x16xf32, #tpu.memory_space<vmem>>, vector<8x4xf32>
    %cst_51 = arith.constant dense<0.000000e+00> : vector<4x32xf32>
    %86 = tpu.matmul %62, %84, %cst_51 {dimension_numbers = #tpu.dot_dimension_numbers<[1], [0], [0], [1], [0, 0, 1, 1], [], []>} : vector<4x64xf32>, vector<64x32xf32>, vector<4x32xf32> -> vector<4x32xf32>
    %cst_52 = arith.constant dense<0.000000e+00> : vector<8x32xf32>
    %87 = tpu.matmul %85, %86, %cst_52 {dimension_numbers = #tpu.dot_dimension_numbers<[1], [0], [0], [1], [0, 0, 1, 1], [], []>} : vector<8x4xf32>, vector<4x32xf32>, vector<8x32xf32> -> vector<8x32xf32>
    %88 = arith.addf %83, %87 : vector<8x32xf32>
    %c320 = arith.constant 320 : index
    %c0_53 = arith.constant 0 : index
    %89 = vector.load %arg3[%c320, %c0_53] : memref<672x64xf32, #tpu.memory_space<vmem>>, vector<64x32xf32>
    %c40 = arith.constant 40 : index
    %c0_54 = arith.constant 0 : index
    %90 = vector.load %arg4[%c40, %c0_54] : memref<192x16xf32, #tpu.memory_space<vmem>>, vector<8x4xf32>
    %cst_55 = arith.constant dense<0.000000e+00> : vector<4x32xf32>
    %91 = tpu.matmul %62, %89, %cst_55 {dimension_numbers = #tpu.dot_dimension_numbers<[1], [0], [0], [1], [0, 0, 1, 1], [], []>} : vector<4x64xf32>, vector<64x32xf32>, vector<4x32xf32> -> vector<4x32xf32>
    %cst_56 = arith.constant dense<0.000000e+00> : vector<8x32xf32>
    %92 = tpu.matmul %90, %91, %cst_56 {dimension_numbers = #tpu.dot_dimension_numbers<[1], [0], [0], [1], [0, 0, 1, 1], [], []>} : vector<8x4xf32>, vector<4x32xf32>, vector<8x32xf32> -> vector<8x32xf32>
    %93 = arith.addf %88, %92 : vector<8x32xf32>
    %c4 = arith.constant 4 : index
    %c0_57 = arith.constant 0 : index
    %94 = vector.load %arg5[%c4, %c0_57] : memref<10x64xf32, #tpu.memory_space<vmem>>, vector<1x32xf32>
    %95 = vector.broadcast %94 : vector<1x32xf32> to vector<8x32xf32>
    %96 = arith.addf %93, %95 : vector<8x32xf32>
    %c5 = arith.constant 5 : index
    %c0_58 = arith.constant 0 : index
    %97 = vector.load %arg5[%c5, %c0_58] : memref<10x64xf32, #tpu.memory_space<vmem>>, vector<1x32xf32>
    %cst_59 = arith.constant 0.000000e+00 : f32
    %98 = vector.broadcast %cst_59 : f32 to vector<8x32xf32>
    %99 = arith.cmpf oge, %96, %98 : vector<8x32xf32>
    %100 = vector.broadcast %97 : vector<1x32xf32> to vector<8x32xf32>
    %101 = arith.mulf %100, %96 : vector<8x32xf32>
    %102 = arith.select %99, %96, %101 : vector<8x32xi1>, vector<8x32xf32>
    %cst_60 = arith.constant 0.000000e+00 : f32
    %103 = vector.broadcast %cst_60 : f32 to vector<16x32xf32>
    %c384 = arith.constant 384 : index
    %c0_61 = arith.constant 0 : index
    %104 = vector.load %arg3[%c384, %c0_61] : memref<672x64xf32, #tpu.memory_space<vmem>>, vector<32x32xf32>
    %c48 = arith.constant 48 : index
    %c0_62 = arith.constant 0 : index
    %105 = vector.load %arg4[%c48, %c0_62] : memref<192x16xf32, #tpu.memory_space<vmem>>, vector<16x8xf32>
    %cst_63 = arith.constant dense<0.000000e+00> : vector<8x32xf32>
    %106 = tpu.matmul %102, %104, %cst_63 {dimension_numbers = #tpu.dot_dimension_numbers<[1], [0], [0], [1], [0, 0, 1, 1], [], []>} : vector<8x32xf32>, vector<32x32xf32>, vector<8x32xf32> -> vector<8x32xf32>
    %cst_64 = arith.constant dense<0.000000e+00> : vector<16x32xf32>
    %107 = tpu.matmul %105, %106, %cst_64 {dimension_numbers = #tpu.dot_dimension_numbers<[1], [0], [0], [1], [0, 0, 1, 1], [], []>} : vector<16x8xf32>, vector<8x32xf32>, vector<16x32xf32> -> vector<16x32xf32>
    %108 = arith.addf %103, %107 : vector<16x32xf32>
    %c416 = arith.constant 416 : index
    %c0_65 = arith.constant 0 : index
    %109 = vector.load %arg3[%c416, %c0_65] : memref<672x64xf32, #tpu.memory_space<vmem>>, vector<32x32xf32>
    %c64_66 = arith.constant 64 : index
    %c0_67 = arith.constant 0 : index
    %110 = vector.load %arg4[%c64_66, %c0_67] : memref<192x16xf32, #tpu.memory_space<vmem>>, vector<16x8xf32>
    %cst_68 = arith.constant dense<0.000000e+00> : vector<8x32xf32>
    %111 = tpu.matmul %102, %109, %cst_68 {dimension_numbers = #tpu.dot_dimension_numbers<[1], [0], [0], [1], [0, 0, 1, 1], [], []>} : vector<8x32xf32>, vector<32x32xf32>, vector<8x32xf32> -> vector<8x32xf32>
    %cst_69 = arith.constant dense<0.000000e+00> : vector<16x32xf32>
    %112 = tpu.matmul %110, %111, %cst_69 {dimension_numbers = #tpu.dot_dimension_numbers<[1], [0], [0], [1], [0, 0, 1, 1], [], []>} : vector<16x8xf32>, vector<8x32xf32>, vector<16x32xf32> -> vector<16x32xf32>
    %113 = arith.addf %108, %112 : vector<16x32xf32>
    %c448 = arith.constant 448 : index
    %c0_70 = arith.constant 0 : index
    %114 = vector.load %arg3[%c448, %c0_70] : memref<672x64xf32, #tpu.memory_space<vmem>>, vector<32x32xf32>
    %c80 = arith.constant 80 : index
    %c0_71 = arith.constant 0 : index
    %115 = vector.load %arg4[%c80, %c0_71] : memref<192x16xf32, #tpu.memory_space<vmem>>, vector<16x8xf32>
    %cst_72 = arith.constant dense<0.000000e+00> : vector<8x32xf32>
    %116 = tpu.matmul %102, %114, %cst_72 {dimension_numbers = #tpu.dot_dimension_numbers<[1], [0], [0], [1], [0, 0, 1, 1], [], []>} : vector<8x32xf32>, vector<32x32xf32>, vector<8x32xf32> -> vector<8x32xf32>
    %cst_73 = arith.constant dense<0.000000e+00> : vector<16x32xf32>
    %117 = tpu.matmul %115, %116, %cst_73 {dimension_numbers = #tpu.dot_dimension_numbers<[1], [0], [0], [1], [0, 0, 1, 1], [], []>} : vector<16x8xf32>, vector<8x32xf32>, vector<16x32xf32> -> vector<16x32xf32>
    %118 = arith.addf %113, %117 : vector<16x32xf32>
    %c480 = arith.constant 480 : index
    %c0_74 = arith.constant 0 : index
    %119 = vector.load %arg3[%c480, %c0_74] : memref<672x64xf32, #tpu.memory_space<vmem>>, vector<32x32xf32>
    %c96 = arith.constant 96 : index
    %c0_75 = arith.constant 0 : index
    %120 = vector.load %arg4[%c96, %c0_75] : memref<192x16xf32, #tpu.memory_space<vmem>>, vector<16x8xf32>
    %cst_76 = arith.constant dense<0.000000e+00> : vector<8x32xf32>
    %121 = tpu.matmul %102, %119, %cst_76 {dimension_numbers = #tpu.dot_dimension_numbers<[1], [0], [0], [1], [0, 0, 1, 1], [], []>} : vector<8x32xf32>, vector<32x32xf32>, vector<8x32xf32> -> vector<8x32xf32>
    %cst_77 = arith.constant dense<0.000000e+00> : vector<16x32xf32>
    %122 = tpu.matmul %120, %121, %cst_77 {dimension_numbers = #tpu.dot_dimension_numbers<[1], [0], [0], [1], [0, 0, 1, 1], [], []>} : vector<16x8xf32>, vector<8x32xf32>, vector<16x32xf32> -> vector<16x32xf32>
    %123 = arith.addf %118, %122 : vector<16x32xf32>
    %c512 = arith.constant 512 : index
    %c0_78 = arith.constant 0 : index
    %124 = vector.load %arg3[%c512, %c0_78] : memref<672x64xf32, #tpu.memory_space<vmem>>, vector<32x32xf32>
    %c112 = arith.constant 112 : index
    %c0_79 = arith.constant 0 : index
    %125 = vector.load %arg4[%c112, %c0_79] : memref<192x16xf32, #tpu.memory_space<vmem>>, vector<16x8xf32>
    %cst_80 = arith.constant dense<0.000000e+00> : vector<8x32xf32>
    %126 = tpu.matmul %102, %124, %cst_80 {dimension_numbers = #tpu.dot_dimension_numbers<[1], [0], [0], [1], [0, 0, 1, 1], [], []>} : vector<8x32xf32>, vector<32x32xf32>, vector<8x32xf32> -> vector<8x32xf32>
    %cst_81 = arith.constant dense<0.000000e+00> : vector<16x32xf32>
    %127 = tpu.matmul %125, %126, %cst_81 {dimension_numbers = #tpu.dot_dimension_numbers<[1], [0], [0], [1], [0, 0, 1, 1], [], []>} : vector<16x8xf32>, vector<8x32xf32>, vector<16x32xf32> -> vector<16x32xf32>
    %128 = arith.addf %123, %127 : vector<16x32xf32>
    %c544 = arith.constant 544 : index
    %c0_82 = arith.constant 0 : index
    %129 = vector.load %arg3[%c544, %c0_82] : memref<672x64xf32, #tpu.memory_space<vmem>>, vector<32x32xf32>
    %c128_83 = arith.constant 128 : index
    %c0_84 = arith.constant 0 : index
    %130 = vector.load %arg4[%c128_83, %c0_84] : memref<192x16xf32, #tpu.memory_space<vmem>>, vector<16x8xf32>
    %cst_85 = arith.constant dense<0.000000e+00> : vector<8x32xf32>
    %131 = tpu.matmul %102, %129, %cst_85 {dimension_numbers = #tpu.dot_dimension_numbers<[1], [0], [0], [1], [0, 0, 1, 1], [], []>} : vector<8x32xf32>, vector<32x32xf32>, vector<8x32xf32> -> vector<8x32xf32>
    %cst_86 = arith.constant dense<0.000000e+00> : vector<16x32xf32>
    %132 = tpu.matmul %130, %131, %cst_86 {dimension_numbers = #tpu.dot_dimension_numbers<[1], [0], [0], [1], [0, 0, 1, 1], [], []>} : vector<16x8xf32>, vector<8x32xf32>, vector<16x32xf32> -> vector<16x32xf32>
    %133 = arith.addf %128, %132 : vector<16x32xf32>
    %c6 = arith.constant 6 : index
    %c0_87 = arith.constant 0 : index
    %134 = vector.load %arg5[%c6, %c0_87] : memref<10x64xf32, #tpu.memory_space<vmem>>, vector<1x32xf32>
    %135 = vector.broadcast %134 : vector<1x32xf32> to vector<16x32xf32>
    %136 = arith.addf %133, %135 : vector<16x32xf32>
    %c7 = arith.constant 7 : index
    %c0_88 = arith.constant 0 : index
    %137 = vector.load %arg5[%c7, %c0_88] : memref<10x64xf32, #tpu.memory_space<vmem>>, vector<1x32xf32>
    %cst_89 = arith.constant 0.000000e+00 : f32
    %138 = vector.broadcast %cst_89 : f32 to vector<16x32xf32>
    %139 = arith.cmpf oge, %136, %138 : vector<16x32xf32>
    %140 = vector.broadcast %137 : vector<1x32xf32> to vector<16x32xf32>
    %141 = arith.mulf %140, %136 : vector<16x32xf32>
    %142 = arith.select %139, %136, %141 : vector<16x32xi1>, vector<16x32xf32>
    %cst_90 = arith.constant 0.000000e+00 : f32
    %143 = vector.broadcast %cst_90 : f32 to vector<16x4xf32>
    %c576 = arith.constant 576 : index
    %c0_91 = arith.constant 0 : index
    %144 = vector.load %arg3[%c576, %c0_91] : memref<672x64xf32, #tpu.memory_space<vmem>>, vector<32x4xf32>
    %c144 = arith.constant 144 : index
    %c0_92 = arith.constant 0 : index
    %145 = vector.load %arg4[%c144, %c0_92] : memref<192x16xf32, #tpu.memory_space<vmem>>, vector<16x16xf32>
    %cst_93 = arith.constant dense<0.000000e+00> : vector<16x4xf32>
    %146 = tpu.matmul %142, %144, %cst_93 {dimension_numbers = #tpu.dot_dimension_numbers<[1], [0], [0], [1], [0, 0, 1, 1], [], []>} : vector<16x32xf32>, vector<32x4xf32>, vector<16x4xf32> -> vector<16x4xf32>
    %cst_94 = arith.constant dense<0.000000e+00> : vector<16x4xf32>
    %147 = tpu.matmul %145, %146, %cst_94 {dimension_numbers = #tpu.dot_dimension_numbers<[1], [0], [0], [1], [0, 0, 1, 1], [], []>} : vector<16x16xf32>, vector<16x4xf32>, vector<16x4xf32> -> vector<16x4xf32>
    %148 = arith.addf %143, %147 : vector<16x4xf32>
    %c608 = arith.constant 608 : index
    %c0_95 = arith.constant 0 : index
    %149 = vector.load %arg3[%c608, %c0_95] : memref<672x64xf32, #tpu.memory_space<vmem>>, vector<32x4xf32>
    %c160 = arith.constant 160 : index
    %c0_96 = arith.constant 0 : index
    %150 = vector.load %arg4[%c160, %c0_96] : memref<192x16xf32, #tpu.memory_space<vmem>>, vector<16x16xf32>
    %cst_97 = arith.constant dense<0.000000e+00> : vector<16x4xf32>
    %151 = tpu.matmul %142, %149, %cst_97 {dimension_numbers = #tpu.dot_dimension_numbers<[1], [0], [0], [1], [0, 0, 1, 1], [], []>} : vector<16x32xf32>, vector<32x4xf32>, vector<16x4xf32> -> vector<16x4xf32>
    %cst_98 = arith.constant dense<0.000000e+00> : vector<16x4xf32>
    %152 = tpu.matmul %150, %151, %cst_98 {dimension_numbers = #tpu.dot_dimension_numbers<[1], [0], [0], [1], [0, 0, 1, 1], [], []>} : vector<16x16xf32>, vector<16x4xf32>, vector<16x4xf32> -> vector<16x4xf32>
    %153 = arith.addf %148, %152 : vector<16x4xf32>
    %c640 = arith.constant 640 : index
    %c0_99 = arith.constant 0 : index
    %154 = vector.load %arg3[%c640, %c0_99] : memref<672x64xf32, #tpu.memory_space<vmem>>, vector<32x4xf32>
    %c176 = arith.constant 176 : index
    %c0_100 = arith.constant 0 : index
    %155 = vector.load %arg4[%c176, %c0_100] : memref<192x16xf32, #tpu.memory_space<vmem>>, vector<16x16xf32>
    %cst_101 = arith.constant dense<0.000000e+00> : vector<16x4xf32>
    %156 = tpu.matmul %142, %154, %cst_101 {dimension_numbers = #tpu.dot_dimension_numbers<[1], [0], [0], [1], [0, 0, 1, 1], [], []>} : vector<16x32xf32>, vector<32x4xf32>, vector<16x4xf32> -> vector<16x4xf32>
    %cst_102 = arith.constant dense<0.000000e+00> : vector<16x4xf32>
    %157 = tpu.matmul %155, %156, %cst_102 {dimension_numbers = #tpu.dot_dimension_numbers<[1], [0], [0], [1], [0, 0, 1, 1], [], []>} : vector<16x16xf32>, vector<16x4xf32>, vector<16x4xf32> -> vector<16x4xf32>
    %158 = arith.addf %153, %157 : vector<16x4xf32>
    %c8_103 = arith.constant 8 : index
    %c0_104 = arith.constant 0 : index
    %159 = vector.load %arg5[%c8_103, %c0_104] : memref<10x64xf32, #tpu.memory_space<vmem>>, vector<1x4xf32>
    %160 = vector.broadcast %159 : vector<1x4xf32> to vector<16x4xf32>
    %161 = arith.addf %158, %160 : vector<16x4xf32>
    %c9 = arith.constant 9 : index
    %c0_105 = arith.constant 0 : index
    %162 = vector.load %arg5[%c9, %c0_105] : memref<10x64xf32, #tpu.memory_space<vmem>>, vector<1x4xf32>
    %cst_106 = arith.constant 0.000000e+00 : f32
    %163 = vector.broadcast %cst_106 : f32 to vector<16x4xf32>
    %164 = arith.cmpf oge, %161, %163 : vector<16x4xf32>
    %165 = vector.broadcast %162 : vector<1x4xf32> to vector<16x4xf32>
    %166 = arith.mulf %165, %161 : vector<16x4xf32>
    %167 = arith.select %164, %161, %166 : vector<16x4xi1>, vector<16x4xf32>
    %c0_107 = arith.constant 0 : index
    %c0_108 = arith.constant 0 : index
    %168 = vector.load %arg7[%c0_107, %c0_108] : memref<17x4xf32, #tpu.memory_space<vmem>>, vector<16x4xf32>
    tpu.vector_store %arg7[%c0_107, %c0_108], %167 {strides = array<i32>} : memref<17x4xf32, #tpu.memory_space<vmem>>, vector<16x4xf32>,
    %169 = vector.extract_strided_slice %167 {offsets = [15, 0], sizes = [1, 4], strides = [1, 1]} : vector<16x4xf32> to vector<1x4xf32>
    %c16_109 = arith.constant 16 : index
    %c0_110 = arith.constant 0 : index
    %170 = vector.load %arg7[%c16_109, %c0_110] : memref<17x4xf32, #tpu.memory_space<vmem>>, vector<1x4xf32>
    tpu.vector_store %arg7[%c16_109, %c0_110], %169 {strides = array<i32>} : memref<17x4xf32, #tpu.memory_space<vmem>>, vector<1x4xf32>,
    %c128_111 = arith.constant 128 : index
    %c0_112 = arith.constant 0 : index
    %171 = vector.load %arg2[%c128_111, %c0_112] : memref<288x64xf32, #tpu.memory_space<vmem>>, vector<64x64xf32>
    %c1_113 = arith.constant 1 : index
    %c0_114 = arith.constant 0 : index
    %172 = vector.load %arg5[%c1_113, %c0_114] : memref<10x64xf32, #tpu.memory_space<vmem>>, vector<1x64xf32>
    %c2 = arith.constant 2 : index
    %c0_115 = arith.constant 0 : index
    %173 = vector.load %arg6[%c2, %c0_115] : memref<5x64xf32, #tpu.memory_space<vmem>>, vector<1x64xf32>
    %c3 = arith.constant 3 : index
    %c0_116 = arith.constant 0 : index
    %174 = vector.load %arg6[%c3, %c0_116] : memref<5x64xf32, #tpu.memory_space<vmem>>, vector<1x64xf32>
    %175 = arith.mulf %5, %174 : vector<1x64xf32>
    %cst_117 = arith.constant dense<0.000000e+00> : vector<1x64xf32>
    %176 = tpu.matmul %175, %7, %cst_117 {dimension_numbers = #tpu.dot_dimension_numbers<[1], [0], [0], [1], [0, 0, 1, 1], [], []>} : vector<1x64xf32>, vector<64x64xf32>, vector<1x64xf32> -> vector<1x64xf32>
    %cst_118 = arith.constant 3.125000e-02 : f32
    %177 = vector.broadcast %cst_118 : f32 to vector<1x64xf32>
    %178 = arith.mulf %176, %177 : vector<1x64xf32>
    %179 = arith.mulf %173, %178 : vector<1x64xf32>
    %cst_119 = arith.constant dense<0.000000e+00> : vector<1x64xf32>
    %180 = tpu.matmul %5, %171, %cst_119 {dimension_numbers = #tpu.dot_dimension_numbers<[1], [0], [0], [1], [0, 0, 1, 1], [], []>} : vector<1x64xf32>, vector<64x64xf32>, vector<1x64xf32> -> vector<1x64xf32>
    %181 = arith.addf %180, %172 : vector<1x64xf32>
    %182 = arith.addf %181, %179 : vector<1x64xf32>
    %cst_120 = arith.constant 5.000000e-01 : f32
    %183 = vector.broadcast %cst_120 : f32 to vector<1x64xf32>
    %184 = arith.mulf %183, %182 : vector<1x64xf32>
    %cst_121 = arith.constant 0.707106769 : f32
    %185 = vector.broadcast %cst_121 : f32 to vector<1x64xf32>
    %186 = arith.mulf %182, %185 : vector<1x64xf32>
    %187 = math.absf %186 : vector<1x64xf32>
    %cst_122 = arith.constant 0.327591091 : f32
    %188 = vector.broadcast %cst_122 : f32 to vector<1x64xf32>
    %189 = arith.mulf %188, %187 : vector<1x64xf32>
    %cst_123 = arith.constant 1.000000e+00 : f32
    %190 = vector.broadcast %cst_123 : f32 to vector<1x64xf32>
    %191 = arith.addf %190, %189 : vector<1x64xf32>
    %cst_124 = arith.constant 1.000000e+00 : f32
    %192 = vector.broadcast %cst_124 : f32 to vector<1x64xf32>
    %193 = arith.divf %192, %191 : vector<1x64xf32>
    %cst_125 = arith.constant 1.06140542 : f32
    %194 = vector.broadcast %cst_125 : f32 to vector<1x64xf32>
    %195 = arith.mulf %193, %194 : vector<1x64xf32>
    %cst_126 = arith.constant -1.45315206 : f32
    %196 = vector.broadcast %cst_126 : f32 to vector<1x64xf32>
    %197 = arith.addf %196, %195 : vector<1x64xf32>
    %198 = arith.mulf %193, %197 : vector<1x64xf32>
    %cst_127 = arith.constant 1.42141378 : f32
    %199 = vector.broadcast %cst_127 : f32 to vector<1x64xf32>
    %200 = arith.addf %199, %198 : vector<1x64xf32>
    %201 = arith.mulf %193, %200 : vector<1x64xf32>
    %cst_128 = arith.constant -0.284496725 : f32
    %202 = vector.broadcast %cst_128 : f32 to vector<1x64xf32>
    %203 = arith.addf %202, %201 : vector<1x64xf32>
    %204 = arith.mulf %193, %203 : vector<1x64xf32>
    %cst_129 = arith.constant 0.254829586 : f32
    %205 = vector.broadcast %cst_129 : f32 to vector<1x64xf32>
    %206 = arith.addf %205, %204 : vector<1x64xf32>
    %207 = arith.mulf %193, %206 : vector<1x64xf32>
    %cst_130 = arith.constant 0.000000e+00 : f32
    %208 = vector.broadcast %cst_130 : f32 to vector<1x64xf32>
    %209 = arith.subf %208, %187 : vector<1x64xf32>
    %210 = arith.mulf %209, %187 : vector<1x64xf32>
    %211 = math.exp %210 : vector<1x64xf32>
    %212 = arith.mulf %207, %211 : vector<1x64xf32>
    %cst_131 = arith.constant 1.000000e+00 : f32
    %213 = vector.broadcast %cst_131 : f32 to vector<1x64xf32>
    %214 = arith.subf %213, %212 : vector<1x64xf32>
    %cst_132 = arith.constant 0.000000e+00 : f32
    %215 = vector.broadcast %cst_132 : f32 to vector<1x64xf32>
    %216 = arith.cmpf oge, %186, %215 : vector<1x64xf32>
    %cst_133 = arith.constant 0.000000e+00 : f32
    %217 = vector.broadcast %cst_133 : f32 to vector<1x64xf32>
    %218 = arith.subf %217, %214 : vector<1x64xf32>
    %219 = arith.select %216, %214, %218 : vector<1x64xi1>, vector<1x64xf32>
    %cst_134 = arith.constant 1.000000e+00 : f32
    %220 = vector.broadcast %cst_134 : f32 to vector<1x64xf32>
    %221 = arith.addf %220, %219 : vector<1x64xf32>
    %222 = arith.mulf %184, %221 : vector<1x64xf32>
    %c4_135 = arith.constant 4 : index
    %c0_136 = arith.constant 0 : index
    %223 = vector.load %arg6[%c4_135, %c0_136] : memref<5x64xf32, #tpu.memory_space<vmem>>, vector<1x64xf32>
    %224 = arith.addf %222, %223 : vector<1x64xf32>
    %c192_137 = arith.constant 192 : index
    %c0_138 = arith.constant 0 : index
    %225 = vector.load %arg2[%c192_137, %c0_138] : memref<288x64xf32, #tpu.memory_space<vmem>>, vector<64x32xf32>
    %cst_139 = arith.constant dense<0.000000e+00> : vector<1x32xf32>
    %226 = tpu.matmul %224, %225, %cst_139 {dimension_numbers = #tpu.dot_dimension_numbers<[1], [0], [0], [1], [0, 0, 1, 1], [], []>} : vector<1x64xf32>, vector<64x32xf32>, vector<1x32xf32> -> vector<1x32xf32>
    %c2_140 = arith.constant 2 : index
    %c0_141 = arith.constant 0 : index
    %227 = vector.load %arg5[%c2_140, %c0_141] : memref<10x64xf32, #tpu.memory_space<vmem>>, vector<1x32xf32>
    %228 = arith.addf %226, %227 : vector<1x32xf32>
    %cst_142 = arith.constant 5.000000e-01 : f32
    %229 = vector.broadcast %cst_142 : f32 to vector<1x32xf32>
    %230 = arith.mulf %229, %228 : vector<1x32xf32>
    %cst_143 = arith.constant 0.707106769 : f32
    %231 = vector.broadcast %cst_143 : f32 to vector<1x32xf32>
    %232 = arith.mulf %228, %231 : vector<1x32xf32>
    %233 = math.absf %232 : vector<1x32xf32>
    %cst_144 = arith.constant 0.327591091 : f32
    %234 = vector.broadcast %cst_144 : f32 to vector<1x32xf32>
    %235 = arith.mulf %234, %233 : vector<1x32xf32>
    %cst_145 = arith.constant 1.000000e+00 : f32
    %236 = vector.broadcast %cst_145 : f32 to vector<1x32xf32>
    %237 = arith.addf %236, %235 : vector<1x32xf32>
    %cst_146 = arith.constant 1.000000e+00 : f32
    %238 = vector.broadcast %cst_146 : f32 to vector<1x32xf32>
    %239 = arith.divf %238, %237 : vector<1x32xf32>
    %cst_147 = arith.constant 1.06140542 : f32
    %240 = vector.broadcast %cst_147 : f32 to vector<1x32xf32>
    %241 = arith.mulf %239, %240 : vector<1x32xf32>
    %cst_148 = arith.constant -1.45315206 : f32
    %242 = vector.broadcast %cst_148 : f32 to vector<1x32xf32>
    %243 = arith.addf %242, %241 : vector<1x32xf32>
    %244 = arith.mulf %239, %243 : vector<1x32xf32>
    %cst_149 = arith.constant 1.42141378 : f32
    %245 = vector.broadcast %cst_149 : f32 to vector<1x32xf32>
    %246 = arith.addf %245, %244 : vector<1x32xf32>
    %247 = arith.mulf %239, %246 : vector<1x32xf32>
    %cst_150 = arith.constant -0.284496725 : f32
    %248 = vector.broadcast %cst_150 : f32 to vector<1x32xf32>
    %249 = arith.addf %248, %247 : vector<1x32xf32>
    %250 = arith.mulf %239, %249 : vector<1x32xf32>
    %cst_151 = arith.constant 0.254829586 : f32
    %251 = vector.broadcast %cst_151 : f32 to vector<1x32xf32>
    %252 = arith.addf %251, %250 : vector<1x32xf32>
    %253 = arith.mulf %239, %252 : vector<1x32xf32>
    %cst_152 = arith.constant 0.000000e+00 : f32
    %254 = vector.broadcast %cst_152 : f32 to vector<1x32xf32>
    %255 = arith.subf %254, %233 : vector<1x32xf32>
    %256 = arith.mulf %255, %233 : vector<1x32xf32>
    %257 = math.exp %256 : vector<1x32xf32>
    %258 = arith.mulf %253, %257 : vector<1x32xf32>
    %cst_153 = arith.constant 1.000000e+00 : f32
    %259 = vector.broadcast %cst_153 : f32 to vector<1x32xf32>
    %260 = arith.subf %259, %258 : vector<1x32xf32>
    %cst_154 = arith.constant 0.000000e+00 : f32
    %261 = vector.broadcast %cst_154 : f32 to vector<1x32xf32>
    %262 = arith.cmpf oge, %232, %261 : vector<1x32xf32>
    %cst_155 = arith.constant 0.000000e+00 : f32
    %263 = vector.broadcast %cst_155 : f32 to vector<1x32xf32>
    %264 = arith.subf %263, %260 : vector<1x32xf32>
    %265 = arith.select %262, %260, %264 : vector<1x32xi1>, vector<1x32xf32>
    %cst_156 = arith.constant 1.000000e+00 : f32
    %266 = vector.broadcast %cst_156 : f32 to vector<1x32xf32>
    %267 = arith.addf %266, %265 : vector<1x32xf32>
    %268 = arith.mulf %230, %267 : vector<1x32xf32>
    %c256_157 = arith.constant 256 : index
    %c0_158 = arith.constant 0 : index
    %269 = vector.load %arg2[%c256_157, %c0_158] : memref<288x64xf32, #tpu.memory_space<vmem>>, vector<32x2xf32>
    %cst_159 = arith.constant dense<0.000000e+00> : vector<1x2xf32>
    %270 = tpu.matmul %268, %269, %cst_159 {dimension_numbers = #tpu.dot_dimension_numbers<[1], [0], [0], [1], [0, 0, 1, 1], [], []>} : vector<1x32xf32>, vector<32x2xf32>, vector<1x2xf32> -> vector<1x2xf32>
    %c3_160 = arith.constant 3 : index
    %c0_161 = arith.constant 0 : index
    %271 = vector.load %arg5[%c3_160, %c0_161] : memref<10x64xf32, #tpu.memory_space<vmem>>, vector<1x2xf32>
    %272 = arith.addf %270, %271 : vector<1x2xf32>
    %c0_162 = arith.constant 0 : index
    %c0_163 = arith.constant 0 : index
    %273 = vector.load %arg8[%c0_162, %c0_163] : memref<1x2xf32, #tpu.memory_space<vmem>>, vector<1x2xf32>
    tpu.vector_store %arg8[%c0_162, %c0_163], %272 {strides = array<i32>} : memref<1x2xf32, #tpu.memory_space<vmem>>, vector<1x2xf32>,
    return
  }
}

</mosaic_0001>

<llo_original>
// kernel: forward.3
$region0: #{forward.3}
  #allocation0 [shape = 'u32[]', space=smem, size = 0x4, offset = 0x4, fixed_abs, tag = 'smem constant byte address 0x4 - core index']
  #allocation1 [shape = 'u32[72,128]{1,0:T(1,128)}', space=vmem, size = 0x9000, scoped, tag = 'internal scratch']
  %s0 = inlined_call_operand.vmem [shape: f32[1,128], index: 0, kind: input, shape index: {}]
  %s1 = inlined_call_operand.vmem [shape: f32[16,8], index: 1, kind: input, shape index: {}]
  %s2 = inlined_call_operand.hbm [shape: f32[128,256], index: 2, kind: input, shape index: {}]
  %s3 = inlined_call_operand.vmem [shape: f32[1,256], index: 3, kind: input, shape index: {}]
  %s4 = inlined_call_operand.hbm [shape: f32[664,128], index: 4, kind: input, shape index: {}]
  %s5 = inlined_call_operand.hbm [shape: f32[108,16], index: 5, kind: input, shape index: {}]
  %s6 = inlined_call_operand.vmem [shape: f32[6,128], index: 6, kind: input, shape index: {}]
  %s7 = inlined_call_operand.vmem [shape: f32[6,128], index: 7, kind: output, shape index: {}]
  %s8 = sld [smem:[#allocation0]]
  $region50: #{forward.3} parent=0
    _
  %s10 = ssub.s32 1, %s8
  %s11 = scalar_select 0, %s10, %s8
  $region1: #{forward.3} parent=0
    #allocation2 [shape = 'u8[131072]{0}', space=vmem, size = 0x20000, scoped, tag = 'input window, operand 2, single buffered']
    #allocation3 [shape = 's32[1]{0}', space=sflag, size = 0x4, scoped, tag = 'scoped memory for forward.3']
    #allocation4 [shape = 'u8[339968]{0}', space=vmem, size = 0x53000, scoped, tag = 'input window, operand 4, single buffered']
    #allocation5 [shape = 's32[1]{0}', space=sflag, size = 0x4, scoped, tag = 'scoped memory for forward.3']
    #allocation6 [shape = 'u8[57344]{0}', space=vmem, size = 0xe000, scoped, tag = 'input window, operand 5, single buffered']
    %12 = vsyncpa [#allocation3], 0
    %13 = vsyncpa [#allocation5], 0
    // Predicated region
    $region2: #{forward.3} parent=1 // pred_check
      _
    $region3: #{forward.3} parent=1 // pred_check_branch
      %15 = sbr.rel (0) target = $region5
    $region4: #{forward.3} parent=1 // pred_region
      _
    $region5: #{forward.3} parent=1 // pred_fallthru
      _
    // Predicated region
    $region6: #{forward.3} parent=1 // pred_check
      _
    $region7: #{forward.3} parent=1 // pred_check_branch
      %17 = sbr.rel (0) target = $region9
    $region8: #{forward.3} parent=1 // pred_region
      _
    $region9: #{forward.3} parent=1 // pred_fallthru
      _
    // Predicated region
    $region10: #{forward.3} parent=1 // pred_check
      _
    $region11: #{forward.3} parent=1 // pred_check_branch
      %19 = sbr.rel (0) target = $region13
    $region12: #{forward.3} parent=1 // pred_region
      %21 = vsyncadd [#allocation3], 0
      %s22 = sshll.u32 %s2, 4
      %s23 = int_to_ptr.hbm [resolvable:$true] %s22
      %s24 = sshll.u32 [#allocation2], 4
      %s25 = int_to_ptr.vmem [resolvable:$true] %s24
      %30 = dma.hbm_to_vmem [thread:$0]  %s23, 4096, %s25, [#allocation3], 256, 256, 16
    $region13: #{forward.3} parent=1 // pred_fallthru
      _
    // Predicated region
    $region14: #{forward.3} parent=1 // pred_check
      _
    $region15: #{forward.3} parent=1 // pred_check_branch
      %32 = sbr.rel (0) target = $region17
    $region16: #{forward.3} parent=1 // pred_region
      _
    $region17: #{forward.3} parent=1 // pred_fallthru
      _
    // Predicated region
    $region18: #{forward.3} parent=1 // pred_check
      _
    $region19: #{forward.3} parent=1 // pred_check_branch
      %34 = sbr.rel (0) target = $region21
    $region20: #{forward.3} parent=1 // pred_region
      %36 = vsyncadd [#allocation5], 0
      %s37 = sshll.u32 %s4, 4
      %s38 = int_to_ptr.hbm [resolvable:$true] %s37
      %s39 = sshll.u32 [#allocation4], 4
      %s40 = int_to_ptr.vmem [resolvable:$true] %s39
      %45 = dma.hbm_to_vmem [thread:$0]  %s38, 10624, %s40, [#allocation5], 128, 128, 8
    $region21: #{forward.3} parent=1 // pred_fallthru
      _
    // Predicated region
    $region22: #{forward.3} parent=1 // pred_check
      _
    $region23: #{forward.3} parent=1 // pred_check_branch
      %47 = sbr.rel (0) target = $region25
    $region24: #{forward.3} parent=1 // pred_region
      %49 = vsyncadd [#allocation5], 0
      %s50 = sshll.u32 %s5, 4
      %s51 = int_to_ptr.hbm [resolvable:$true] %s50
      %s52 = sshll.u32 [#allocation6], 4
      %s53 = int_to_ptr.vmem [resolvable:$true] %s52
      %58 = dma.hbm_to_vmem [thread:$0]  %s51, 1792, %s53, [#allocation5], 128, 128, 8
    $region25: #{forward.3} parent=1 // pred_fallthru
      _
    // Predicated region
    $region26: #{forward.3} parent=1 // pred_check
      _
    $region27: #{forward.3} parent=1 // pred_check_branch
      %60 = sbr.rel (0) target = $region29
    $region28: #{forward.3} parent=1 // pred_region
      _
    $region29: #{forward.3} parent=1 // pred_fallthru
      _
    // Predicated region
    $region30: #{forward.3} parent=1 // pred_check
      _
    $region31: #{forward.3} parent=1 // pred_check_branch
      %62 = sbr.rel (0) target = $region33
    $region32: #{forward.3} parent=1 // pred_region
      %64 = dma.done [#allocation3], 4096
    $region33: #{forward.3} parent=1 // pred_fallthru
      _
    // Predicated region
    $region34: #{forward.3} parent=1 // pred_check
      _
    $region35: #{forward.3} parent=1 // pred_check_branch
      %66 = sbr.rel (0) target = $region37
    $region36: #{forward.3} parent=1 // pred_region
      %68 = dma.done [#allocation5], 10624
    $region37: #{forward.3} parent=1 // pred_fallthru
      _
    // Predicated region
    $region38: #{forward.3} parent=1 // pred_check
      _
    $region39: #{forward.3} parent=1 // pred_check_branch
      %70 = sbr.rel (0) target = $region41
    $region40: #{forward.3} parent=1 // pred_region
      %72 = dma.done [#allocation5], 1792
    $region41: #{forward.3} parent=1 // pred_fallthru
      _
    %v73 = vld [vmem:[%s0] sm:$0x1]
    %v74 = vld [vmem:[#allocation2] sm:$0xff]
    %v75 = vld [vmem:[#allocation2 + $0x8] sm:$0xff]
    %v76 = vld [vmem:[#allocation2 + $0x10] sm:$0xff]
    %v77 = vld [vmem:[#allocation2 + $0x18] sm:$0xff]
    %v78 = vld [vmem:[#allocation2 + $0x20] sm:$0xff]
    %v79 = vld [vmem:[#allocation2 + $0x28] sm:$0xff]
    %v80 = vld [vmem:[#allocation2 + $0x30] sm:$0xff]
    %v81 = vld [vmem:[#allocation2 + $0x38] sm:$0xff]
    %v82 = vld [vmem:[#allocation2 + $0x40] sm:$0xff]
    %v83 = vld [vmem:[#allocation2 + $0x48] sm:$0xff]
    %v84 = vld [vmem:[#allocation2 + $0x50] sm:$0xff]
    %v85 = vld [vmem:[#allocation2 + $0x58] sm:$0xff]
    %v86 = vld [vmem:[#allocation2 + $0x60] sm:$0xff]
    %v87 = vld [vmem:[#allocation2 + $0x68] sm:$0xff]
    %v88 = vld [vmem:[#allocation2 + $0x70] sm:$0xff]
    %v89 = vld [vmem:[#allocation2 + $0x78] sm:$0xff]
    %v90 = vld [vmem:[#allocation2 + $0x80] sm:$0xff]
    %v91 = vld [vmem:[#allocation2 + $0x88] sm:$0xff]
    %v92 = vld [vmem:[#allocation2 + $0x90] sm:$0xff]
    %v93 = vld [vmem:[#allocation2 + $0x98] sm:$0xff]
    %v94 = vld [vmem:[#allocation2 + $0xa0] sm:$0xff]
    %v95 = vld [vmem:[#allocation2 + $0xa8] sm:$0xff]
    %v96 = vld [vmem:[#allocation2 + $0xb0] sm:$0xff]
    %v97 = vld [vmem:[#allocation2 + $0xb8] sm:$0xff]
    %v98 = vld [vmem:[#allocation2 + $0xc0] sm:$0xff]
    %v99 = vld [vmem:[#allocation2 + $0xc8] sm:$0xff]
    %v100 = vld [vmem:[#allocation2 + $0xd0] sm:$0xff]
    %v101 = vld [vmem:[#allocation2 + $0xd8] sm:$0xff]
    %v102 = vld [vmem:[#allocation2 + $0xe0] sm:$0xff]
    %v103 = vld [vmem:[#allocation2 + $0xe8] sm:$0xff]
    %v104 = vld [vmem:[#allocation2 + $0xf0] sm:$0xff]
    %v105 = vld [vmem:[#allocation2 + $0xf8] sm:$0xff]
    %v106 = vld [vmem:[%s3] sm:$0x3]
    %v108 = vperm.slane %v106, 0
    %v109 = vperm.slane %v106, 1
    %112 = vmatpush.msra.mxu0 %v104
    %113 = vmatpush.msra.mxu0 %v102
    %114 = vmatpush.msra.mxu0 %v100
    %115 = vmatpush.msra.mxu0 %v98
    %116 = vmatpush.msra.mxu0 %v96
    %117 = vmatpush.msra.mxu0 %v94
    %118 = vmatpush.msra.mxu0 %v92
    %119 = vmatpush.msra.mxu0 %v90
    %120 = vmatpush.msra.mxu0 %v88
    %121 = vmatpush.msra.mxu0 %v86
    %122 = vmatpush.msra.mxu0 %v84
    %123 = vmatpush.msra.mxu0 %v82
    %124 = vmatpush.msra.mxu0 %v80
    %125 = vmatpush.msra.mxu0 %v78
    %126 = vmatpush.msra.mxu0 %v76
    %127 = vmatpush.msra.mxu0 %v74
    %128 = vmatmul.f32.gmra.mxu0 %v73
    %v129 = vpop.f32.mrf.mxu0
    %v130 = vadd.f32 %v108, %v129
    %131 = vdwg.mxu0
    %132 = vmatpush.msra.mxu0 %v105
    %133 = vmatpush.msra.mxu0 %v103
    %134 = vmatpush.msra.mxu0 %v101
    %135 = vmatpush.msra.mxu0 %v99
    %136 = vmatpush.msra.mxu0 %v97
    %137 = vmatpush.msra.mxu0 %v95
    %138 = vmatpush.msra.mxu0 %v93
    %139 = vmatpush.msra.mxu0 %v91
    %140 = vmatpush.msra.mxu0 %v89
    %141 = vmatpush.msra.mxu0 %v87
    %142 = vmatpush.msra.mxu0 %v85
    %143 = vmatpush.msra.mxu0 %v83
    %144 = vmatpush.msra.mxu0 %v81
    %145 = vmatpush.msra.mxu0 %v79
    %146 = vmatpush.msra.mxu0 %v77
    %147 = vmatpush.msra.mxu0 %v75
    %148 = vmatmul.f32.gmra.mxu0 %v73
    %v149 = vpop.f32.mrf.mxu0
    %v150 = vadd.f32 %v109, %v149
    %151 = vdwg.mxu0
    %v152 = vmul.f32 %v130, 0.5
    %v153 = vmul.f32 %v150, 0.5
    %v154 = vmul.f32 %v130, 0.70710677
    %v155 = vmul.f32 %v150, 0.70710677
    %v156 = vand.u32 2147483647, %v154
    %v157 = vand.u32 2147483647, %v155
    %v158 = vmul.f32 %v156, 0.3275911
    %v159 = vmul.f32 %v157, 0.3275911
    %v160 = vadd.f32 %v158, 1.0
    %v161 = vadd.f32 %v159, 1.0
    %v162 = vrcp.pop %v160
    %v163 = vmul.f32 %v160, %v162
    %v164 = vsub.f32 1.0, %v163
    %v165 = vmul.f32 %v162, %v164
    %v166 = vadd.f32 %v162, %v165
    %vm167 = vweird.f32 %v160
    %vm168 = vweird.f32 %v162
    %vm169 = vmor %vm167, %vm168
    %v170 = vsel %vm169, %v162, %v166
    %v171 = vand.u32 2147483647, %v160
    %vm172 = vcmp.eq.f32.partialorder %v171, 8.507059e+37
    %v173 = vand.u32 %v160, 2147483648
    %v174 = vor.u32 1.1754944e-38, %v173
    %v175 = vsel %vm172, %v174, %v170
    %v176 = vmul.f32 1.0, %v175
    %v177 = vrcp.pop %v161
    %v178 = vmul.f32 %v161, %v177
    %v179 = vsub.f32 1.0, %v178
    %v180 = vmul.f32 %v177, %v179
    %v181 = vadd.f32 %v177, %v180
    %vm182 = vweird.f32 %v161
    %vm183 = vweird.f32 %v177
    %vm184 = vmor %vm182, %vm183
    %v185 = vsel %vm184, %v177, %v181
    %v186 = vand.u32 2147483647, %v161
    %vm187 = vcmp.eq.f32.partialorder %v186, 8.507059e+37
    %v188 = vand.u32 %v161, 2147483648
    %v189 = vor.u32 1.1754944e-38, %v188
    %v190 = vsel %vm187, %v189, %v185
    %v191 = vmul.f32 1.0, %v190
    %v192 = vmul.f32 %v176, 1.0614054
    %v193 = vmul.f32 %v191, 1.0614054
    %v194 = vadd.f32 %v192, -1.4531521
    %v195 = vadd.f32 %v193, -1.4531521
    %v196 = vmul.f32 %v176, %v194
    %v197 = vmul.f32 %v191, %v195
    %v198 = vadd.f32 %v196, 1.4214138
    %v199 = vadd.f32 %v197, 1.4214138
    %v200 = vmul.f32 %v176, %v198
    %v201 = vmul.f32 %v191, %v199
    %v202 = vadd.f32 %v200, -0.28449672
    %v203 = vadd.f32 %v201, -0.28449672
    %v204 = vmul.f32 %v176, %v202
    %v205 = vmul.f32 %v191, %v203
    %v206 = vadd.f32 %v204, 0.2548296
    %v207 = vadd.f32 %v205, 0.2548296
    %v208 = vmul.f32 %v176, %v206
    %v209 = vmul.f32 %v191, %v207
    %v210 = vsub.f32 0.0, %v156
    %v211 = vsub.f32 0.0, %v157
    %v212 = vmul.f32 %v210, %v156
    %v213 = vmul.f32 %v211, %v157
    %v214 = vmul.f32 %v212, 1.442695
    %v215 = vpow.pop %v214
    %v216 = vmul.f32 %v213, 1.442695
    %v217 = vpow.pop %v216
    %v218 = vmul.f32 %v208, %v215
    %v219 = vmul.f32 %v209, %v217
    %v220 = vsub.f32 1.0, %v218
    %v221 = vsub.f32 1.0, %v219
    %vm222 = vcmp.ge.f32.partialorder %v154, 0.0
    %vm223 = vcmp.ge.f32.partialorder %v155, 0.0
    %v224 = vsub.f32 0.0, %v220
    %v225 = vsub.f32 0.0, %v221
    %v226 = vsel %vm222, %v220, %v224
    %v227 = vsel %vm223, %v221, %v225
    %v228 = vadd.f32 %v226, 1.0
    %v229 = vadd.f32 %v227, 1.0
    %v230 = vmul.f32 %v152, %v228
    %v231 = vmul.f32 %v153, %v229
    %232 = vst [vmem:[%s7] sm:$0x1] %v230
    %233 = vst [vmem:[%s7 + $0x5] sm:$0x1] %v231
    %v234 = vld [vmem:[%s1] sm:$0xff]
    %v235 = vld [vmem:[%s1 + $0x8] sm:$0xff]
    %v236 = vld [vmem:[#allocation4] sm:$0xff]
    %v237 = vld [vmem:[#allocation6] sm:$0xff]
    %v238 = vld [vmem:[#allocation6 + $0x8] sm:$0xff]
    %vm239 = vcmask 130048
    %v241 = vsel %vm239, %v237, 0
    %v244 = vsel %vm239, %v238, 0
    %246 = vmatpush.msra.mxu0 0.0
    %247 = vmatpush.msra.mxu0 0.0
    %248 = vmatpush.msra.mxu0 0.0
    %249 = vmatpush.msra.mxu0 0.0
    %250 = vmatpush.msra.mxu0 0.0
    %251 = vmatpush.msra.mxu0 0.0
    %252 = vmatpush.msra.mxu0 0.0
    %253 = vmatpush.msra.mxu0 0.0
    %254 = vmatpush.msra.mxu0 0.0
    %255 = vmatpush.msra.mxu0 0.0
    %256 = vmatpush.msra.mxu0 0.0
    %257 = vmatpush.msra.mxu0 0.0
    %258 = vmatpush.msra.mxu0 0.0
    %259 = vmatpush.msra.mxu0 0.0
    %260 = vmatpush.msra.mxu0 %v235
    %261 = vmatpush.msra.mxu0 %v234
    %262 = vmatmul.f32.gmra.mxu0 %v241
    %v263 = vpop.f32.mrf.mxu0
    %v264 = vadd.f32 0.0, %v263
    %265 = vmatmul.f32.gmra.mxu0 %v244
    %v266 = vpop.f32.mrf.mxu0
    %v267 = vadd.f32 0.0, %v266
    %268 = vdwg.mxu0
    %v269 = vld [vmem:[#allocation4 + $0x8] sm:$0xff]
    %v270 = vld [vmem:[#allocation6 + $0x10] sm:$0xff]
    %v271 = vld [vmem:[#allocation6 + $0x18] sm:$0xff]
    %v273 = vsel %vm239, %v270, 0
    %v276 = vsel %vm239, %v271, 0
    %278 = vmatpush.msra.mxu0 0.0
    %279 = vmatpush.msra.mxu0 0.0
    %280 = vmatpush.msra.mxu0 0.0
    %281 = vmatpush.msra.mxu0 0.0
    %282 = vmatpush.msra.mxu0 0.0
    %283 = vmatpush.msra.mxu0 0.0
    %284 = vmatpush.msra.mxu0 0.0
    %285 = vmatpush.msra.mxu0 0.0
    %286 = vmatpush.msra.mxu0 0.0
    %287 = vmatpush.msra.mxu0 0.0
    %288 = vmatpush.msra.mxu0 0.0
    %289 = vmatpush.msra.mxu0 0.0
    %290 = vmatpush.msra.mxu0 0.0
    %291 = vmatpush.msra.mxu0 0.0
    %292 = vmatpush.msra.mxu0 %v235
    %293 = vmatpush.msra.mxu0 %v234
    %294 = vmatmul.f32.gmra.mxu0 %v273
    %v295 = vpop.f32.mrf.mxu0
    %v296 = vadd.f32 0.0, %v295
    %297 = vmatmul.f32.gmra.mxu0 %v276
    %v298 = vpop.f32.mrf.mxu0
    %v299 = vadd.f32 0.0, %v298
    %300 = vdwg.mxu0
    %vm301 = vcmask 64512
    %v303 = vsel %vm301, %v296, 0
    %v306 = vsel %vm301, %v299, 0
    %308 = vmatpush.msra.mxu0 0.0
    %309 = vmatpush.msra.mxu0 0.0
    %310 = vmatpush.msra.mxu0 0.0
    %311 = vmatpush.msra.mxu0 0.0
    %312 = vmatpush.msra.mxu0 0.0
    %313 = vmatpush.msra.mxu0 0.0
    %314 = vmatpush.msra.mxu0 0.0
    %315 = vmatpush.msra.mxu0 0.0
    %316 = vmatpush.msra.mxu0 0.0
    %317 = vmatpush.msra.mxu0 0.0
    %318 = vmatpush.msra.mxu0 0.0
    %319 = vmatpush.msra.mxu0 0.0
    %320 = vmatpush.msra.mxu0 0.0
    %321 = vmatpush.msra.mxu0 0.0
    %322 = vmatpush.msra.mxu0 0.0
    %323 = vmatpush.msra.mxu0 %v269
    %324 = vmatmul.f32.gmra.mxu0 %v303
    %v325 = vpop.f32.mrf.mxu0
    %v326 = vadd.f32 0.0, %v325
    %327 = vmatmul.f32.gmra.mxu0 %v306
    %v328 = vpop.f32.mrf.mxu0
    %v329 = vadd.f32 0.0, %v328
    %330 = vdwg.mxu0
    %v332 = vsel %vm301, %v264, 0
    %v335 = vsel %vm301, %v267, 0
    %337 = vmatpush.msra.mxu0 0.0
    %338 = vmatpush.msra.mxu0 0.0
    %339 = vmatpush.msra.mxu0 0.0
    %340 = vmatpush.msra.mxu0 0.0
    %341 = vmatpush.msra.mxu0 0.0
    %342 = vmatpush.msra.mxu0 0.0
    %343 = vmatpush.msra.mxu0 0.0
    %344 = vmatpush.msra.mxu0 0.0
    %345 = vmatpush.msra.mxu0 0.0
    %346 = vmatpush.msra.mxu0 0.0
    %347 = vmatpush.msra.mxu0 0.0
    %348 = vmatpush.msra.mxu0 0.0
    %349 = vmatpush.msra.mxu0 0.0
    %350 = vmatpush.msra.mxu0 0.0
    %351 = vmatpush.msra.mxu0 0.0
    %352 = vmatpush.msra.mxu0 %v236
    %353 = vmatmul.f32.gmra.mxu0 %v332
    %v354 = vpop.f32.mrf.mxu0
    %v355 = vadd.f32 %v326, %v354
    %356 = vmatmul.f32.gmra.mxu0 %v335
    %v357 = vpop.f32.mrf.mxu0
    %v358 = vadd.f32 %v329, %v357
    %359 = vdwg.mxu0
    %v360 = vld [vmem:[#allocation4 + $0x10] sm:$0xff]
    %v361 = vld [vmem:[#allocation6 + $0x20] sm:$0xff]
    %v362 = vld [vmem:[#allocation6 + $0x28] sm:$0xff]
    %v364 = vsel %vm239, %v361, 0
    %v367 = vsel %vm239, %v362, 0
    %369 = vmatpush.msra.mxu0 0.0
    %370 = vmatpush.msra.mxu0 0.0
    %371 = vmatpush.msra.mxu0 0.0
    %372 = vmatpush.msra.mxu0 0.0
    %373 = vmatpush.msra.mxu0 0.0
    %374 = vmatpush.msra.mxu0 0.0
    %375 = vmatpush.msra.mxu0 0.0
    %376 = vmatpush.msra.mxu0 0.0
    %377 = vmatpush.msra.mxu0 0.0
    %378 = vmatpush.msra.mxu0 0.0
    %379 = vmatpush.msra.mxu0 0.0
    %380 = vmatpush.msra.mxu0 0.0
    %381 = vmatpush.msra.mxu0 0.0
    %382 = vmatpush.msra.mxu0 0.0
    %383 = vmatpush.msra.mxu0 %v235
    %384 = vmatpush.msra.mxu0 %v234
    %385 = vmatmul.f32.gmra.mxu0 %v364
    %v386 = vpop.f32.mrf.mxu0
    %v387 = vadd.f32 0.0, %v386
    %388 = vmatmul.f32.gmra.mxu0 %v367
    %v389 = vpop.f32.mrf.mxu0
    %v390 = vadd.f32 0.0, %v389
    %391 = vdwg.mxu0
    %v393 = vsel %vm301, %v387, 0
    %v396 = vsel %vm301, %v390, 0
    %398 = vmatpush.msra.mxu0 0.0
    %399 = vmatpush.msra.mxu0 0.0
    %400 = vmatpush.msra.mxu0 0.0
    %401 = vmatpush.msra.mxu0 0.0
    %402 = vmatpush.msra.mxu0 0.0
    %403 = vmatpush.msra.mxu0 0.0
    %404 = vmatpush.msra.mxu0 0.0
    %405 = vmatpush.msra.mxu0 0.0
    %406 = vmatpush.msra.mxu0 0.0
    %407 = vmatpush.msra.mxu0 0.0
    %408 = vmatpush.msra.mxu0 0.0
    %409 = vmatpush.msra.mxu0 0.0
    %410 = vmatpush.msra.mxu0 0.0
    %411 = vmatpush.msra.mxu0 0.0
    %412 = vmatpush.msra.mxu0 0.0
    %413 = vmatpush.msra.mxu0 %v360
    %414 = vmatmul.f32.gmra.mxu0 %v393
    %v415 = vpop.f32.mrf.mxu0
    %v416 = vadd.f32 0.0, %v415
    %417 = vmatmul.f32.gmra.mxu0 %v396
    %v418 = vpop.f32.mrf.mxu0
    %v419 = vadd.f32 0.0, %v418
    %420 = vdwg.mxu0
    %v421 = vadd.f32 %v355, %v416
    %v422 = vadd.f32 %v358, %v419
    %v423 = vld [vmem:[%s6] sm:$0x1]
    %v424 = vperm.slane %v423, 0
    %v425 = vadd.f32 %v421, %v424
    %v426 = vadd.f32 %v422, %v424
    %v427 = vld [vmem:[%s6 + $0x1] sm:$0x1]
    %vm428 = vcmp.ge.f32.partialorder %v425, 0.0
    %vm429 = vcmp.ge.f32.partialorder %v426, 0.0
    %v430 = vperm.slane %v427, 0
    %v431 = vmul.f32 %v430, %v425
    %v432 = vmul.f32 %v430, %v426
    %v433 = vsel %vm428, %v425, %v431
    %v434 = vsel %vm429, %v426, %v432
    %v435 = vld [vmem:[#allocation4 + $0x18] sm:$0xff]
    %v436 = vld [vmem:[#allocation4 + $0x20] sm:$0xff]
    %v437 = vld [vmem:[#allocation4 + $0x28] sm:$0xff]
    %v438 = vld [vmem:[#allocation4 + $0x30] sm:$0xff]
    %v439 = vld [vmem:[#allocation4 + $0x38] sm:$0xff]
    %v440 = vld [vmem:[#allocation4 + $0x40] sm:$0xff]
    %v441 = vld [vmem:[#allocation4 + $0x48] sm:$0xff]
    %v442 = vld [vmem:[#allocation4 + $0x50] sm:$0xff]
    %v443 = vld [vmem:[#allocation6 + $0x30] sm:$0xff]
    %v445 = vsel %vm239, %v443, 0
    %447 = vmatpush.msra.mxu0 0.0
    %448 = vmatpush.msra.mxu0 0.0
    %449 = vmatpush.msra.mxu0 0.0
    %450 = vmatpush.msra.mxu0 0.0
    %451 = vmatpush.msra.mxu0 0.0
    %452 = vmatpush.msra.mxu0 0.0
    %453 = vmatpush.msra.mxu0 0.0
    %454 = vmatpush.msra.mxu0 0.0
    %455 = vmatpush.msra.mxu0 0.0
    %456 = vmatpush.msra.mxu0 0.0
    %457 = vmatpush.msra.mxu0 0.0
    %458 = vmatpush.msra.mxu0 0.0
    %459 = vmatpush.msra.mxu0 0.0
    %460 = vmatpush.msra.mxu0 0.0
    %461 = vmatpush.msra.mxu0 %v434
    %462 = vmatpush.msra.mxu0 %v433
    %463 = vmatmul.f32.gmra.mxu0 %v445
    %v464 = vpop.f32.mrf.mxu0
    %v465 = vadd.f32 0.0, %v464
    %466 = vdwg.mxu0
    %v467 = vld [vmem:[#allocation4 + $0x58] sm:$0xff]
    %v468 = vld [vmem:[#allocation4 + $0x60] sm:$0xff]
    %v469 = vld [vmem:[#allocation4 + $0x68] sm:$0xff]
    %v470 = vld [vmem:[#allocation4 + $0x70] sm:$0xff]
    %v471 = vld [vmem:[#allocation4 + $0x78] sm:$0xff]
    %v472 = vld [vmem:[#allocation4 + $0x80] sm:$0xff]
    %v473 = vld [vmem:[#allocation4 + $0x88] sm:$0xff]
    %v474 = vld [vmem:[#allocation4 + $0x90] sm:$0xff]
    %v475 = vld [vmem:[#allocation6 + $0x38] sm:$0xff]
    %v477 = vsel %vm239, %v475, 0
    %479 = vmatpush.msra.mxu0 0.0
    %480 = vmatpush.msra.mxu0 0.0
    %481 = vmatpush.msra.mxu0 0.0
    %482 = vmatpush.msra.mxu0 0.0
    %483 = vmatpush.msra.mxu0 0.0
    %484 = vmatpush.msra.mxu0 0.0
    %485 = vmatpush.msra.mxu0 0.0
    %486 = vmatpush.msra.mxu0 0.0
    %487 = vmatpush.msra.mxu0 0.0
    %488 = vmatpush.msra.mxu0 0.0
    %489 = vmatpush.msra.mxu0 0.0
    %490 = vmatpush.msra.mxu0 0.0
    %491 = vmatpush.msra.mxu0 0.0
    %492 = vmatpush.msra.mxu0 0.0
    %493 = vmatpush.msra.mxu0 %v434
    %494 = vmatpush.msra.mxu0 %v433
    %495 = vmatmul.f32.gmra.mxu0 %v477
    %v496 = vpop.f32.mrf.mxu0
    %v497 = vadd.f32 0.0, %v496
    %498 = vdwg.mxu0
    %vm499 = vcmask 523264
    %v501 = vsel %vm499, %v497, 0
    %503 = vmatpush.msra.mxu0 0.0
    %504 = vmatpush.msra.mxu0 0.0
    %505 = vmatpush.msra.mxu0 0.0
    %506 = vmatpush.msra.mxu0 0.0
    %507 = vmatpush.msra.mxu0 0.0
    %508 = vmatpush.msra.mxu0 0.0
    %509 = vmatpush.msra.mxu0 0.0
    %510 = vmatpush.msra.mxu0 0.0
    %511 = vmatpush.msra.mxu0 %v474
    %512 = vmatpush.msra.mxu0 %v473
    %513 = vmatpush.msra.mxu0 %v472
    %514 = vmatpush.msra.mxu0 %v471
    %515 = vmatpush.msra.mxu0 %v470
    %516 = vmatpush.msra.mxu0 %v469
    %517 = vmatpush.msra.mxu0 %v468
    %518 = vmatpush.msra.mxu0 %v467
    %519 = vmatmul.f32.gmra.mxu0 %v501
    %v520 = vpop.f32.mrf.mxu0
    %v521 = vadd.f32 0.0, %v520
    %522 = vdwg.mxu0
    %v524 = vsel %vm499, %v465, 0
    %526 = vmatpush.msra.mxu0 0.0
    %527 = vmatpush.msra.mxu0 0.0
    %528 = vmatpush.msra.mxu0 0.0
    %529 = vmatpush.msra.mxu0 0.0
    %530 = vmatpush.msra.mxu0 0.0
    %531 = vmatpush.msra.mxu0 0.0
    %532 = vmatpush.msra.mxu0 0.0
    %533 = vmatpush.msra.mxu0 0.0
    %534 = vmatpush.msra.mxu0 %v442
    %535 = vmatpush.msra.mxu0 %v441
    %536 = vmatpush.msra.mxu0 %v440
    %537 = vmatpush.msra.mxu0 %v439
    %538 = vmatpush.msra.mxu0 %v438
    %539 = vmatpush.msra.mxu0 %v437
    %540 = vmatpush.msra.mxu0 %v436
    %541 = vmatpush.msra.mxu0 %v435
    %542 = vmatmul.f32.gmra.mxu0 %v524
    %v543 = vpop.f32.mrf.mxu0
    %v544 = vadd.f32 %v521, %v543
    %545 = vdwg.mxu0
    %v546 = vld [vmem:[#allocation4 + $0x98] sm:$0xff]
    %v547 = vld [vmem:[#allocation4 + $0xa0] sm:$0xff]
    %v548 = vld [vmem:[#allocation4 + $0xa8] sm:$0xff]
    %v549 = vld [vmem:[#allocation4 + $0xb0] sm:$0xff]
    %v550 = vld [vmem:[#allocation4 + $0xb8] sm:$0xff]
    %v551 = vld [vmem:[#allocation4 + $0xc0] sm:$0xff]
    %v552 = vld [vmem:[#allocation4 + $0xc8] sm:$0xff]
    %v553 = vld [vmem:[#allocation4 + $0xd0] sm:$0xff]
    %v554 = vld [vmem:[#allocation6 + $0x40] sm:$0xff]
    %v556 = vsel %vm239, %v554, 0
    %558 = vmatpush.msra.mxu0 0.0
    %559 = vmatpush.msra.mxu0 0.0
    %560 = vmatpush.msra.mxu0 0.0
    %561 = vmatpush.msra.mxu0 0.0
    %562 = vmatpush.msra.mxu0 0.0
    %563 = vmatpush.msra.mxu0 0.0
    %564 = vmatpush.msra.mxu0 0.0
    %565 = vmatpush.msra.mxu0 0.0
    %566 = vmatpush.msra.mxu0 0.0
    %567 = vmatpush.msra.mxu0 0.0
    %568 = vmatpush.msra.mxu0 0.0
    %569 = vmatpush.msra.mxu0 0.0
    %570 = vmatpush.msra.mxu0 0.0
    %571 = vmatpush.msra.mxu0 0.0
    %572 = vmatpush.msra.mxu0 %v434
    %573 = vmatpush.msra.mxu0 %v433
    %574 = vmatmul.f32.gmra.mxu0 %v556
    %v575 = vpop.f32.mrf.mxu0
    %v576 = vadd.f32 0.0, %v575
    %577 = vdwg.mxu0
    %v579 = vsel %vm499, %v576, 0
    %581 = vmatpush.msra.mxu0 0.0
    %582 = vmatpush.msra.mxu0 0.0
    %583 = vmatpush.msra.mxu0 0.0
    %584 = vmatpush.msra.mxu0 0.0
    %585 = vmatpush.msra.mxu0 0.0
    %586 = vmatpush.msra.mxu0 0.0
    %587 = vmatpush.msra.mxu0 0.0
    %588 = vmatpush.msra.mxu0 0.0
    %589 = vmatpush.msra.mxu0 %v553
    %590 = vmatpush.msra.mxu0 %v552
    %591 = vmatpush.msra.mxu0 %v551
    %592 = vmatpush.msra.mxu0 %v550
    %593 = vmatpush.msra.mxu0 %v549
    %594 = vmatpush.msra.mxu0 %v548
    %595 = vmatpush.msra.mxu0 %v547
    %596 = vmatpush.msra.mxu0 %v546
    %597 = vmatmul.f32.gmra.mxu0 %v579
    %v598 = vpop.f32.mrf.mxu0
    %v599 = vadd.f32 0.0, %v598
    %600 = vdwg.mxu0
    %v601 = vadd.f32 %v544, %v599
    %v602 = vld [vmem:[#allocation4 + $0xd8] sm:$0xff]
    %v603 = vld [vmem:[#allocation4 + $0xe0] sm:$0xff]
    %v604 = vld [vmem:[#allocation4 + $0xe8] sm:$0xff]
    %v605 = vld [vmem:[#allocation4 + $0xf0] sm:$0xff]
    %v606 = vld [vmem:[#allocation4 + $0xf8] sm:$0xff]
    %v607 = vld [vmem:[#allocation4 + $0x100] sm:$0xff]
    %v608 = vld [vmem:[#allocation4 + $0x108] sm:$0xff]
    %v609 = vld [vmem:[#allocation4 + $0x110] sm:$0xff]
    %v610 = vld [vmem:[#allocation6 + $0x48] sm:$0xff]
    %v612 = vsel %vm239, %v610, 0
    %614 = vmatpush.msra.mxu0 0.0
    %615 = vmatpush.msra.mxu0 0.0
    %616 = vmatpush.msra.mxu0 0.0
    %617 = vmatpush.msra.mxu0 0.0
    %618 = vmatpush.msra.mxu0 0.0
    %619 = vmatpush.msra.mxu0 0.0
    %620 = vmatpush.msra.mxu0 0.0
    %621 = vmatpush.msra.mxu0 0.0
    %622 = vmatpush.msra.mxu0 0.0
    %623 = vmatpush.msra.mxu0 0.0
    %624 = vmatpush.msra.mxu0 0.0
    %625 = vmatpush.msra.mxu0 0.0
    %626 = vmatpush.msra.mxu0 0.0
    %627 = vmatpush.msra.mxu0 0.0
    %628 = vmatpush.msra.mxu0 %v434
    %629 = vmatpush.msra.mxu0 %v433
    %630 = vmatmul.f32.gmra.mxu0 %v612
    %v631 = vpop.f32.mrf.mxu0
    %v632 = vadd.f32 0.0, %v631
    %633 = vdwg.mxu0
    %v635 = vsel %vm499, %v632, 0
    %637 = vmatpush.msra.mxu0 0.0
    %638 = vmatpush.msra.mxu0 0.0
    %639 = vmatpush.msra.mxu0 0.0
    %640 = vmatpush.msra.mxu0 0.0
    %641 = vmatpush.msra.mxu0 0.0
    %642 = vmatpush.msra.mxu0 0.0
    %643 = vmatpush.msra.mxu0 0.0
    %644 = vmatpush.msra.mxu0 0.0
    %645 = vmatpush.msra.mxu0 %v609
    %646 = vmatpush.msra.mxu0 %v608
    %647 = vmatpush.msra.mxu0 %v607
    %648 = vmatpush.msra.mxu0 %v606
    %649 = vmatpush.msra.mxu0 %v605
    %650 = vmatpush.msra.mxu0 %v604
    %651 = vmatpush.msra.mxu0 %v603
    %652 = vmatpush.msra.mxu0 %v602
    %653 = vmatmul.f32.gmra.mxu0 %v635
    %v654 = vpop.f32.mrf.mxu0
    %v655 = vadd.f32 0.0, %v654
    %656 = vdwg.mxu0
    %v657 = vadd.f32 %v601, %v655
    %v658 = vld [vmem:[#allocation4 + $0x118] sm:$0xff]
    %v659 = vld [vmem:[#allocation4 + $0x120] sm:$0xff]
    %v660 = vld [vmem:[#allocation4 + $0x128] sm:$0xff]
    %v661 = vld [vmem:[#allocation4 + $0x130] sm:$0xff]
    %v662 = vld [vmem:[#allocation4 + $0x138] sm:$0xff]
    %v663 = vld [vmem:[#allocation4 + $0x140] sm:$0xff]
    %v664 = vld [vmem:[#allocation4 + $0x148] sm:$0xff]
    %v665 = vld [vmem:[#allocation4 + $0x150] sm:$0xff]
    %v666 = vld [vmem:[#allocation6 + $0x50] sm:$0xff]
    %v668 = vsel %vm239, %v666, 0
    %670 = vmatpush.msra.mxu0 0.0
    %671 = vmatpush.msra.mxu0 0.0
    %672 = vmatpush.msra.mxu0 0.0
    %673 = vmatpush.msra.mxu0 0.0
    %674 = vmatpush.msra.mxu0 0.0
    %675 = vmatpush.msra.mxu0 0.0
    %676 = vmatpush.msra.mxu0 0.0
    %677 = vmatpush.msra.mxu0 0.0
    %678 = vmatpush.msra.mxu0 0.0
    %679 = vmatpush.msra.mxu0 0.0
    %680 = vmatpush.msra.mxu0 0.0
    %681 = vmatpush.msra.mxu0 0.0
    %682 = vmatpush.msra.mxu0 0.0
    %683 = vmatpush.msra.mxu0 0.0
    %684 = vmatpush.msra.mxu0 %v434
    %685 = vmatpush.msra.mxu0 %v433
    %686 = vmatmul.f32.gmra.mxu0 %v668
    %v687 = vpop.f32.mrf.mxu0
    %v688 = vadd.f32 0.0, %v687
    %689 = vdwg.mxu0
    %v691 = vsel %vm499, %v688, 0
    %693 = vmatpush.msra.mxu0 0.0
    %694 = vmatpush.msra.mxu0 0.0
    %695 = vmatpush.msra.mxu0 0.0
    %696 = vmatpush.msra.mxu0 0.0
    %697 = vmatpush.msra.mxu0 0.0
    %698 = vmatpush.msra.mxu0 0.0
    %699 = vmatpush.msra.mxu0 0.0
    %700 = vmatpush.msra.mxu0 0.0
    %701 = vmatpush.msra.mxu0 %v665
    %702 = vmatpush.msra.mxu0 %v664
    %703 = vmatpush.msra.mxu0 %v663
    %704 = vmatpush.msra.mxu0 %v662
    %705 = vmatpush.msra.mxu0 %v661
    %706 = vmatpush.msra.mxu0 %v660
    %707 = vmatpush.msra.mxu0 %v659
    %708 = vmatpush.msra.mxu0 %v658
    %709 = vmatmul.f32.gmra.mxu0 %v691
    %v710 = vpop.f32.mrf.mxu0
    %v711 = vadd.f32 0.0, %v710
    %712 = vdwg.mxu0
    %v713 = vadd.f32 %v657, %v711
    %v714 = vld [vmem:[%s6 + $0x2] sm:$0x1]
    %v715 = vperm.slane %v714, 0
    %v716 = vadd.f32 %v713, %v715
    %v717 = vld [vmem:[%s6 + $0x3] sm:$0x1]
    %vm718 = vcmp.ge.f32.partialorder %v716, 0.0
    %v719 = vperm.slane %v717, 0
    %v720 = vmul.f32 %v719, %v716
    %v721 = vsel %vm718, %v716, %v720
    %v722 = vld [vmem:[#allocation4 + $0x158] sm:$0xff]
    %v723 = vld [vmem:[#allocation4 + $0x160] sm:$0xff]
    %v724 = vld [vmem:[#allocation4 + $0x168] sm:$0xff]
    %v725 = vld [vmem:[#allocation4 + $0x170] sm:$0xff]
    %v726 = vld [vmem:[#allocation4 + $0x178] sm:$0xff]
    %v727 = vld [vmem:[#allocation4 + $0x180] sm:$0xff]
    %v728 = vld [vmem:[#allocation4 + $0x188] sm:$0xff]
    %v729 = vld [vmem:[#allocation4 + $0x190] sm:$0xff]
    %v730 = vld [vmem:[#allocation6 + $0x58] sm:$0xf]
    %v732 = vsel %vm301, %v730, 0
    %734 = vmatpush.msra.mxu0 0.0
    %735 = vmatpush.msra.mxu0 0.0
    %736 = vmatpush.msra.mxu0 0.0
    %737 = vmatpush.msra.mxu0 0.0
    %738 = vmatpush.msra.mxu0 0.0
    %739 = vmatpush.msra.mxu0 0.0
    %740 = vmatpush.msra.mxu0 0.0
    %741 = vmatpush.msra.mxu0 0.0
    %742 = vmatpush.msra.mxu0 0.0
    %743 = vmatpush.msra.mxu0 0.0
    %744 = vmatpush.msra.mxu0 0.0
    %745 = vmatpush.msra.mxu0 0.0
    %746 = vmatpush.msra.mxu0 0.0
    %747 = vmatpush.msra.mxu0 0.0
    %748 = vmatpush.msra.mxu0 0.0
    %749 = vmatpush.msra.mxu0 %v721
    %750 = vmatmul.f32.gmra.mxu0 %v732
    %v751 = vpop.f32.mrf.mxu0
    %v752 = vadd.f32 0.0, %v751
    %753 = vdwg.mxu0
    %v754 = vld [vmem:[#allocation4 + $0x198] sm:$0xff]
    %v755 = vld [vmem:[#allocation4 + $0x1a0] sm:$0xff]
    %v756 = vld [vmem:[#allocation4 + $0x1a8] sm:$0xff]
    %v757 = vld [vmem:[#allocation4 + $0x1b0] sm:$0xff]
    %v758 = vld [vmem:[#allocation4 + $0x1b8] sm:$0xff]
    %v759 = vld [vmem:[#allocation4 + $0x1c0] sm:$0xff]
    %v760 = vld [vmem:[#allocation4 + $0x1c8] sm:$0xff]
    %v761 = vld [vmem:[#allocation4 + $0x1d0] sm:$0xff]
    %v762 = vld [vmem:[#allocation6 + $0x5c] sm:$0xf]
    %v764 = vsel %vm301, %v762, 0
    %766 = vmatpush.msra.mxu0 0.0
    %767 = vmatpush.msra.mxu0 0.0
    %768 = vmatpush.msra.mxu0 0.0
    %769 = vmatpush.msra.mxu0 0.0
    %770 = vmatpush.msra.mxu0 0.0
    %771 = vmatpush.msra.mxu0 0.0
    %772 = vmatpush.msra.mxu0 0.0
    %773 = vmatpush.msra.mxu0 0.0
    %774 = vmatpush.msra.mxu0 0.0
    %775 = vmatpush.msra.mxu0 0.0
    %776 = vmatpush.msra.mxu0 0.0
    %777 = vmatpush.msra.mxu0 0.0
    %778 = vmatpush.msra.mxu0 0.0
    %779 = vmatpush.msra.mxu0 0.0
    %780 = vmatpush.msra.mxu0 0.0
    %781 = vmatpush.msra.mxu0 %v721
    %782 = vmatmul.f32.gmra.mxu0 %v764
    %v783 = vpop.f32.mrf.mxu0
    %v784 = vadd.f32 0.0, %v783
    %785 = vdwg.mxu0
    %v787 = vsel %vm499, %v784, 0
    %789 = vmatpush.msra.mxu0 0.0
    %790 = vmatpush.msra.mxu0 0.0
    %791 = vmatpush.msra.mxu0 0.0
    %792 = vmatpush.msra.mxu0 0.0
    %793 = vmatpush.msra.mxu0 0.0
    %794 = vmatpush.msra.mxu0 0.0
    %795 = vmatpush.msra.mxu0 0.0
    %796 = vmatpush.msra.mxu0 0.0
    %797 = vmatpush.msra.mxu0 %v761
    %798 = vmatpush.msra.mxu0 %v760
    %799 = vmatpush.msra.mxu0 %v759
    %800 = vmatpush.msra.mxu0 %v758
    %801 = vmatpush.msra.mxu0 %v757
    %802 = vmatpush.msra.mxu0 %v756
    %803 = vmatpush.msra.mxu0 %v755
    %804 = vmatpush.msra.mxu0 %v754
    %805 = vmatmul.f32.gmra.mxu0 %v787
    %v806 = vpop.f32.mrf.mxu0
    %v807 = vadd.f32 0.0, %v806
    %808 = vdwg.mxu0
    %v810 = vsel %vm499, %v752, 0
    %812 = vmatpush.msra.mxu0 0.0
    %813 = vmatpush.msra.mxu0 0.0
    %814 = vmatpush.msra.mxu0 0.0
    %815 = vmatpush.msra.mxu0 0.0
    %816 = vmatpush.msra.mxu0 0.0
    %817 = vmatpush.msra.mxu0 0.0
    %818 = vmatpush.msra.mxu0 0.0
    %819 = vmatpush.msra.mxu0 0.0
    %820 = vmatpush.msra.mxu0 %v729
    %821 = vmatpush.msra.mxu0 %v728
    %822 = vmatpush.msra.mxu0 %v727
    %823 = vmatpush.msra.mxu0 %v726
    %824 = vmatpush.msra.mxu0 %v725
    %825 = vmatpush.msra.mxu0 %v724
    %826 = vmatpush.msra.mxu0 %v723
    %827 = vmatpush.msra.mxu0 %v722
    %828 = vmatmul.f32.gmra.mxu0 %v810
    %v829 = vpop.f32.mrf.mxu0
    %v830 = vadd.f32 %v807, %v829
    %831 = vdwg.mxu0
    %v832 = vld [vmem:[#allocation4 + $0x1d8] sm:$0xff]
    %v833 = vld [vmem:[#allocation4 + $0x1e0] sm:$0xff]
    %v834 = vld [vmem:[#allocation4 + $0x1e8] sm:$0xff]
    %v835 = vld [vmem:[#allocation4 + $0x1f0] sm:$0xff]
    %v836 = vld [vmem:[#allocation4 + $0x1f8] sm:$0xff]
    %v837 = vld [vmem:[#allocation4 + $0x200] sm:$0xff]
    %v838 = vld [vmem:[#allocation4 + $0x208] sm:$0xff]
    %v839 = vld [vmem:[#allocation4 + $0x210] sm:$0xff]
    %v840 = vld [vmem:[#allocation6 + $0x60] sm:$0xf]
    %v842 = vsel %vm301, %v840, 0
    %844 = vmatpush.msra.mxu0 0.0
    %845 = vmatpush.msra.mxu0 0.0
    %846 = vmatpush.msra.mxu0 0.0
    %847 = vmatpush.msra.mxu0 0.0
    %848 = vmatpush.msra.mxu0 0.0
    %849 = vmatpush.msra.mxu0 0.0
    %850 = vmatpush.msra.mxu0 0.0
    %851 = vmatpush.msra.mxu0 0.0
    %852 = vmatpush.msra.mxu0 0.0
    %853 = vmatpush.msra.mxu0 0.0
    %854 = vmatpush.msra.mxu0 0.0
    %855 = vmatpush.msra.mxu0 0.0
    %856 = vmatpush.msra.mxu0 0.0
    %857 = vmatpush.msra.mxu0 0.0
    %858 = vmatpush.msra.mxu0 0.0
    %859 = vmatpush.msra.mxu0 %v721
    %860 = vmatmul.f32.gmra.mxu0 %v842
    %v861 = vpop.f32.mrf.mxu0
    %v862 = vadd.f32 0.0, %v861
    %863 = vdwg.mxu0
    %v865 = vsel %vm499, %v862, 0
    %867 = vmatpush.msra.mxu0 0.0
    %868 = vmatpush.msra.mxu0 0.0
    %869 = vmatpush.msra.mxu0 0.0
    %870 = vmatpush.msra.mxu0 0.0
    %871 = vmatpush.msra.mxu0 0.0
    %872 = vmatpush.msra.mxu0 0.0
    %873 = vmatpush.msra.mxu0 0.0
    %874 = vmatpush.msra.mxu0 0.0
    %875 = vmatpush.msra.mxu0 %v839
    %876 = vmatpush.msra.mxu0 %v838
    %877 = vmatpush.msra.mxu0 %v837
    %878 = vmatpush.msra.mxu0 %v836
    %879 = vmatpush.msra.mxu0 %v835
    %880 = vmatpush.msra.mxu0 %v834
    %881 = vmatpush.msra.mxu0 %v833
    %882 = vmatpush.msra.mxu0 %v832
    %883 = vmatmul.f32.gmra.mxu0 %v865
    %v884 = vpop.f32.mrf.mxu0
    %v885 = vadd.f32 0.0, %v884
    %886 = vdwg.mxu0
    %v887 = vadd.f32 %v830, %v885
    %v888 = vld [vmem:[#allocation4 + $0x218] sm:$0xff]
    %v889 = vld [vmem:[#allocation4 + $0x220] sm:$0xff]
    %v890 = vld [vmem:[#allocation4 + $0x228] sm:$0xff]
    %v891 = vld [vmem:[#allocation4 + $0x230] sm:$0xff]
    %v892 = vld [vmem:[#allocation4 + $0x238] sm:$0xff]
    %v893 = vld [vmem:[#allocation4 + $0x240] sm:$0xff]
    %v894 = vld [vmem:[#allocation4 + $0x248] sm:$0xff]
    %v895 = vld [vmem:[#allocation4 + $0x250] sm:$0xff]
    %v896 = vld [vmem:[#allocation6 + $0x64] sm:$0xf]
    %v898 = vsel %vm301, %v896, 0
    %900 = vmatpush.msra.mxu0 0.0
    %901 = vmatpush.msra.mxu0 0.0
    %902 = vmatpush.msra.mxu0 0.0
    %903 = vmatpush.msra.mxu0 0.0
    %904 = vmatpush.msra.mxu0 0.0
    %905 = vmatpush.msra.mxu0 0.0
    %906 = vmatpush.msra.mxu0 0.0
    %907 = vmatpush.msra.mxu0 0.0
    %908 = vmatpush.msra.mxu0 0.0
    %909 = vmatpush.msra.mxu0 0.0
    %910 = vmatpush.msra.mxu0 0.0
    %911 = vmatpush.msra.mxu0 0.0
    %912 = vmatpush.msra.mxu0 0.0
    %913 = vmatpush.msra.mxu0 0.0
    %914 = vmatpush.msra.mxu0 0.0
    %915 = vmatpush.msra.mxu0 %v721
    %916 = vmatmul.f32.gmra.mxu0 %v898
    %v917 = vpop.f32.mrf.mxu0
    %v918 = vadd.f32 0.0, %v917
    %919 = vdwg.mxu0
    %v921 = vsel %vm499, %v918, 0
    %923 = vmatpush.msra.mxu0 0.0
    %924 = vmatpush.msra.mxu0 0.0
    %925 = vmatpush.msra.mxu0 0.0
    %926 = vmatpush.msra.mxu0 0.0
    %927 = vmatpush.msra.mxu0 0.0
    %928 = vmatpush.msra.mxu0 0.0
    %929 = vmatpush.msra.mxu0 0.0
    %930 = vmatpush.msra.mxu0 0.0
    %931 = vmatpush.msra.mxu0 %v895
    %932 = vmatpush.msra.mxu0 %v894
    %933 = vmatpush.msra.mxu0 %v893
    %934 = vmatpush.msra.mxu0 %v892
    %935 = vmatpush.msra.mxu0 %v891
    %936 = vmatpush.msra.mxu0 %v890
    %937 = vmatpush.msra.mxu0 %v889
    %938 = vmatpush.msra.mxu0 %v888
    %939 = vmatmul.f32.gmra.mxu0 %v921
    %v940 = vpop.f32.mrf.mxu0
    %v941 = vadd.f32 0.0, %v940
    %942 = vdwg.mxu0
    %v943 = vadd.f32 %v887, %v941
    %v944 = vld [vmem:[#allocation4 + $0x258] sm:$0xff]
    %v945 = vld [vmem:[#allocation4 + $0x260] sm:$0xff]
    %v946 = vld [vmem:[#allocation4 + $0x268] sm:$0xff]
    %v947 = vld [vmem:[#allocation4 + $0x270] sm:$0xff]
    %v948 = vld [vmem:[#allocation4 + $0x278] sm:$0xff]
    %v949 = vld [vmem:[#allocation4 + $0x280] sm:$0xff]
    %v950 = vld [vmem:[#allocation4 + $0x288] sm:$0xff]
    %v951 = vld [vmem:[#allocation4 + $0x290] sm:$0xff]
    %v952 = vld [vmem:[#allocation6 + $0x68] sm:$0xf]
    %v954 = vsel %vm301, %v952, 0
    %956 = vmatpush.msra.mxu0 0.0
    %957 = vmatpush.msra.mxu0 0.0
    %958 = vmatpush.msra.mxu0 0.0
    %959 = vmatpush.msra.mxu0 0.0
    %960 = vmatpush.msra.mxu0 0.0
    %961 = vmatpush.msra.mxu0 0.0
    %962 = vmatpush.msra.mxu0 0.0
    %963 = vmatpush.msra.mxu0 0.0
    %964 = vmatpush.msra.mxu0 0.0
    %965 = vmatpush.msra.mxu0 0.0
    %966 = vmatpush.msra.mxu0 0.0
    %967 = vmatpush.msra.mxu0 0.0
    %968 = vmatpush.msra.mxu0 0.0
    %969 = vmatpush.msra.mxu0 0.0
    %970 = vmatpush.msra.mxu0 0.0
    %971 = vmatpush.msra.mxu0 %v721
    %972 = vmatmul.f32.gmra.mxu0 %v954
    %v973 = vpop.f32.mrf.mxu0
    %v974 = vadd.f32 0.0, %v973
    %975 = vdwg.mxu0
    %v977 = vsel %vm499, %v974, 0
    %979 = vmatpush.msra.mxu0 0.0
    %980 = vmatpush.msra.mxu0 0.0
    %981 = vmatpush.msra.mxu0 0.0
    %982 = vmatpush.msra.mxu0 0.0
    %983 = vmatpush.msra.mxu0 0.0
    %984 = vmatpush.msra.mxu0 0.0
    %985 = vmatpush.msra.mxu0 0.0
    %986 = vmatpush.msra.mxu0 0.0
    %987 = vmatpush.msra.mxu0 %v951
    %988 = vmatpush.msra.mxu0 %v950
    %989 = vmatpush.msra.mxu0 %v949
    %990 = vmatpush.msra.mxu0 %v948
    %991 = vmatpush.msra.mxu0 %v947
    %992 = vmatpush.msra.mxu0 %v946
    %993 = vmatpush.msra.mxu0 %v945
    %994 = vmatpush.msra.mxu0 %v944
    %995 = vmatmul.f32.gmra.mxu0 %v977
    %v996 = vpop.f32.mrf.mxu0
    %v997 = vadd.f32 0.0, %v996
    %998 = vdwg.mxu0
    %v999 = vadd.f32 %v943, %v997
    %v1000 = vld [vmem:[%s6 + $0x4] sm:$0x1]
    %v1001 = vperm.slane %v1000, 0
    %v1002 = vadd.f32 %v999, %v1001
    %v1003 = vld [vmem:[%s6 + $0x5] sm:$0x1]
    %vm1004 = vcmp.ge.f32.partialorder %v1002, 0.0
    %v1005 = vperm.slane %v1003, 0
    %v1006 = vmul.f32 %v1005, %v1002
    %v1007 = vsel %vm1004, %v1002, %v1006
    %1008 = vst [vmem:[%s7 + $0x1] sm:$0xf] %v1007
    // Predicated region
    $region42: #{forward.3} parent=1 // pred_check
      _
    $region43: #{forward.3} parent=1 // pred_check_branch
      %1010 = sbr.rel (0) target = $region45
    $region44: #{forward.3} parent=1 // pred_region
      _
    $region45: #{forward.3} parent=1 // pred_fallthru
      _
    // Predicated region
    $region46: #{forward.3} parent=1 // pred_check
      _
    $region47: #{forward.3} parent=1 // pred_check_branch
      %1012 = sbr.rel (0) target = $region49
    $region48: #{forward.3} parent=1 // pred_region
      _
    $region49: #{forward.3} parent=1 // pred_fallthru
      _
    %1013 = vsyncpa [#allocation3], 1
    %1014 = vsyncpa [#allocation5], 1

// kernel: forward.5
$region0: #{forward.5}
  #allocation0 [shape = 'u32[]', space=smem, size = 0x4, offset = 0x4, fixed_abs, tag = 'smem constant byte address 0x4 - core index']
  #allocation1 [shape = 'u32[72,128]{1,0:T(1,128)}', space=vmem, size = 0x9000, scoped, tag = 'internal scratch']
  %s0 = inlined_call_operand.vmem [shape: f32[6,128], index: 0, kind: input, shape index: {}]
  %s1 = inlined_call_operand.hbm [shape: f32[128,64], index: 1, kind: input, shape index: {}]
  %s2 = inlined_call_operand.hbm [shape: f32[288,64], index: 2, kind: input, shape index: {}]
  %s3 = inlined_call_operand.hbm [shape: f32[672,64], index: 3, kind: input, shape index: {}]
  %s4 = inlined_call_operand.hbm [shape: f32[192,16], index: 4, kind: input, shape index: {}]
  %s5 = inlined_call_operand.vmem [shape: f32[10,64], index: 5, kind: input, shape index: {}]
  %s6 = inlined_call_operand.vmem [shape: f32[5,64], index: 6, kind: input, shape index: {}]
  %s7 = inlined_call_operand.vmem [shape: f32[17,4], index: 7, kind: output, shape index: {0}]
  %s8 = inlined_call_operand.hbm [shape: f32[1,2], index: 8, kind: output, shape index: {1}]
  %9 = xla_tuple %s7, %s8
  %s10 = sld [smem:[#allocation0]]
  $region62: #{forward.5} parent=0
    _
  %s12 = ssub.s32 1, %s10
  %s13 = scalar_select 0, %s12, %s10
  $region1: #{forward.5} parent=0
    #allocation2 [shape = 'u8[65536]{0}', space=vmem, size = 0x10000, scoped, tag = 'input window, operand 1, single buffered']
    #allocation3 [shape = 's32[1]{0}', space=sflag, size = 0x4, scoped, tag = 'scoped memory for forward.5']
    #allocation4 [shape = 's32[1]{0}', space=sflag, size = 0x4, scoped, tag = 'scoped memory for forward.5']
    #allocation5 [shape = 'u8[147456]{0}', space=vmem, size = 0x24000, scoped, tag = 'input window, operand 2, single buffered']
    #allocation6 [shape = 's32[1]{0}', space=sflag, size = 0x4, scoped, tag = 'scoped memory for forward.5']
    #allocation7 [shape = 'u8[344064]{0}', space=vmem, size = 0x54000, scoped, tag = 'input window, operand 3, single buffered']
    #allocation8 [shape = 'u8[98304]{0}', space=vmem, size = 0x18000, scoped, tag = 'input window, operand 4, single buffered']
    #allocation9 [shape = 's32[1]{0}', space=sflag, size = 0x4, scoped, tag = 'scoped memory for forward.5']
    #allocation10 [shape = 'u8[512]{0}', space=vmem, size = 0x400, scoped, tag = 'output window, operand 1, single buffered']
    %14 = vsyncpa [#allocation3], 0
    %15 = vsyncpa [#allocation6], 0
    %16 = vsyncpa [#allocation9], 0
    %17 = vsyncpa [#allocation4], 0
    // Predicated region
    $region2: #{forward.5} parent=1 // pred_check
      _
    $region3: #{forward.5} parent=1 // pred_check_branch
      %19 = sbr.rel (0) target = $region5
    $region4: #{forward.5} parent=1 // pred_region
      _
    $region5: #{forward.5} parent=1 // pred_fallthru
      _
    // Predicated region
    $region6: #{forward.5} parent=1 // pred_check
      _
    $region7: #{forward.5} parent=1 // pred_check_branch
      %21 = sbr.rel (0) target = $region9
    $region8: #{forward.5} parent=1 // pred_region
      %23 = vsyncadd [#allocation3], 0
      %s24 = sshll.u32 %s1, 4
      %s25 = int_to_ptr.hbm [resolvable:$true] %s24
      %s26 = sshll.u32 [#allocation2], 4
      %s27 = int_to_ptr.vmem [resolvable:$true] %s26
      %32 = dma.hbm_to_vmem [thread:$0]  %s25, 2048, %s27, [#allocation3], 128, 128, 8
    $region9: #{forward.5} parent=1 // pred_fallthru
      _
    // Predicated region
    $region10: #{forward.5} parent=1 // pred_check
      _
    $region11: #{forward.5} parent=1 // pred_check_branch
      %34 = sbr.rel (0) target = $region13
    $region12: #{forward.5} parent=1 // pred_region
      %36 = vsyncadd [#allocation6], 0
      %s37 = sshll.u32 %s2, 4
      %s38 = int_to_ptr.hbm [resolvable:$true] %s37
      %s39 = sshll.u32 [#allocation5], 4
      %s40 = int_to_ptr.vmem [resolvable:$true] %s39
      %45 = dma.hbm_to_vmem [thread:$0]  %s38, 4608, %s40, [#allocation6], 128, 128, 8
    $region13: #{forward.5} parent=1 // pred_fallthru
      _
    // Predicated region
    $region14: #{forward.5} parent=1 // pred_check
      _
    $region15: #{forward.5} parent=1 // pred_check_branch
      %47 = sbr.rel (0) target = $region17
    $region16: #{forward.5} parent=1 // pred_region
      %49 = vsyncadd [#allocation6], 0
      %s50 = sshll.u32 %s3, 4
      %s51 = int_to_ptr.hbm [resolvable:$true] %s50
      %s52 = sshll.u32 [#allocation7], 4
      %s53 = int_to_ptr.vmem [resolvable:$true] %s52
      %58 = dma.hbm_to_vmem [thread:$0]  %s51, 10752, %s53, [#allocation6], 128, 128, 8
    $region17: #{forward.5} parent=1 // pred_fallthru
      _
    // Predicated region
    $region18: #{forward.5} parent=1 // pred_check
      _
    $region19: #{forward.5} parent=1 // pred_check_branch
      %60 = sbr.rel (0) target = $region21
    $region20: #{forward.5} parent=1 // pred_region
      %62 = vsyncadd [#allocation9], 0
      %s63 = sshll.u32 %s4, 4
      %s64 = int_to_ptr.hbm [resolvable:$true] %s63
      %s65 = sshll.u32 [#allocation8], 4
      %s66 = int_to_ptr.vmem [resolvable:$true] %s65
      %71 = dma.hbm_to_vmem [thread:$0]  %s64, 3072, %s66, [#allocation9], 128, 128, 8
    $region21: #{forward.5} parent=1 // pred_fallthru
      _
    // Predicated region
    $region22: #{forward.5} parent=1 // pred_check
      _
    $region23: #{forward.5} parent=1 // pred_check_branch
      %73 = sbr.rel (0) target = $region25
    $region24: #{forward.5} parent=1 // pred_region
      _
    $region25: #{forward.5} parent=1 // pred_fallthru
      _
    // Predicated region
    $region26: #{forward.5} parent=1 // pred_check
      _
    $region27: #{forward.5} parent=1 // pred_check_branch
      %75 = sbr.rel (0) target = $region29
    $region28: #{forward.5} parent=1 // pred_region
      _
    $region29: #{forward.5} parent=1 // pred_fallthru
      _
    // Predicated region
    $region30: #{forward.5} parent=1 // pred_check
      _
    $region31: #{forward.5} parent=1 // pred_check_branch
      %77 = sbr.rel (0) target = $region33
    $region32: #{forward.5} parent=1 // pred_region
      %79 = dma.done [#allocation3], 2048
    $region33: #{forward.5} parent=1 // pred_fallthru
      _
    // Predicated region
    $region34: #{forward.5} parent=1 // pred_check
      _
    $region35: #{forward.5} parent=1 // pred_check_branch
      %81 = sbr.rel (0) target = $region37
    $region36: #{forward.5} parent=1 // pred_region
      %83 = dma.done [#allocation6], 4608
    $region37: #{forward.5} parent=1 // pred_fallthru
      _
    // Predicated region
    $region38: #{forward.5} parent=1 // pred_check
      _
    $region39: #{forward.5} parent=1 // pred_check_branch
      %85 = sbr.rel (0) target = $region41
    $region40: #{forward.5} parent=1 // pred_region
      %87 = dma.done [#allocation6], 10752
    $region41: #{forward.5} parent=1 // pred_fallthru
      _
    // Predicated region
    $region42: #{forward.5} parent=1 // pred_check
      _
    $region43: #{forward.5} parent=1 // pred_check_branch
      %89 = sbr.rel (0) target = $region45
    $region44: #{forward.5} parent=1 // pred_region
      %91 = dma.done [#allocation9], 3072
    $region45: #{forward.5} parent=1 // pred_fallthru
      _
    %v92 = vld [vmem:[%s0] sm:$0x3f]
    %v93 = vld [vmem:[#allocation2] sm:$0xff]
    %v94 = vld [vmem:[#allocation2 + $0x8] sm:$0xff]
    %v95 = vld [vmem:[#allocation2 + $0x10] sm:$0xff]
    %v96 = vld [vmem:[#allocation2 + $0x18] sm:$0xff]
    %v97 = vld [vmem:[#allocation2 + $0x20] sm:$0xff]
    %v98 = vld [vmem:[#allocation2 + $0x28] sm:$0xff]
    %v99 = vld [vmem:[#allocation2 + $0x30] sm:$0xff]
    %v100 = vld [vmem:[#allocation2 + $0x38] sm:$0xff]
    %v101 = vld [vmem:[#allocation2 + $0x40] sm:$0xff]
    %v102 = vld [vmem:[#allocation2 + $0x48] sm:$0xff]
    %v103 = vld [vmem:[#allocation2 + $0x50] sm:$0xff]
    %v104 = vld [vmem:[#allocation2 + $0x58] sm:$0xff]
    %v105 = vld [vmem:[#allocation2 + $0x60] sm:$0xff]
    %v106 = vld [vmem:[#allocation2 + $0x68] sm:$0xff]
    %v107 = vld [vmem:[#allocation2 + $0x70] sm:$0xff]
    %v108 = vld [vmem:[#allocation2 + $0x78] sm:$0xff]
    %109 = vmatpush.msra.mxu0 %v108
    %110 = vmatpush.msra.mxu0 %v107
    %111 = vmatpush.msra.mxu0 %v106
    %112 = vmatpush.msra.mxu0 %v105
    %113 = vmatpush.msra.mxu0 %v104
    %114 = vmatpush.msra.mxu0 %v103
    %115 = vmatpush.msra.mxu0 %v102
    %116 = vmatpush.msra.mxu0 %v101
    %117 = vmatpush.msra.mxu0 %v100
    %118 = vmatpush.msra.mxu0 %v99
    %119 = vmatpush.msra.mxu0 %v98
    %120 = vmatpush.msra.mxu0 %v97
    %121 = vmatpush.msra.mxu0 %v96
    %122 = vmatpush.msra.mxu0 %v95
    %123 = vmatpush.msra.mxu0 %v94
    %124 = vmatpush.msra.mxu0 %v93
    %125 = vmatmul.f32.gmra.mxu0 %v92
    %v126 = vpop.f32.mrf.mxu0
    %v127 = vadd.f32 0.0, %v126
    %128 = vdwg.mxu0
    %v130 = vrot.slane %v127, 5
    %v132 = vadd.f32 %v127, %v130
    %v133 = vld [vmem:[#allocation5] sm:$0xff]
    %v134 = vld [vmem:[#allocation5 + $0x8] sm:$0xff]
    %v135 = vld [vmem:[#allocation5 + $0x10] sm:$0xff]
    %v136 = vld [vmem:[#allocation5 + $0x18] sm:$0xff]
    %v137 = vld [vmem:[#allocation5 + $0x20] sm:$0xff]
    %v138 = vld [vmem:[#allocation5 + $0x28] sm:$0xff]
    %v139 = vld [vmem:[#allocation5 + $0x30] sm:$0xff]
    %v140 = vld [vmem:[#allocation5 + $0x38] sm:$0xff]
    %v141 = vld [vmem:[#allocation5 + $0x40] sm:$0xff]
    %v142 = vld [vmem:[#allocation5 + $0x48] sm:$0xff]
    %v143 = vld [vmem:[#allocation5 + $0x50] sm:$0xff]
    %v144 = vld [vmem:[#allocation5 + $0x58] sm:$0xff]
    %v145 = vld [vmem:[#allocation5 + $0x60] sm:$0xff]
    %v146 = vld [vmem:[#allocation5 + $0x68] sm:$0xff]
    %v147 = vld [vmem:[#allocation5 + $0x70] sm:$0xff]
    %v148 = vld [vmem:[#allocation5 + $0x78] sm:$0xff]
    %v149 = vld [vmem:[%s5] sm:$0x1]
    %v150 = vld [vmem:[%s6] sm:$0x1]
    %v151 = vld [vmem:[%s6 + $0x1] sm:$0x1]
    %v152 = vperm.slane %v151, 0
    %v153 = vmul.f32 %v127, %v152
    %v155 = vrot.slane %v153, 1
    %vm156 = vcmask 523264
    %v157 = vsel %vm156, %v155, 0
    %159 = vmatpush.msra.mxu0 0.0
    %160 = vmatpush.msra.mxu0 0.0
    %161 = vmatpush.msra.mxu0 0.0
    %162 = vmatpush.msra.mxu0 0.0
    %163 = vmatpush.msra.mxu0 0.0
    %164 = vmatpush.msra.mxu0 0.0
    %165 = vmatpush.msra.mxu0 0.0
    %166 = vmatpush.msra.mxu0 0.0
    %167 = vmatpush.msra.mxu0 %v140
    %168 = vmatpush.msra.mxu0 %v139
    %169 = vmatpush.msra.mxu0 %v138
    %170 = vmatpush.msra.mxu0 %v137
    %171 = vmatpush.msra.mxu0 %v136
    %172 = vmatpush.msra.mxu0 %v135
    %173 = vmatpush.msra.mxu0 %v134
    %174 = vmatpush.msra.mxu0 %v133
    %175 = vmatmul.f32.gmra.mxu0 %v157
    %v176 = vpop.f32.mrf.mxu0
    %v177 = vadd.f32 0.0, %v176
    %178 = vdwg.mxu0
    %v179 = vmul.f32 %v177, 0.03125
    %v180 = vperm.slane %v150, 0
    %v181 = vmul.f32 %v180, %v179
    %v182 = vperm.slane %v149, 0
    %v183 = vrot.slane %v127, 1
    %v184 = vsel %vm156, %v183, 0
    %186 = vmatpush.msra.mxu0 0.0
    %187 = vmatpush.msra.mxu0 0.0
    %188 = vmatpush.msra.mxu0 0.0
    %189 = vmatpush.msra.mxu0 0.0
    %190 = vmatpush.msra.mxu0 0.0
    %191 = vmatpush.msra.mxu0 0.0
    %192 = vmatpush.msra.mxu0 0.0
    %193 = vmatpush.msra.mxu0 0.0
    %194 = vmatpush.msra.mxu0 %v148
    %195 = vmatpush.msra.mxu0 %v147
    %196 = vmatpush.msra.mxu0 %v146
    %197 = vmatpush.msra.mxu0 %v145
    %198 = vmatpush.msra.mxu0 %v144
    %199 = vmatpush.msra.mxu0 %v143
    %200 = vmatpush.msra.mxu0 %v142
    %201 = vmatpush.msra.mxu0 %v141
    %202 = vmatmul.f32.gmra.mxu0 %v184
    %v203 = vpop.f32.mrf.mxu0
    %v204 = vadd.f32 %v182, %v203
    %205 = vdwg.mxu0
    %v206 = vadd.f32 %v204, %v181
    %v207 = vmul.f32 %v206, 0.5
    %v208 = vmul.f32 %v206, 0.70710677
    %v209 = vand.u32 2147483647, %v208
    %v210 = vmul.f32 %v209, 0.3275911
    %v211 = vadd.f32 %v210, 1.0
    %v212 = vrcp.pop %v211
    %v213 = vmul.f32 %v211, %v212
    %v214 = vsub.f32 1.0, %v213
    %v215 = vmul.f32 %v212, %v214
    %v216 = vadd.f32 %v212, %v215
    %vm217 = vweird.f32 %v211
    %vm218 = vweird.f32 %v212
    %vm219 = vmor %vm217, %vm218
    %v220 = vsel %vm219, %v212, %v216
    %v221 = vand.u32 2147483647, %v211
    %vm222 = vcmp.eq.f32.partialorder %v221, 8.507059e+37
    %v223 = vand.u32 %v211, 2147483648
    %v224 = vor.u32 1.1754944e-38, %v223
    %v225 = vsel %vm222, %v224, %v220
    %v226 = vmul.f32 1.0, %v225
    %v227 = vmul.f32 %v226, 1.0614054
    %v228 = vadd.f32 %v227, -1.4531521
    %v229 = vmul.f32 %v226, %v228
    %v230 = vadd.f32 %v229, 1.4214138
    %v231 = vmul.f32 %v226, %v230
    %v232 = vadd.f32 %v231, -0.28449672
    %v233 = vmul.f32 %v226, %v232
    %v234 = vadd.f32 %v233, 0.2548296
    %v235 = vmul.f32 %v226, %v234
    %v236 = vsub.f32 0.0, %v209
    %v237 = vmul.f32 %v236, %v209
    %v238 = vmul.f32 %v237, 1.442695
    %v239 = vpow.pop %v238
    %v240 = vmul.f32 %v235, %v239
    %v241 = vsub.f32 1.0, %v240
    %vm242 = vcmp.ge.f32.partialorder %v208, 0.0
    %v243 = vsub.f32 0.0, %v241
    %v244 = vsel %vm242, %v241, %v243
    %v245 = vadd.f32 %v244, 1.0
    %v246 = vmul.f32 %v207, %v245
    %v247 = vld [vmem:[#allocation7] sm:$0xff]
    %v248 = vld [vmem:[#allocation7 + $0x8] sm:$0xff]
    %v249 = vld [vmem:[#allocation7 + $0x10] sm:$0xff]
    %v250 = vld [vmem:[#allocation7 + $0x18] sm:$0xff]
    %v251 = vld [vmem:[#allocation7 + $0x20] sm:$0xff]
    %v252 = vld [vmem:[#allocation7 + $0x28] sm:$0xff]
    %v253 = vld [vmem:[#allocation7 + $0x30] sm:$0xff]
    %v254 = vld [vmem:[#allocation7 + $0x38] sm:$0xff]
    %v255 = vld [vmem:[#allocation8] sm:$0xff]
    %v257 = vsel %vm156, %v246, 0
    %259 = vmatpush.msra.mxu0 0.0
    %260 = vmatpush.msra.mxu0 0.0
    %261 = vmatpush.msra.mxu0 0.0
    %262 = vmatpush.msra.mxu0 0.0
    %263 = vmatpush.msra.mxu0 0.0
    %264 = vmatpush.msra.mxu0 0.0
    %265 = vmatpush.msra.mxu0 0.0
    %266 = vmatpush.msra.mxu0 0.0
    %267 = vmatpush.msra.mxu0 %v254
    %268 = vmatpush.msra.mxu0 %v253
    %269 = vmatpush.msra.mxu0 %v252
    %270 = vmatpush.msra.mxu0 %v251
    %271 = vmatpush.msra.mxu0 %v250
    %272 = vmatpush.msra.mxu0 %v249
    %273 = vmatpush.msra.mxu0 %v248
    %274 = vmatpush.msra.mxu0 %v247
    %275 = vmatmul.f32.gmra.mxu0 %v257
    %v276 = vpop.f32.mrf.mxu0
    %v277 = vadd.f32 0.0, %v276
    %278 = vdwg.mxu0
    %v279 = vld [vmem:[#allocation7 + $0x40] sm:$0xff]
    %v280 = vld [vmem:[#allocation7 + $0x48] sm:$0xff]
    %v281 = vld [vmem:[#allocation7 + $0x50] sm:$0xff]
    %v282 = vld [vmem:[#allocation7 + $0x58] sm:$0xff]
    %v283 = vld [vmem:[#allocation7 + $0x60] sm:$0xff]
    %v284 = vld [vmem:[#allocation7 + $0x68] sm:$0xff]
    %v285 = vld [vmem:[#allocation7 + $0x70] sm:$0xff]
    %v286 = vld [vmem:[#allocation7 + $0x78] sm:$0xff]
    %v287 = vld [vmem:[#allocation8 + $0x8] sm:$0xff]
    %288 = vmatpush.msra.mxu0 0.0
    %289 = vmatpush.msra.mxu0 0.0
    %290 = vmatpush.msra.mxu0 0.0
    %291 = vmatpush.msra.mxu0 0.0
    %292 = vmatpush.msra.mxu0 0.0
    %293 = vmatpush.msra.mxu0 0.0
    %294 = vmatpush.msra.mxu0 0.0
    %295 = vmatpush.msra.mxu0 0.0
    %296 = vmatpush.msra.mxu0 %v286
    %297 = vmatpush.msra.mxu0 %v285
    %298 = vmatpush.msra.mxu0 %v284
    %299 = vmatpush.msra.mxu0 %v283
    %300 = vmatpush.msra.mxu0 %v282
    %301 = vmatpush.msra.mxu0 %v281
    %302 = vmatpush.msra.mxu0 %v280
    %303 = vmatpush.msra.mxu0 %v279
    %304 = vmatmul.f32.gmra.mxu0 %v257
    %v305 = vpop.f32.mrf.mxu0
    %v306 = vadd.f32 0.0, %v305
    %307 = vdwg.mxu0
    %vm308 = vcmask 31744
    %v310 = vsel %vm308, %v287, 0
    %vm312 = vcmask 1043456
    %v314 = vsel %vm312, %v306, 0
    %316 = vmatpush.msra.mxu0 0.0
    %317 = vmatpush.msra.mxu0 0.0
    %318 = vmatpush.msra.mxu0 0.0
    %319 = vmatpush.msra.mxu0 0.0
    %320 = vmatpush.msra.mxu0 0.0
    %321 = vmatpush.msra.mxu0 0.0
    %322 = vmatpush.msra.mxu0 0.0
    %323 = vmatpush.msra.mxu0 0.0
    %324 = vmatpush.msra.mxu0 0.0
    %325 = vmatpush.msra.mxu0 0.0
    %326 = vmatpush.msra.mxu0 0.0
    %327 = vmatpush.msra.mxu0 0.0
    %328 = vmatpush.msra.mxu0 0.0
    %329 = vmatpush.msra.mxu0 0.0
    %330 = vmatpush.msra.mxu0 0.0
    %331 = vmatpush.msra.mxu0 %v314
    %332 = vmatmul.f32.gmra.mxu0 %v310
    %v333 = vpop.f32.mrf.mxu0
    %v334 = vadd.f32 0.0, %v333
    %335 = vdwg.mxu0
    %v337 = vsel %vm308, %v255, 0
    %v340 = vsel %vm312, %v277, 0
    %342 = vmatpush.msra.mxu0 0.0
    %343 = vmatpush.msra.mxu0 0.0
    %344 = vmatpush.msra.mxu0 0.0
    %345 = vmatpush.msra.mxu0 0.0
    %346 = vmatpush.msra.mxu0 0.0
    %347 = vmatpush.msra.mxu0 0.0
    %348 = vmatpush.msra.mxu0 0.0
    %349 = vmatpush.msra.mxu0 0.0
    %350 = vmatpush.msra.mxu0 0.0
    %351 = vmatpush.msra.mxu0 0.0
    %352 = vmatpush.msra.mxu0 0.0
    %353 = vmatpush.msra.mxu0 0.0
    %354 = vmatpush.msra.mxu0 0.0
    %355 = vmatpush.msra.mxu0 0.0
    %356 = vmatpush.msra.mxu0 0.0
    %357 = vmatpush.msra.mxu0 %v340
    %358 = vmatmul.f32.gmra.mxu0 %v337
    %v359 = vpop.f32.mrf.mxu0
    %v360 = vadd.f32 %v334, %v359
    %361 = vdwg.mxu0
    %v362 = vld [vmem:[#allocation7 + $0x80] sm:$0xff]
    %v363 = vld [vmem:[#allocation7 + $0x88] sm:$0xff]
    %v364 = vld [vmem:[#allocation7 + $0x90] sm:$0xff]
    %v365 = vld [vmem:[#allocation7 + $0x98] sm:$0xff]
    %v366 = vld [vmem:[#allocation7 + $0xa0] sm:$0xff]
    %v367 = vld [vmem:[#allocation7 + $0xa8] sm:$0xff]
    %v368 = vld [vmem:[#allocation7 + $0xb0] sm:$0xff]
    %v369 = vld [vmem:[#allocation7 + $0xb8] sm:$0xff]
    %v370 = vld [vmem:[#allocation8 + $0x10] sm:$0xff]
    %371 = vmatpush.msra.mxu0 0.0
    %372 = vmatpush.msra.mxu0 0.0
    %373 = vmatpush.msra.mxu0 0.0
    %374 = vmatpush.msra.mxu0 0.0
    %375 = vmatpush.msra.mxu0 0.0
    %376 = vmatpush.msra.mxu0 0.0
    %377 = vmatpush.msra.mxu0 0.0
    %378 = vmatpush.msra.mxu0 0.0
    %379 = vmatpush.msra.mxu0 %v369
    %380 = vmatpush.msra.mxu0 %v368
    %381 = vmatpush.msra.mxu0 %v367
    %382 = vmatpush.msra.mxu0 %v366
    %383 = vmatpush.msra.mxu0 %v365
    %384 = vmatpush.msra.mxu0 %v364
    %385 = vmatpush.msra.mxu0 %v363
    %386 = vmatpush.msra.mxu0 %v362
    %387 = vmatmul.f32.gmra.mxu0 %v257
    %v388 = vpop.f32.mrf.mxu0
    %v389 = vadd.f32 0.0, %v388
    %390 = vdwg.mxu0
    %v392 = vsel %vm308, %v370, 0
    %v395 = vsel %vm312, %v389, 0
    %397 = vmatpush.msra.mxu0 0.0
    %398 = vmatpush.msra.mxu0 0.0
    %399 = vmatpush.msra.mxu0 0.0
    %400 = vmatpush.msra.mxu0 0.0
    %401 = vmatpush.msra.mxu0 0.0
    %402 = vmatpush.msra.mxu0 0.0
    %403 = vmatpush.msra.mxu0 0.0
    %404 = vmatpush.msra.mxu0 0.0
    %405 = vmatpush.msra.mxu0 0.0
    %406 = vmatpush.msra.mxu0 0.0
    %407 = vmatpush.msra.mxu0 0.0
    %408 = vmatpush.msra.mxu0 0.0
    %409 = vmatpush.msra.mxu0 0.0
    %410 = vmatpush.msra.mxu0 0.0
    %411 = vmatpush.msra.mxu0 0.0
    %412 = vmatpush.msra.mxu0 %v395
    %413 = vmatmul.f32.gmra.mxu0 %v392
    %v414 = vpop.f32.mrf.mxu0
    %v415 = vadd.f32 0.0, %v414
    %416 = vdwg.mxu0
    %v417 = vadd.f32 %v360, %v415
    %v418 = vld [vmem:[#allocation7 + $0xc0] sm:$0xff]
    %v419 = vld [vmem:[#allocation7 + $0xc8] sm:$0xff]
    %v420 = vld [vmem:[#allocation7 + $0xd0] sm:$0xff]
    %v421 = vld [vmem:[#allocation7 + $0xd8] sm:$0xff]
    %v422 = vld [vmem:[#allocation7 + $0xe0] sm:$0xff]
    %v423 = vld [vmem:[#allocation7 + $0xe8] sm:$0xff]
    %v424 = vld [vmem:[#allocation7 + $0xf0] sm:$0xff]
    %v425 = vld [vmem:[#allocation7 + $0xf8] sm:$0xff]
    %v426 = vld [vmem:[#allocation8 + $0x18] sm:$0xff]
    %427 = vmatpush.msra.mxu0 0.0
    %428 = vmatpush.msra.mxu0 0.0
    %429 = vmatpush.msra.mxu0 0.0
    %430 = vmatpush.msra.mxu0 0.0
    %431 = vmatpush.msra.mxu0 0.0
    %432 = vmatpush.msra.mxu0 0.0
    %433 = vmatpush.msra.mxu0 0.0
    %434 = vmatpush.msra.mxu0 0.0
    %435 = vmatpush.msra.mxu0 %v425
    %436 = vmatpush.msra.mxu0 %v424
    %437 = vmatpush.msra.mxu0 %v423
    %438 = vmatpush.msra.mxu0 %v422
    %439 = vmatpush.msra.mxu0 %v421
    %440 = vmatpush.msra.mxu0 %v420
    %441 = vmatpush.msra.mxu0 %v419
    %442 = vmatpush.msra.mxu0 %v418
    %443 = vmatmul.f32.gmra.mxu0 %v257
    %v444 = vpop.f32.mrf.mxu0
    %v445 = vadd.f32 0.0, %v444
    %446 = vdwg.mxu0
    %v448 = vsel %vm308, %v426, 0
    %v451 = vsel %vm312, %v445, 0
    %453 = vmatpush.msra.mxu0 0.0
    %454 = vmatpush.msra.mxu0 0.0
    %455 = vmatpush.msra.mxu0 0.0
    %456 = vmatpush.msra.mxu0 0.0
    %457 = vmatpush.msra.mxu0 0.0
    %458 = vmatpush.msra.mxu0 0.0
    %459 = vmatpush.msra.mxu0 0.0
    %460 = vmatpush.msra.mxu0 0.0
    %461 = vmatpush.msra.mxu0 0.0
    %462 = vmatpush.msra.mxu0 0.0
    %463 = vmatpush.msra.mxu0 0.0
    %464 = vmatpush.msra.mxu0 0.0
    %465 = vmatpush.msra.mxu0 0.0
    %466 = vmatpush.msra.mxu0 0.0
    %467 = vmatpush.msra.mxu0 0.0
    %468 = vmatpush.msra.mxu0 %v451
    %469 = vmatmul.f32.gmra.mxu0 %v448
    %v470 = vpop.f32.mrf.mxu0
    %v471 = vadd.f32 0.0, %v470
    %472 = vdwg.mxu0
    %v473 = vadd.f32 %v417, %v471
    %v474 = vld [vmem:[#allocation7 + $0x100] sm:$0xff]
    %v475 = vld [vmem:[#allocation7 + $0x108] sm:$0xff]
    %v476 = vld [vmem:[#allocation7 + $0x110] sm:$0xff]
    %v477 = vld [vmem:[#allocation7 + $0x118] sm:$0xff]
    %v478 = vld [vmem:[#allocation7 + $0x120] sm:$0xff]
    %v479 = vld [vmem:[#allocation7 + $0x128] sm:$0xff]
    %v480 = vld [vmem:[#allocation7 + $0x130] sm:$0xff]
    %v481 = vld [vmem:[#allocation7 + $0x138] sm:$0xff]
    %v482 = vld [vmem:[#allocation8 + $0x20] sm:$0xff]
    %483 = vmatpush.msra.mxu0 0.0
    %484 = vmatpush.msra.mxu0 0.0
    %485 = vmatpush.msra.mxu0 0.0
    %486 = vmatpush.msra.mxu0 0.0
    %487 = vmatpush.msra.mxu0 0.0
    %488 = vmatpush.msra.mxu0 0.0
    %489 = vmatpush.msra.mxu0 0.0
    %490 = vmatpush.msra.mxu0 0.0
    %491 = vmatpush.msra.mxu0 %v481
    %492 = vmatpush.msra.mxu0 %v480
    %493 = vmatpush.msra.mxu0 %v479
    %494 = vmatpush.msra.mxu0 %v478
    %495 = vmatpush.msra.mxu0 %v477
    %496 = vmatpush.msra.mxu0 %v476
    %497 = vmatpush.msra.mxu0 %v475
    %498 = vmatpush.msra.mxu0 %v474
    %499 = vmatmul.f32.gmra.mxu0 %v257
    %v500 = vpop.f32.mrf.mxu0
    %v501 = vadd.f32 0.0, %v500
    %502 = vdwg.mxu0
    %v504 = vsel %vm308, %v482, 0
    %v507 = vsel %vm312, %v501, 0
    %509 = vmatpush.msra.mxu0 0.0
    %510 = vmatpush.msra.mxu0 0.0
    %511 = vmatpush.msra.mxu0 0.0
    %512 = vmatpush.msra.mxu0 0.0
    %513 = vmatpush.msra.mxu0 0.0
    %514 = vmatpush.msra.mxu0 0.0
    %515 = vmatpush.msra.mxu0 0.0
    %516 = vmatpush.msra.mxu0 0.0
    %517 = vmatpush.msra.mxu0 0.0
    %518 = vmatpush.msra.mxu0 0.0
    %519 = vmatpush.msra.mxu0 0.0
    %520 = vmatpush.msra.mxu0 0.0
    %521 = vmatpush.msra.mxu0 0.0
    %522 = vmatpush.msra.mxu0 0.0
    %523 = vmatpush.msra.mxu0 0.0
    %524 = vmatpush.msra.mxu0 %v507
    %525 = vmatmul.f32.gmra.mxu0 %v504
    %v526 = vpop.f32.mrf.mxu0
    %v527 = vadd.f32 0.0, %v526
    %528 = vdwg.mxu0
    %v529 = vadd.f32 %v473, %v527
    %v530 = vld [vmem:[#allocation7 + $0x140] sm:$0xff]
    %v531 = vld [vmem:[#allocation7 + $0x148] sm:$0xff]
    %v532 = vld [vmem:[#allocation7 + $0x150] sm:$0xff]
    %v533 = vld [vmem:[#allocation7 + $0x158] sm:$0xff]
    %v534 = vld [vmem:[#allocation7 + $0x160] sm:$0xff]
    %v535 = vld [vmem:[#allocation7 + $0x168] sm:$0xff]
    %v536 = vld [vmem:[#allocation7 + $0x170] sm:$0xff]
    %v537 = vld [vmem:[#allocation7 + $0x178] sm:$0xff]
    %v538 = vld [vmem:[#allocation8 + $0x28] sm:$0xff]
    %539 = vmatpush.msra.mxu0 0.0
    %540 = vmatpush.msra.mxu0 0.0
    %541 = vmatpush.msra.mxu0 0.0
    %542 = vmatpush.msra.mxu0 0.0
    %543 = vmatpush.msra.mxu0 0.0
    %544 = vmatpush.msra.mxu0 0.0
    %545 = vmatpush.msra.mxu0 0.0
    %546 = vmatpush.msra.mxu0 0.0
    %547 = vmatpush.msra.mxu0 %v537
    %548 = vmatpush.msra.mxu0 %v536
    %549 = vmatpush.msra.mxu0 %v535
    %550 = vmatpush.msra.mxu0 %v534
    %551 = vmatpush.msra.mxu0 %v533
    %552 = vmatpush.msra.mxu0 %v532
    %553 = vmatpush.msra.mxu0 %v531
    %554 = vmatpush.msra.mxu0 %v530
    %555 = vmatmul.f32.gmra.mxu0 %v257
    %v556 = vpop.f32.mrf.mxu0
    %v557 = vadd.f32 0.0, %v556
    %558 = vdwg.mxu0
    %v560 = vsel %vm308, %v538, 0
    %v563 = vsel %vm312, %v557, 0
    %565 = vmatpush.msra.mxu0 0.0
    %566 = vmatpush.msra.mxu0 0.0
    %567 = vmatpush.msra.mxu0 0.0
    %568 = vmatpush.msra.mxu0 0.0
    %569 = vmatpush.msra.mxu0 0.0
    %570 = vmatpush.msra.mxu0 0.0
    %571 = vmatpush.msra.mxu0 0.0
    %572 = vmatpush.msra.mxu0 0.0
    %573 = vmatpush.msra.mxu0 0.0
    %574 = vmatpush.msra.mxu0 0.0
    %575 = vmatpush.msra.mxu0 0.0
    %576 = vmatpush.msra.mxu0 0.0
    %577 = vmatpush.msra.mxu0 0.0
    %578 = vmatpush.msra.mxu0 0.0
    %579 = vmatpush.msra.mxu0 0.0
    %580 = vmatpush.msra.mxu0 %v563
    %581 = vmatmul.f32.gmra.mxu0 %v560
    %v582 = vpop.f32.mrf.mxu0
    %v583 = vadd.f32 0.0, %v582
    %584 = vdwg.mxu0
    %v585 = vadd.f32 %v529, %v583
    %v586 = vld [vmem:[%s5 + $0x4] sm:$0x1]
    %v587 = vperm.slane %v586, 0
    %v588 = vadd.f32 %v585, %v587
    %v589 = vld [vmem:[%s5 + $0x5] sm:$0x1]
    %vm590 = vcmp.ge.f32.partialorder %v588, 0.0
    %v591 = vperm.slane %v589, 0
    %v592 = vmul.f32 %v591, %v588
    %v593 = vsel %vm590, %v588, %v592
    %v594 = vld [vmem:[#allocation7 + $0x180] sm:$0xff]
    %v595 = vld [vmem:[#allocation7 + $0x188] sm:$0xff]
    %v596 = vld [vmem:[#allocation7 + $0x190] sm:$0xff]
    %v597 = vld [vmem:[#allocation7 + $0x198] sm:$0xff]
    %v598 = vld [vmem:[#allocation8 + $0x30] sm:$0xff]
    %v599 = vld [vmem:[#allocation8 + $0x38] sm:$0xff]
    %vm600 = vcmask 261120
    %v602 = vsel %vm600, %v593, 0
    %604 = vmatpush.msra.mxu0 0.0
    %605 = vmatpush.msra.mxu0 0.0
    %606 = vmatpush.msra.mxu0 0.0
    %607 = vmatpush.msra.mxu0 0.0
    %608 = vmatpush.msra.mxu0 0.0
    %609 = vmatpush.msra.mxu0 0.0
    %610 = vmatpush.msra.mxu0 0.0
    %611 = vmatpush.msra.mxu0 0.0
    %612 = vmatpush.msra.mxu0 0.0
    %613 = vmatpush.msra.mxu0 0.0
    %614 = vmatpush.msra.mxu0 0.0
    %615 = vmatpush.msra.mxu0 0.0
    %616 = vmatpush.msra.mxu0 %v597
    %617 = vmatpush.msra.mxu0 %v596
    %618 = vmatpush.msra.mxu0 %v595
    %619 = vmatpush.msra.mxu0 %v594
    %620 = vmatmul.f32.gmra.mxu0 %v602
    %v621 = vpop.f32.mrf.mxu0
    %v622 = vadd.f32 0.0, %v621
    %623 = vdwg.mxu0
    %v624 = vld [vmem:[#allocation7 + $0x1a0] sm:$0xff]
    %v625 = vld [vmem:[#allocation7 + $0x1a8] sm:$0xff]
    %v626 = vld [vmem:[#allocation7 + $0x1b0] sm:$0xff]
    %v627 = vld [vmem:[#allocation7 + $0x1b8] sm:$0xff]
    %v628 = vld [vmem:[#allocation8 + $0x40] sm:$0xff]
    %v629 = vld [vmem:[#allocation8 + $0x48] sm:$0xff]
    %630 = vmatpush.msra.mxu0 0.0
    %631 = vmatpush.msra.mxu0 0.0
    %632 = vmatpush.msra.mxu0 0.0
    %633 = vmatpush.msra.mxu0 0.0
    %634 = vmatpush.msra.mxu0 0.0
    %635 = vmatpush.msra.mxu0 0.0
    %636 = vmatpush.msra.mxu0 0.0
    %637 = vmatpush.msra.mxu0 0.0
    %638 = vmatpush.msra.mxu0 0.0
    %639 = vmatpush.msra.mxu0 0.0
    %640 = vmatpush.msra.mxu0 0.0
    %641 = vmatpush.msra.mxu0 0.0
    %642 = vmatpush.msra.mxu0 %v627
    %643 = vmatpush.msra.mxu0 %v626
    %644 = vmatpush.msra.mxu0 %v625
    %645 = vmatpush.msra.mxu0 %v624
    %646 = vmatmul.f32.gmra.mxu0 %v602
    %v647 = vpop.f32.mrf.mxu0
    %v648 = vadd.f32 0.0, %v647
    %649 = vdwg.mxu0
    %vm650 = vcmask 64512
    %v652 = vsel %vm650, %v628, 0
    %v655 = vsel %vm650, %v629, 0
    %657 = vmatpush.msra.mxu0 0.0
    %658 = vmatpush.msra.mxu0 0.0
    %659 = vmatpush.msra.mxu0 0.0
    %660 = vmatpush.msra.mxu0 0.0
    %661 = vmatpush.msra.mxu0 0.0
    %662 = vmatpush.msra.mxu0 0.0
    %663 = vmatpush.msra.mxu0 0.0
    %664 = vmatpush.msra.mxu0 0.0
    %665 = vmatpush.msra.mxu0 0.0
    %666 = vmatpush.msra.mxu0 0.0
    %667 = vmatpush.msra.mxu0 0.0
    %668 = vmatpush.msra.mxu0 0.0
    %669 = vmatpush.msra.mxu0 0.0
    %670 = vmatpush.msra.mxu0 0.0
    %671 = vmatpush.msra.mxu0 0.0
    %672 = vmatpush.msra.mxu0 %v648
    %673 = vmatmul.f32.gmra.mxu0 %v652
    %v674 = vpop.f32.mrf.mxu0
    %v675 = vadd.f32 0.0, %v674
    %676 = vmatmul.f32.gmra.mxu0 %v655
    %v677 = vpop.f32.mrf.mxu0
    %v678 = vadd.f32 0.0, %v677
    %679 = vdwg.mxu0
    %v681 = vsel %vm650, %v598, 0
    %v684 = vsel %vm650, %v599, 0
    %686 = vmatpush.msra.mxu0 0.0
    %687 = vmatpush.msra.mxu0 0.0
    %688 = vmatpush.msra.mxu0 0.0
    %689 = vmatpush.msra.mxu0 0.0
    %690 = vmatpush.msra.mxu0 0.0
    %691 = vmatpush.msra.mxu0 0.0
    %692 = vmatpush.msra.mxu0 0.0
    %693 = vmatpush.msra.mxu0 0.0
    %694 = vmatpush.msra.mxu0 0.0
    %695 = vmatpush.msra.mxu0 0.0
    %696 = vmatpush.msra.mxu0 0.0
    %697 = vmatpush.msra.mxu0 0.0
    %698 = vmatpush.msra.mxu0 0.0
    %699 = vmatpush.msra.mxu0 0.0
    %700 = vmatpush.msra.mxu0 0.0
    %701 = vmatpush.msra.mxu0 %v622
    %702 = vmatmul.f32.gmra.mxu0 %v681
    %v703 = vpop.f32.mrf.mxu0
    %v704 = vadd.f32 %v675, %v703
    %705 = vmatmul.f32.gmra.mxu0 %v684
    %v706 = vpop.f32.mrf.mxu0
    %v707 = vadd.f32 %v678, %v706
    %708 = vdwg.mxu0
    %v709 = vld [vmem:[#allocation7 + $0x1c0] sm:$0xff]
    %v710 = vld [vmem:[#allocation7 + $0x1c8] sm:$0xff]
    %v711 = vld [vmem:[#allocation7 + $0x1d0] sm:$0xff]
    %v712 = vld [vmem:[#allocation7 + $0x1d8] sm:$0xff]
    %v713 = vld [vmem:[#allocation8 + $0x50] sm:$0xff]
    %v714 = vld [vmem:[#allocation8 + $0x58] sm:$0xff]
    %715 = vmatpush.msra.mxu0 0.0
    %716 = vmatpush.msra.mxu0 0.0
    %717 = vmatpush.msra.mxu0 0.0
    %718 = vmatpush.msra.mxu0 0.0
    %719 = vmatpush.msra.mxu0 0.0
    %720 = vmatpush.msra.mxu0 0.0
    %721 = vmatpush.msra.mxu0 0.0
    %722 = vmatpush.msra.mxu0 0.0
    %723 = vmatpush.msra.mxu0 0.0
    %724 = vmatpush.msra.mxu0 0.0
    %725 = vmatpush.msra.mxu0 0.0
    %726 = vmatpush.msra.mxu0 0.0
    %727 = vmatpush.msra.mxu0 %v712
    %728 = vmatpush.msra.mxu0 %v711
    %729 = vmatpush.msra.mxu0 %v710
    %730 = vmatpush.msra.mxu0 %v709
    %731 = vmatmul.f32.gmra.mxu0 %v602
    %v732 = vpop.f32.mrf.mxu0
    %v733 = vadd.f32 0.0, %v732
    %734 = vdwg.mxu0
    %v736 = vsel %vm650, %v713, 0
    %v739 = vsel %vm650, %v714, 0
    %741 = vmatpush.msra.mxu0 0.0
    %742 = vmatpush.msra.mxu0 0.0
    %743 = vmatpush.msra.mxu0 0.0
    %744 = vmatpush.msra.mxu0 0.0
    %745 = vmatpush.msra.mxu0 0.0
    %746 = vmatpush.msra.mxu0 0.0
    %747 = vmatpush.msra.mxu0 0.0
    %748 = vmatpush.msra.mxu0 0.0
    %749 = vmatpush.msra.mxu0 0.0
    %750 = vmatpush.msra.mxu0 0.0
    %751 = vmatpush.msra.mxu0 0.0
    %752 = vmatpush.msra.mxu0 0.0
    %753 = vmatpush.msra.mxu0 0.0
    %754 = vmatpush.msra.mxu0 0.0
    %755 = vmatpush.msra.mxu0 0.0
    %756 = vmatpush.msra.mxu0 %v733
    %757 = vmatmul.f32.gmra.mxu0 %v736
    %v758 = vpop.f32.mrf.mxu0
    %v759 = vadd.f32 0.0, %v758
    %760 = vmatmul.f32.gmra.mxu0 %v739
    %v761 = vpop.f32.mrf.mxu0
    %v762 = vadd.f32 0.0, %v761
    %763 = vdwg.mxu0
    %v764 = vadd.f32 %v704, %v759
    %v765 = vadd.f32 %v707, %v762
    %v766 = vld [vmem:[#allocation7 + $0x1e0] sm:$0xff]
    %v767 = vld [vmem:[#allocation7 + $0x1e8] sm:$0xff]
    %v768 = vld [vmem:[#allocation7 + $0x1f0] sm:$0xff]
    %v769 = vld [vmem:[#allocation7 + $0x1f8] sm:$0xff]
    %v770 = vld [vmem:[#allocation8 + $0x60] sm:$0xff]
    %v771 = vld [vmem:[#allocation8 + $0x68] sm:$0xff]
    %772 = vmatpush.msra.mxu0 0.0
    %773 = vmatpush.msra.mxu0 0.0
    %774 = vmatpush.msra.mxu0 0.0
    %775 = vmatpush.msra.mxu0 0.0
    %776 = vmatpush.msra.mxu0 0.0
    %777 = vmatpush.msra.mxu0 0.0
    %778 = vmatpush.msra.mxu0 0.0
    %779 = vmatpush.msra.mxu0 0.0
    %780 = vmatpush.msra.mxu0 0.0
    %781 = vmatpush.msra.mxu0 0.0
    %782 = vmatpush.msra.mxu0 0.0
    %783 = vmatpush.msra.mxu0 0.0
    %784 = vmatpush.msra.mxu0 %v769
    %785 = vmatpush.msra.mxu0 %v768
    %786 = vmatpush.msra.mxu0 %v767
    %787 = vmatpush.msra.mxu0 %v766
    %788 = vmatmul.f32.gmra.mxu0 %v602
    %v789 = vpop.f32.mrf.mxu0
    %v790 = vadd.f32 0.0, %v789
    %791 = vdwg.mxu0
    %v793 = vsel %vm650, %v770, 0
    %v796 = vsel %vm650, %v771, 0
    %798 = vmatpush.msra.mxu0 0.0
    %799 = vmatpush.msra.mxu0 0.0
    %800 = vmatpush.msra.mxu0 0.0
    %801 = vmatpush.msra.mxu0 0.0
    %802 = vmatpush.msra.mxu0 0.0
    %803 = vmatpush.msra.mxu0 0.0
    %804 = vmatpush.msra.mxu0 0.0
    %805 = vmatpush.msra.mxu0 0.0
    %806 = vmatpush.msra.mxu0 0.0
    %807 = vmatpush.msra.mxu0 0.0
    %808 = vmatpush.msra.mxu0 0.0
    %809 = vmatpush.msra.mxu0 0.0
    %810 = vmatpush.msra.mxu0 0.0
    %811 = vmatpush.msra.mxu0 0.0
    %812 = vmatpush.msra.mxu0 0.0
    %813 = vmatpush.msra.mxu0 %v790
    %814 = vmatmul.f32.gmra.mxu0 %v793
    %v815 = vpop.f32.mrf.mxu0
    %v816 = vadd.f32 0.0, %v815
    %817 = vmatmul.f32.gmra.mxu0 %v796
    %v818 = vpop.f32.mrf.mxu0
    %v819 = vadd.f32 0.0, %v818
    %820 = vdwg.mxu0
    %v821 = vadd.f32 %v764, %v816
    %v822 = vadd.f32 %v765, %v819
    %v823 = vld [vmem:[#allocation7 + $0x200] sm:$0xff]
    %v824 = vld [vmem:[#allocation7 + $0x208] sm:$0xff]
    %v825 = vld [vmem:[#allocation7 + $0x210] sm:$0xff]
    %v826 = vld [vmem:[#allocation7 + $0x218] sm:$0xff]
    %v827 = vld [vmem:[#allocation8 + $0x70] sm:$0xff]
    %v828 = vld [vmem:[#allocation8 + $0x78] sm:$0xff]
    %829 = vmatpush.msra.mxu0 0.0
    %830 = vmatpush.msra.mxu0 0.0
    %831 = vmatpush.msra.mxu0 0.0
    %832 = vmatpush.msra.mxu0 0.0
    %833 = vmatpush.msra.mxu0 0.0
    %834 = vmatpush.msra.mxu0 0.0
    %835 = vmatpush.msra.mxu0 0.0
    %836 = vmatpush.msra.mxu0 0.0
    %837 = vmatpush.msra.mxu0 0.0
    %838 = vmatpush.msra.mxu0 0.0
    %839 = vmatpush.msra.mxu0 0.0
    %840 = vmatpush.msra.mxu0 0.0
    %841 = vmatpush.msra.mxu0 %v826
    %842 = vmatpush.msra.mxu0 %v825
    %843 = vmatpush.msra.mxu0 %v824
    %844 = vmatpush.msra.mxu0 %v823
    %845 = vmatmul.f32.gmra.mxu0 %v602
    %v846 = vpop.f32.mrf.mxu0
    %v847 = vadd.f32 0.0, %v846
    %848 = vdwg.mxu0
    %v850 = vsel %vm650, %v827, 0
    %v853 = vsel %vm650, %v828, 0
    %855 = vmatpush.msra.mxu0 0.0
    %856 = vmatpush.msra.mxu0 0.0
    %857 = vmatpush.msra.mxu0 0.0
    %858 = vmatpush.msra.mxu0 0.0
    %859 = vmatpush.msra.mxu0 0.0
    %860 = vmatpush.msra.mxu0 0.0
    %861 = vmatpush.msra.mxu0 0.0
    %862 = vmatpush.msra.mxu0 0.0
    %863 = vmatpush.msra.mxu0 0.0
    %864 = vmatpush.msra.mxu0 0.0
    %865 = vmatpush.msra.mxu0 0.0
    %866 = vmatpush.msra.mxu0 0.0
    %867 = vmatpush.msra.mxu0 0.0
    %868 = vmatpush.msra.mxu0 0.0
    %869 = vmatpush.msra.mxu0 0.0
    %870 = vmatpush.msra.mxu0 %v847
    %871 = vmatmul.f32.gmra.mxu0 %v850
    %v872 = vpop.f32.mrf.mxu0
    %v873 = vadd.f32 0.0, %v872
    %874 = vmatmul.f32.gmra.mxu0 %v853
    %v875 = vpop.f32.mrf.mxu0
    %v876 = vadd.f32 0.0, %v875
    %877 = vdwg.mxu0
    %v878 = vadd.f32 %v821, %v873
    %v879 = vadd.f32 %v822, %v876
    %v880 = vld [vmem:[#allocation7 + $0x220] sm:$0xff]
    %v881 = vld [vmem:[#allocation7 + $0x228] sm:$0xff]
    %v882 = vld [vmem:[#allocation7 + $0x230] sm:$0xff]
    %v883 = vld [vmem:[#allocation7 + $0x238] sm:$0xff]
    %v884 = vld [vmem:[#allocation8 + $0x80] sm:$0xff]
    %v885 = vld [vmem:[#allocation8 + $0x88] sm:$0xff]
    %886 = vmatpush.msra.mxu0 0.0
    %887 = vmatpush.msra.mxu0 0.0
    %888 = vmatpush.msra.mxu0 0.0
    %889 = vmatpush.msra.mxu0 0.0
    %890 = vmatpush.msra.mxu0 0.0
    %891 = vmatpush.msra.mxu0 0.0
    %892 = vmatpush.msra.mxu0 0.0
    %893 = vmatpush.msra.mxu0 0.0
    %894 = vmatpush.msra.mxu0 0.0
    %895 = vmatpush.msra.mxu0 0.0
    %896 = vmatpush.msra.mxu0 0.0
    %897 = vmatpush.msra.mxu0 0.0
    %898 = vmatpush.msra.mxu0 %v883
    %899 = vmatpush.msra.mxu0 %v882
    %900 = vmatpush.msra.mxu0 %v881
    %901 = vmatpush.msra.mxu0 %v880
    %902 = vmatmul.f32.gmra.mxu0 %v602
    %v903 = vpop.f32.mrf.mxu0
    %v904 = vadd.f32 0.0, %v903
    %905 = vdwg.mxu0
    %v907 = vsel %vm650, %v884, 0
    %v910 = vsel %vm650, %v885, 0
    %912 = vmatpush.msra.mxu0 0.0
    %913 = vmatpush.msra.mxu0 0.0
    %914 = vmatpush.msra.mxu0 0.0
    %915 = vmatpush.msra.mxu0 0.0
    %916 = vmatpush.msra.mxu0 0.0
    %917 = vmatpush.msra.mxu0 0.0
    %918 = vmatpush.msra.mxu0 0.0
    %919 = vmatpush.msra.mxu0 0.0
    %920 = vmatpush.msra.mxu0 0.0
    %921 = vmatpush.msra.mxu0 0.0
    %922 = vmatpush.msra.mxu0 0.0
    %923 = vmatpush.msra.mxu0 0.0
    %924 = vmatpush.msra.mxu0 0.0
    %925 = vmatpush.msra.mxu0 0.0
    %926 = vmatpush.msra.mxu0 0.0
    %927 = vmatpush.msra.mxu0 %v904
    %928 = vmatmul.f32.gmra.mxu0 %v907
    %v929 = vpop.f32.mrf.mxu0
    %v930 = vadd.f32 0.0, %v929
    %931 = vmatmul.f32.gmra.mxu0 %v910
    %v932 = vpop.f32.mrf.mxu0
    %v933 = vadd.f32 0.0, %v932
    %934 = vdwg.mxu0
    %v935 = vadd.f32 %v878, %v930
    %v936 = vadd.f32 %v879, %v933
    %v937 = vld [vmem:[%s5 + $0x6] sm:$0x1]
    %v938 = vperm.slane %v937, 0
    %v939 = vadd.f32 %v935, %v938
    %v940 = vadd.f32 %v936, %v938
    %v941 = vld [vmem:[%s5 + $0x7] sm:$0x1]
    %vm942 = vcmp.ge.f32.partialorder %v939, 0.0
    %vm943 = vcmp.ge.f32.partialorder %v940, 0.0
    %v944 = vperm.slane %v941, 0
    %v945 = vmul.f32 %v944, %v939
    %v946 = vmul.f32 %v944, %v940
    %v947 = vsel %vm942, %v939, %v945
    %v948 = vsel %vm943, %v940, %v946
    %v949 = vld [vmem:[#allocation7 + $0x240] sm:$0xff]
    %v950 = vld [vmem:[#allocation7 + $0x248] sm:$0xff]
    %v951 = vld [vmem:[#allocation7 + $0x250] sm:$0xff]
    %v952 = vld [vmem:[#allocation7 + $0x258] sm:$0xff]
    %v953 = vld [vmem:[#allocation8 + $0x90] sm:$0xff]
    %v954 = vld [vmem:[#allocation8 + $0x98] sm:$0xff]
    %v956 = vsel %vm600, %v947, 0
    %v959 = vsel %vm600, %v948, 0
    %961 = vmatpush.msra.mxu0 0.0
    %962 = vmatpush.msra.mxu0 0.0
    %963 = vmatpush.msra.mxu0 0.0
    %964 = vmatpush.msra.mxu0 0.0
    %965 = vmatpush.msra.mxu0 0.0
    %966 = vmatpush.msra.mxu0 0.0
    %967 = vmatpush.msra.mxu0 0.0
    %968 = vmatpush.msra.mxu0 0.0
    %969 = vmatpush.msra.mxu0 0.0
    %970 = vmatpush.msra.mxu0 0.0
    %971 = vmatpush.msra.mxu0 0.0
    %972 = vmatpush.msra.mxu0 0.0
    %973 = vmatpush.msra.mxu0 %v952
    %974 = vmatpush.msra.mxu0 %v951
    %975 = vmatpush.msra.mxu0 %v950
    %976 = vmatpush.msra.mxu0 %v949
    %977 = vmatmul.f32.gmra.mxu0 %v956
    %v978 = vpop.f32.mrf.mxu0
    %v979 = vadd.f32 0.0, %v978
    %980 = vmatmul.f32.gmra.mxu0 %v959
    %v981 = vpop.f32.mrf.mxu0
    %v982 = vadd.f32 0.0, %v981
    %983 = vdwg.mxu0
    %v984 = vld [vmem:[#allocation7 + $0x260] sm:$0xff]
    %v985 = vld [vmem:[#allocation7 + $0x268] sm:$0xff]
    %v986 = vld [vmem:[#allocation7 + $0x270] sm:$0xff]
    %v987 = vld [vmem:[#allocation7 + $0x278] sm:$0xff]
    %v988 = vld [vmem:[#allocation8 + $0xa0] sm:$0xff]
    %v989 = vld [vmem:[#allocation8 + $0xa8] sm:$0xff]
    %990 = vmatpush.msra.mxu0 0.0
    %991 = vmatpush.msra.mxu0 0.0
    %992 = vmatpush.msra.mxu0 0.0
    %993 = vmatpush.msra.mxu0 0.0
    %994 = vmatpush.msra.mxu0 0.0
    %995 = vmatpush.msra.mxu0 0.0
    %996 = vmatpush.msra.mxu0 0.0
    %997 = vmatpush.msra.mxu0 0.0
    %998 = vmatpush.msra.mxu0 0.0
    %999 = vmatpush.msra.mxu0 0.0
    %1000 = vmatpush.msra.mxu0 0.0
    %1001 = vmatpush.msra.mxu0 0.0
    %1002 = vmatpush.msra.mxu0 %v987
    %1003 = vmatpush.msra.mxu0 %v986
    %1004 = vmatpush.msra.mxu0 %v985
    %1005 = vmatpush.msra.mxu0 %v984
    %1006 = vmatmul.f32.gmra.mxu0 %v956
    %v1007 = vpop.f32.mrf.mxu0
    %v1008 = vadd.f32 0.0, %v1007
    %1009 = vmatmul.f32.gmra.mxu0 %v959
    %v1010 = vpop.f32.mrf.mxu0
    %v1011 = vadd.f32 0.0, %v1010
    %1012 = vdwg.mxu0
    %vm1013 = vcmask 130048
    %v1015 = vsel %vm1013, %v988, 0
    %v1018 = vsel %vm1013, %v989, 0
    %1020 = vmatpush.msra.mxu0 0.0
    %1021 = vmatpush.msra.mxu0 0.0
    %1022 = vmatpush.msra.mxu0 0.0
    %1023 = vmatpush.msra.mxu0 0.0
    %1024 = vmatpush.msra.mxu0 0.0
    %1025 = vmatpush.msra.mxu0 0.0
    %1026 = vmatpush.msra.mxu0 0.0
    %1027 = vmatpush.msra.mxu0 0.0
    %1028 = vmatpush.msra.mxu0 0.0
    %1029 = vmatpush.msra.mxu0 0.0
    %1030 = vmatpush.msra.mxu0 0.0
    %1031 = vmatpush.msra.mxu0 0.0
    %1032 = vmatpush.msra.mxu0 0.0
    %1033 = vmatpush.msra.mxu0 0.0
    %1034 = vmatpush.msra.mxu0 %v1011
    %1035 = vmatpush.msra.mxu0 %v1008
    %1036 = vmatmul.f32.gmra.mxu0 %v1015
    %v1037 = vpop.f32.mrf.mxu0
    %v1038 = vadd.f32 0.0, %v1037
    %1039 = vmatmul.f32.gmra.mxu0 %v1018
    %v1040 = vpop.f32.mrf.mxu0
    %v1041 = vadd.f32 0.0, %v1040
    %1042 = vdwg.mxu0
    %v1044 = vsel %vm1013, %v953, 0
    %v1047 = vsel %vm1013, %v954, 0
    %1049 = vmatpush.msra.mxu0 0.0
    %1050 = vmatpush.msra.mxu0 0.0
    %1051 = vmatpush.msra.mxu0 0.0
    %1052 = vmatpush.msra.mxu0 0.0
    %1053 = vmatpush.msra.mxu0 0.0
    %1054 = vmatpush.msra.mxu0 0.0
    %1055 = vmatpush.msra.mxu0 0.0
    %1056 = vmatpush.msra.mxu0 0.0
    %1057 = vmatpush.msra.mxu0 0.0
    %1058 = vmatpush.msra.mxu0 0.0
    %1059 = vmatpush.msra.mxu0 0.0
    %1060 = vmatpush.msra.mxu0 0.0
    %1061 = vmatpush.msra.mxu0 0.0
    %1062 = vmatpush.msra.mxu0 0.0
    %1063 = vmatpush.msra.mxu0 %v982
    %1064 = vmatpush.msra.mxu0 %v979
    %1065 = vmatmul.f32.gmra.mxu0 %v1044
    %v1066 = vpop.f32.mrf.mxu0
    %v1067 = vadd.f32 %v1038, %v1066
    %1068 = vmatmul.f32.gmra.mxu0 %v1047
    %v1069 = vpop.f32.mrf.mxu0
    %v1070 = vadd.f32 %v1041, %v1069
    %1071 = vdwg.mxu0
    %v1072 = vld [vmem:[#allocation7 + $0x280] sm:$0xff]
    %v1073 = vld [vmem:[#allocation7 + $0x288] sm:$0xff]
    %v1074 = vld [vmem:[#allocation7 + $0x290] sm:$0xff]
    %v1075 = vld [vmem:[#allocation7 + $0x298] sm:$0xff]
    %v1076 = vld [vmem:[#allocation8 + $0xb0] sm:$0xff]
    %v1077 = vld [vmem:[#allocation8 + $0xb8] sm:$0xff]
    %1078 = vmatpush.msra.mxu0 0.0
    %1079 = vmatpush.msra.mxu0 0.0
    %1080 = vmatpush.msra.mxu0 0.0
    %1081 = vmatpush.msra.mxu0 0.0
    %1082 = vmatpush.msra.mxu0 0.0
    %1083 = vmatpush.msra.mxu0 0.0
    %1084 = vmatpush.msra.mxu0 0.0
    %1085 = vmatpush.msra.mxu0 0.0
    %1086 = vmatpush.msra.mxu0 0.0
    %1087 = vmatpush.msra.mxu0 0.0
    %1088 = vmatpush.msra.mxu0 0.0
    %1089 = vmatpush.msra.mxu0 0.0
    %1090 = vmatpush.msra.mxu0 %v1075
    %1091 = vmatpush.msra.mxu0 %v1074
    %1092 = vmatpush.msra.mxu0 %v1073
    %1093 = vmatpush.msra.mxu0 %v1072
    %1094 = vmatmul.f32.gmra.mxu0 %v956
    %v1095 = vpop.f32.mrf.mxu0
    %v1096 = vadd.f32 0.0, %v1095
    %1097 = vmatmul.f32.gmra.mxu0 %v959
    %v1098 = vpop.f32.mrf.mxu0
    %v1099 = vadd.f32 0.0, %v1098
    %1100 = vdwg.mxu0
    %v1102 = vsel %vm1013, %v1076, 0
    %v1105 = vsel %vm1013, %v1077, 0
    %1107 = vmatpush.msra.mxu0 0.0
    %1108 = vmatpush.msra.mxu0 0.0
    %1109 = vmatpush.msra.mxu0 0.0
    %1110 = vmatpush.msra.mxu0 0.0
    %1111 = vmatpush.msra.mxu0 0.0
    %1112 = vmatpush.msra.mxu0 0.0
    %1113 = vmatpush.msra.mxu0 0.0
    %1114 = vmatpush.msra.mxu0 0.0
    %1115 = vmatpush.msra.mxu0 0.0
    %1116 = vmatpush.msra.mxu0 0.0
    %1117 = vmatpush.msra.mxu0 0.0
    %1118 = vmatpush.msra.mxu0 0.0
    %1119 = vmatpush.msra.mxu0 0.0
    %1120 = vmatpush.msra.mxu0 0.0
    %1121 = vmatpush.msra.mxu0 %v1099
    %1122 = vmatpush.msra.mxu0 %v1096
    %1123 = vmatmul.f32.gmra.mxu0 %v1102
    %v1124 = vpop.f32.mrf.mxu0
    %v1125 = vadd.f32 0.0, %v1124
    %1126 = vmatmul.f32.gmra.mxu0 %v1105
    %v1127 = vpop.f32.mrf.mxu0
    %v1128 = vadd.f32 0.0, %v1127
    %1129 = vdwg.mxu0
    %v1130 = vadd.f32 %v1067, %v1125
    %v1131 = vadd.f32 %v1070, %v1128
    %v1132 = vld [vmem:[%s5 + $0x8] sm:$0x1]
    %v1133 = vperm.slane %v1132, 0
    %v1134 = vadd.f32 %v1130, %v1133
    %v1135 = vadd.f32 %v1131, %v1133
    %v1136 = vld [vmem:[%s5 + $0x9] sm:$0x1]
    %vm1137 = vcmp.ge.f32.partialorder %v1134, 0.0
    %vm1138 = vcmp.ge.f32.partialorder %v1135, 0.0
    %v1139 = vperm.slane %v1136, 0
    %v1140 = vmul.f32 %v1139, %v1134
    %v1141 = vmul.f32 %v1139, %v1135
    %v1142 = vsel %vm1137, %v1134, %v1140
    %v1143 = vsel %vm1138, %v1135, %v1141
    %1144 = vst.msk [vmem:[%s7] sm:$0xff] %vm308, %v1142
    %1145 = vst.msk [vmem:[%s7 + $0x8] sm:$0xff] %vm308, %v1143
    %vm1146 = vcmask 31751
    %1147 = vst.msk [vmem:[%s7 + $0x9] sm:$0x80] %vm1146, %v1143
    %v1148 = vld [vmem:[#allocation5 + $0x80] sm:$0xff]
    %v1149 = vld [vmem:[#allocation5 + $0x88] sm:$0xff]
    %v1150 = vld [vmem:[#allocation5 + $0x90] sm:$0xff]
    %v1151 = vld [vmem:[#allocation5 + $0x98] sm:$0xff]
    %v1152 = vld [vmem:[#allocation5 + $0xa0] sm:$0xff]
    %v1153 = vld [vmem:[#allocation5 + $0xa8] sm:$0xff]
    %v1154 = vld [vmem:[#allocation5 + $0xb0] sm:$0xff]
    %v1155 = vld [vmem:[#allocation5 + $0xb8] sm:$0xff]
    %v1156 = vld [vmem:[%s5 + $0x1] sm:$0x1]
    %v1157 = vld [vmem:[%s6 + $0x2] sm:$0x1]
    %v1158 = vld [vmem:[%s6 + $0x3] sm:$0x1]
    %v1159 = vmul.f32 %v132, %v1158
    %v1161 = vsel %vm156, %v1159, 0
    %1163 = vmatpush.msra.mxu0 0.0
    %1164 = vmatpush.msra.mxu0 0.0
    %1165 = vmatpush.msra.mxu0 0.0
    %1166 = vmatpush.msra.mxu0 0.0
    %1167 = vmatpush.msra.mxu0 0.0
    %1168 = vmatpush.msra.mxu0 0.0
    %1169 = vmatpush.msra.mxu0 0.0
    %1170 = vmatpush.msra.mxu0 0.0
    %1171 = vmatpush.msra.mxu0 %v140
    %1172 = vmatpush.msra.mxu0 %v139
    %1173 = vmatpush.msra.mxu0 %v138
    %1174 = vmatpush.msra.mxu0 %v137
    %1175 = vmatpush.msra.mxu0 %v136
    %1176 = vmatpush.msra.mxu0 %v135
    %1177 = vmatpush.msra.mxu0 %v134
    %1178 = vmatpush.msra.mxu0 %v133
    %1179 = vmatmul.f32.gmra.mxu0 %v1161
    %v1180 = vpop.f32.mrf.mxu0
    %v1181 = vadd.f32 0.0, %v1180
    %1182 = vdwg.mxu0
    %v1183 = vmul.f32 %v1181, 0.03125
    %v1184 = vmul.f32 %v1157, %v1183
    %v1186 = vsel %vm156, %v132, 0
    %1188 = vmatpush.msra.mxu0 0.0
    %1189 = vmatpush.msra.mxu0 0.0
    %1190 = vmatpush.msra.mxu0 0.0
    %1191 = vmatpush.msra.mxu0 0.0
    %1192 = vmatpush.msra.mxu0 0.0
    %1193 = vmatpush.msra.mxu0 0.0
    %1194 = vmatpush.msra.mxu0 0.0
    %1195 = vmatpush.msra.mxu0 0.0
    %1196 = vmatpush.msra.mxu0 %v1155
    %1197 = vmatpush.msra.mxu0 %v1154
    %1198 = vmatpush.msra.mxu0 %v1153
    %1199 = vmatpush.msra.mxu0 %v1152
    %1200 = vmatpush.msra.mxu0 %v1151
    %1201 = vmatpush.msra.mxu0 %v1150
    %1202 = vmatpush.msra.mxu0 %v1149
    %1203 = vmatpush.msra.mxu0 %v1148
    %1204 = vmatmul.f32.gmra.mxu0 %v1186
    %v1205 = vpop.f32.mrf.mxu0
    %v1206 = vadd.f32 %v1156, %v1205
    %1207 = vdwg.mxu0
    %v1208 = vadd.f32 %v1206, %v1184
    %v1209 = vmul.f32 %v1208, 0.5
    %v1210 = vmul.f32 %v1208, 0.70710677
    %v1211 = vand.u32 2147483647, %v1210
    %v1212 = vmul.f32 %v1211, 0.3275911
    %v1213 = vadd.f32 %v1212, 1.0
    %v1214 = vrcp.pop %v1213
    %v1215 = vmul.f32 %v1213, %v1214
    %v1216 = vsub.f32 1.0, %v1215
    %v1217 = vmul.f32 %v1214, %v1216
    %v1218 = vadd.f32 %v1214, %v1217
    %vm1219 = vweird.f32 %v1213
    %vm1220 = vweird.f32 %v1214
    %vm1221 = vmor %vm1219, %vm1220
    %v1222 = vsel %vm1221, %v1214, %v1218
    %v1223 = vand.u32 2147483647, %v1213
    %vm1224 = vcmp.eq.f32.partialorder %v1223, 8.507059e+37
    %v1225 = vand.u32 %v1213, 2147483648
    %v1226 = vor.u32 1.1754944e-38, %v1225
    %v1227 = vsel %vm1224, %v1226, %v1222
    %v1228 = vmul.f32 1.0, %v1227
    %v1229 = vmul.f32 %v1228, 1.0614054
    %v1230 = vadd.f32 %v1229, -1.4531521
    %v1231 = vmul.f32 %v1228, %v1230
    %v1232 = vadd.f32 %v1231, 1.4214138
    %v1233 = vmul.f32 %v1228, %v1232
    %v1234 = vadd.f32 %v1233, -0.28449672
    %v1235 = vmul.f32 %v1228, %v1234
    %v1236 = vadd.f32 %v1235, 0.2548296
    %v1237 = vmul.f32 %v1228, %v1236
    %v1238 = vsub.f32 0.0, %v1211
    %v1239 = vmul.f32 %v1238, %v1211
    %v1240 = vmul.f32 %v1239, 1.442695
    %v1241 = vpow.pop %v1240
    %v1242 = vmul.f32 %v1237, %v1241
    %v1243 = vsub.f32 1.0, %v1242
    %vm1244 = vcmp.ge.f32.partialorder %v1210, 0.0
    %v1245 = vsub.f32 0.0, %v1243
    %v1246 = vsel %vm1244, %v1243, %v1245
    %v1247 = vadd.f32 %v1246, 1.0
    %v1248 = vmul.f32 %v1209, %v1247
    %v1249 = vld [vmem:[%s6 + $0x4] sm:$0x1]
    %v1250 = vadd.f32 %v1248, %v1249
    %v1251 = vld [vmem:[#allocation5 + $0xc0] sm:$0xff]
    %v1252 = vld [vmem:[#allocation5 + $0xc8] sm:$0xff]
    %v1253 = vld [vmem:[#allocation5 + $0xd0] sm:$0xff]
    %v1254 = vld [vmem:[#allocation5 + $0xd8] sm:$0xff]
    %v1255 = vld [vmem:[#allocation5 + $0xe0] sm:$0xff]
    %v1256 = vld [vmem:[#allocation5 + $0xe8] sm:$0xff]
    %v1257 = vld [vmem:[#allocation5 + $0xf0] sm:$0xff]
    %v1258 = vld [vmem:[#allocation5 + $0xf8] sm:$0xff]
    %v1259 = vld [vmem:[%s5 + $0x2] sm:$0x1]
    %v1261 = vsel %vm156, %v1250, 0
    %1263 = vmatpush.msra.mxu0 0.0
    %1264 = vmatpush.msra.mxu0 0.0
    %1265 = vmatpush.msra.mxu0 0.0
    %1266 = vmatpush.msra.mxu0 0.0
    %1267 = vmatpush.msra.mxu0 0.0
    %1268 = vmatpush.msra.mxu0 0.0
    %1269 = vmatpush.msra.mxu0 0.0
    %1270 = vmatpush.msra.mxu0 0.0
    %1271 = vmatpush.msra.mxu0 %v1258
    %1272 = vmatpush.msra.mxu0 %v1257
    %1273 = vmatpush.msra.mxu0 %v1256
    %1274 = vmatpush.msra.mxu0 %v1255
    %1275 = vmatpush.msra.mxu0 %v1254
    %1276 = vmatpush.msra.mxu0 %v1253
    %1277 = vmatpush.msra.mxu0 %v1252
    %1278 = vmatpush.msra.mxu0 %v1251
    %1279 = vmatmul.f32.gmra.mxu0 %v1261
    %v1280 = vpop.f32.mrf.mxu0
    %v1281 = vadd.f32 %v1259, %v1280
    %1282 = vdwg.mxu0
    %v1283 = vmul.f32 %v1281, 0.5
    %v1284 = vmul.f32 %v1281, 0.70710677
    %v1285 = vand.u32 2147483647, %v1284
    %v1286 = vmul.f32 %v1285, 0.3275911
    %v1287 = vadd.f32 %v1286, 1.0
    %v1288 = vrcp.pop %v1287
    %v1289 = vmul.f32 %v1287, %v1288
    %v1290 = vsub.f32 1.0, %v1289
    %v1291 = vmul.f32 %v1288, %v1290
    %v1292 = vadd.f32 %v1288, %v1291
    %vm1293 = vweird.f32 %v1287
    %vm1294 = vweird.f32 %v1288
    %vm1295 = vmor %vm1293, %vm1294
    %v1296 = vsel %vm1295, %v1288, %v1292
    %v1297 = vand.u32 2147483647, %v1287
    %vm1298 = vcmp.eq.f32.partialorder %v1297, 8.507059e+37
    %v1299 = vand.u32 %v1287, 2147483648
    %v1300 = vor.u32 1.1754944e-38, %v1299
    %v1301 = vsel %vm1298, %v1300, %v1296
    %v1302 = vmul.f32 1.0, %v1301
    %v1303 = vmul.f32 %v1302, 1.0614054
    %v1304 = vadd.f32 %v1303, -1.4531521
    %v1305 = vmul.f32 %v1302, %v1304
    %v1306 = vadd.f32 %v1305, 1.4214138
    %v1307 = vmul.f32 %v1302, %v1306
    %v1308 = vadd.f32 %v1307, -0.28449672
    %v1309 = vmul.f32 %v1302, %v1308
    %v1310 = vadd.f32 %v1309, 0.2548296
    %v1311 = vmul.f32 %v1302, %v1310
    %v1312 = vsub.f32 0.0, %v1285
    %v1313 = vmul.f32 %v1312, %v1285
    %v1314 = vmul.f32 %v1313, 1.442695
    %v1315 = vpow.pop %v1314
    %v1316 = vmul.f32 %v1311, %v1315
    %v1317 = vsub.f32 1.0, %v1316
    %vm1318 = vcmp.ge.f32.partialorder %v1284, 0.0
    %v1319 = vsub.f32 0.0, %v1317
    %v1320 = vsel %vm1318, %v1317, %v1319
    %v1321 = vadd.f32 %v1320, 1.0
    %v1322 = vmul.f32 %v1283, %v1321
    %v1323 = vld [vmem:[#allocation5 + $0x100] sm:$0xff]
    %v1324 = vld [vmem:[#allocation5 + $0x108] sm:$0xff]
    %v1325 = vld [vmem:[#allocation5 + $0x110] sm:$0xff]
    %v1326 = vld [vmem:[#allocation5 + $0x118] sm:$0xff]
    %v1327 = vld [vmem:[%s5 + $0x3] sm:$0x1]
    %v1329 = vsel %vm600, %v1322, 0
    %1331 = vmatpush.msra.mxu0 0.0
    %1332 = vmatpush.msra.mxu0 0.0
    %1333 = vmatpush.msra.mxu0 0.0
    %1334 = vmatpush.msra.mxu0 0.0
    %1335 = vmatpush.msra.mxu0 0.0
    %1336 = vmatpush.msra.mxu0 0.0
    %1337 = vmatpush.msra.mxu0 0.0
    %1338 = vmatpush.msra.mxu0 0.0
    %1339 = vmatpush.msra.mxu0 0.0
    %1340 = vmatpush.msra.mxu0 0.0
    %1341 = vmatpush.msra.mxu0 0.0
    %1342 = vmatpush.msra.mxu0 0.0
    %1343 = vmatpush.msra.mxu0 %v1326
    %1344 = vmatpush.msra.mxu0 %v1325
    %1345 = vmatpush.msra.mxu0 %v1324
    %1346 = vmatpush.msra.mxu0 %v1323
    %1347 = vmatmul.f32.gmra.mxu0 %v1329
    %v1348 = vpop.f32.mrf.mxu0
    %v1349 = vadd.f32 %v1327, %v1348
    %1350 = vdwg.mxu0
    %vm1351 = vcmask 8192
    %1352 = vst.msk [vmem:[#allocation10] sm:$0x1] %vm1351, %v1349
    // Predicated region
    $region46: #{forward.5} parent=1 // pred_check
      _
    $region47: #{forward.5} parent=1 // pred_check_branch
      %1354 = sbr.rel (0) target = $region49
    $region48: #{forward.5} parent=1 // pred_region
      _
    $region49: #{forward.5} parent=1 // pred_fallthru
      _
    // Predicated region
    $region50: #{forward.5} parent=1 // pred_check
      _
    $region51: #{forward.5} parent=1 // pred_check_branch
      %1356 = sbr.rel (0) target = $region53
    $region52: #{forward.5} parent=1 // pred_region
      %1358 = vsyncadd [#allocation4], 0
      %s1360 = sshll.u32 [#allocation10], 4
      %s1361 = int_to_ptr.vmem [resolvable:$true] %s1360
      %s1362 = sshll.u32 %s8, 4
      %s1363 = int_to_ptr.hbm [resolvable:$true] %s1362
      %1365 = dma.vmem_to_hbm [thread:$0]  %s1361, 16, %s1363, [#allocation4]
    $region53: #{forward.5} parent=1 // pred_fallthru
      _
    // Predicated region
    $region54: #{forward.5} parent=1 // pred_check
      _
    $region55: #{forward.5} parent=1 // pred_check_branch
      %1367 = sbr.rel (0) target = $region57
    $region56: #{forward.5} parent=1 // pred_region
      _
    $region57: #{forward.5} parent=1 // pred_fallthru
      _
    // Predicated region
    $region58: #{forward.5} parent=1 // pred_check
      _
    $region59: #{forward.5} parent=1 // pred_check_branch
      %1369 = sbr.rel (0) target = $region61
    $region60: #{forward.5} parent=1 // pred_region
      %1371 = dma.done [#allocation4], 16
    $region61: #{forward.5} parent=1 // pred_fallthru
      _
    %1372 = vsyncpa [#allocation3], 1
    %1373 = vsyncpa [#allocation6], 1
    %1374 = vsyncpa [#allocation9], 1
    %1375 = vsyncpa [#allocation4], 1

// kernel: forward.4
$region0: #{forward.4}
  #allocation0 [shape = 'u32[]', space=smem, size = 0x4, offset = 0x4, fixed_abs, tag = 'smem constant byte address 0x4 - core index']
  #allocation1 [shape = 'u32[72,128]{1,0:T(1,128)}', space=vmem, size = 0x9000, scoped, tag = 'internal scratch']
  %s0 = inlined_call_operand.vmem [shape: f32[6,128], index: 0, kind: input, shape index: {}, may-alias: {0,6}]
  %s1 = inlined_call_operand.hbm [shape: f32[385,512], index: 1, kind: input, shape index: {}]
  %s2 = inlined_call_operand.hbm [shape: f32[384,128], index: 2, kind: input, shape index: {}]
  %s3 = inlined_call_operand.vmem [shape: f32[5,128], index: 3, kind: input, shape index: {}]
  %s4 = inlined_call_operand.vmem [shape: f32[2,128], index: 4, kind: input, shape index: {}]
  %s5 = inlined_call_operand.vmem [shape: f32[6,6], index: 5, kind: input, shape index: {}]
  %s6 = inlined_call_operand.vmem [shape: f32[6,128], index: 6, kind: output, shape index: {}, may-alias: {0,6}]
  %s7 = sld [smem:[#allocation0]]
  $region42: #{forward.4} parent=0
    _
  %s9 = ssub.s32 1, %s7
  %s10 = scalar_select 0, %s9, %s7
  $region1: #{forward.4} parent=0
    #allocation2 [shape = 'u8[802816]{0}', space=vmem, size = 0xc4000, scoped, tag = 'input window, operand 1, single buffered']
    #allocation3 [shape = 's32[1]{0}', space=sflag, size = 0x4, scoped, tag = 'scoped memory for forward.4']
    #allocation4 [shape = 'u8[196608]{0}', space=vmem, size = 0x30000, scoped, tag = 'input window, operand 2, single buffered']
    #allocation5 [shape = 's32[1]{0}', space=sflag, size = 0x4, scoped, tag = 'scoped memory for forward.4']
    %11 = vsyncpa [#allocation3], 0
    %12 = vsyncpa [#allocation5], 0
    // Predicated region
    $region2: #{forward.4} parent=1 // pred_check
      _
    $region3: #{forward.4} parent=1 // pred_check_branch
      %14 = sbr.rel (0) target = $region5
    $region4: #{forward.4} parent=1 // pred_region
      _
    $region5: #{forward.4} parent=1 // pred_fallthru
      _
    // Predicated region
    $region6: #{forward.4} parent=1 // pred_check
      _
    $region7: #{forward.4} parent=1 // pred_check_branch
      %16 = sbr.rel (0) target = $region9
    $region8: #{forward.4} parent=1 // pred_region
      %18 = vsyncadd [#allocation3], 0
      %s19 = sshll.u32 %s1, 4
      %s20 = int_to_ptr.hbm [resolvable:$true] %s19
      %s21 = sshll.u32 [#allocation2], 4
      %s22 = int_to_ptr.vmem [resolvable:$true] %s21
      %27 = dma.hbm_to_vmem [thread:$0]  %s20, 25088, %s22, [#allocation3], 512, 512, 32
    $region9: #{forward.4} parent=1 // pred_fallthru
      _
    // Predicated region
    $region10: #{forward.4} parent=1 // pred_check
      _
    $region11: #{forward.4} parent=1 // pred_check_branch
      %29 = sbr.rel (0) target = $region13
    $region12: #{forward.4} parent=1 // pred_region
      %31 = vsyncadd [#allocation5], 0
      %s32 = sshll.u32 %s2, 4
      %s33 = int_to_ptr.hbm [resolvable:$true] %s32
      %s34 = sshll.u32 [#allocation4], 4
      %s35 = int_to_ptr.vmem [resolvable:$true] %s34
      %40 = dma.hbm_to_vmem [thread:$0]  %s33, 6144, %s35, [#allocation5], 128, 128, 8
    $region13: #{forward.4} parent=1 // pred_fallthru
      _
    // Predicated region
    $region14: #{forward.4} parent=1 // pred_check
      _
    $region15: #{forward.4} parent=1 // pred_check_branch
      %42 = sbr.rel (0) target = $region17
    $region16: #{forward.4} parent=1 // pred_region
      _
    $region17: #{forward.4} parent=1 // pred_fallthru
      _
    // Predicated region
    $region18: #{forward.4} parent=1 // pred_check
      _
    $region19: #{forward.4} parent=1 // pred_check_branch
      %44 = sbr.rel (0) target = $region21
    $region20: #{forward.4} parent=1 // pred_region
      _
    $region21: #{forward.4} parent=1 // pred_fallthru
      _
    // Predicated region
    $region22: #{forward.4} parent=1 // pred_check
      _
    $region23: #{forward.4} parent=1 // pred_check_branch
      %46 = sbr.rel (0) target = $region25
    $region24: #{forward.4} parent=1 // pred_region
      _
    $region25: #{forward.4} parent=1 // pred_fallthru
      _
    // Predicated region
    $region26: #{forward.4} parent=1 // pred_check
      _
    $region27: #{forward.4} parent=1 // pred_check_branch
      %48 = sbr.rel (0) target = $region29
    $region28: #{forward.4} parent=1 // pred_region
      %50 = dma.done [#allocation3], 25088
    $region29: #{forward.4} parent=1 // pred_fallthru
      _
    // Predicated region
    $region30: #{forward.4} parent=1 // pred_check
      _
    $region31: #{forward.4} parent=1 // pred_check_branch
      %52 = sbr.rel (0) target = $region33
    $region32: #{forward.4} parent=1 // pred_region
      %54 = dma.done [#allocation5], 6144
    $region33: #{forward.4} parent=1 // pred_fallthru
      _
    %v55 = vld [vmem:[%s0] sm:$0x3f]
    %v56 = vld [vmem:[%s5] sm:$0x3f]
    %vm57 = vcmask 48128
    %v59 = vsel %vm57, %v56, 0
    %vm61 = vcmask 1045504
    %v63 = vsel %vm61, %v55, 0
    %65 = vmatpush.msra.mxu0 0.0
    %66 = vmatpush.msra.mxu0 0.0
    %67 = vmatpush.msra.mxu0 0.0
    %68 = vmatpush.msra.mxu0 0.0
    %69 = vmatpush.msra.mxu0 0.0
    %70 = vmatpush.msra.mxu0 0.0
    %71 = vmatpush.msra.mxu0 0.0
    %72 = vmatpush.msra.mxu0 0.0
    %73 = vmatpush.msra.mxu0 0.0
    %74 = vmatpush.msra.mxu0 0.0
    %75 = vmatpush.msra.mxu0 0.0
    %76 = vmatpush.msra.mxu0 0.0
    %77 = vmatpush.msra.mxu0 0.0
    %78 = vmatpush.msra.mxu0 0.0
    %79 = vmatpush.msra.mxu0 0.0
    %80 = vmatpush.msra.mxu0 %v63
    %81 = vmatmul.f32.gmra.mxu0 %v59
    %v82 = vpop.f32.mrf.mxu0
    %v83 = vadd.f32 0.0, %v82
    %84 = vdwg.mxu0
    %v85 = vld [vmem:[#allocation2] sm:$0xff]
    %v86 = vld [vmem:[#allocation2 + $0x8] sm:$0xff]
    %v87 = vld [vmem:[#allocation2 + $0x10] sm:$0xff]
    %v88 = vld [vmem:[#allocation2 + $0x18] sm:$0xff]
    %v89 = vld [vmem:[#allocation2 + $0x20] sm:$0xff]
    %v90 = vld [vmem:[#allocation2 + $0x28] sm:$0xff]
    %v91 = vld [vmem:[#allocation2 + $0x30] sm:$0xff]
    %v92 = vld [vmem:[#allocation2 + $0x38] sm:$0xff]
    %v93 = vld [vmem:[#allocation2 + $0x40] sm:$0xff]
    %v94 = vld [vmem:[#allocation2 + $0x48] sm:$0xff]
    %v95 = vld [vmem:[#allocation2 + $0x50] sm:$0xff]
    %v96 = vld [vmem:[#allocation2 + $0x58] sm:$0xff]
    %v97 = vld [vmem:[#allocation2 + $0x60] sm:$0xff]
    %v98 = vld [vmem:[#allocation2 + $0x68] sm:$0xff]
    %v99 = vld [vmem:[#allocation2 + $0x70] sm:$0xff]
    %v100 = vld [vmem:[#allocation2 + $0x78] sm:$0xff]
    %v101 = vld [vmem:[#allocation2 + $0x80] sm:$0xff]
    %v102 = vld [vmem:[#allocation2 + $0x88] sm:$0xff]
    %v103 = vld [vmem:[#allocation2 + $0x90] sm:$0xff]
    %v104 = vld [vmem:[#allocation2 + $0x98] sm:$0xff]
    %v105 = vld [vmem:[#allocation2 + $0xa0] sm:$0xff]
    %v106 = vld [vmem:[#allocation2 + $0xa8] sm:$0xff]
    %v107 = vld [vmem:[#allocation2 + $0xb0] sm:$0xff]
    %v108 = vld [vmem:[#allocation2 + $0xb8] sm:$0xff]
    %v109 = vld [vmem:[#allocation2 + $0xc0] sm:$0xff]
    %v110 = vld [vmem:[#allocation2 + $0xc8] sm:$0xff]
    %v111 = vld [vmem:[#allocation2 + $0xd0] sm:$0xff]
    %v112 = vld [vmem:[#allocation2 + $0xd8] sm:$0xff]
    %v113 = vld [vmem:[#allocation2 + $0xe0] sm:$0xff]
    %v114 = vld [vmem:[#allocation2 + $0xe8] sm:$0xff]
    %v115 = vld [vmem:[#allocation2 + $0xf0] sm:$0xff]
    %v116 = vld [vmem:[#allocation2 + $0xf8] sm:$0xff]
    %v117 = vld [vmem:[#allocation2 + $0x100] sm:$0xff]
    %v118 = vld [vmem:[#allocation2 + $0x108] sm:$0xff]
    %v119 = vld [vmem:[#allocation2 + $0x110] sm:$0xff]
    %v120 = vld [vmem:[#allocation2 + $0x118] sm:$0xff]
    %v121 = vld [vmem:[#allocation2 + $0x120] sm:$0xff]
    %v122 = vld [vmem:[#allocation2 + $0x128] sm:$0xff]
    %v123 = vld [vmem:[#allocation2 + $0x130] sm:$0xff]
    %v124 = vld [vmem:[#allocation2 + $0x138] sm:$0xff]
    %v125 = vld [vmem:[#allocation2 + $0x140] sm:$0xff]
    %v126 = vld [vmem:[#allocation2 + $0x148] sm:$0xff]
    %v127 = vld [vmem:[#allocation2 + $0x150] sm:$0xff]
    %v128 = vld [vmem:[#allocation2 + $0x158] sm:$0xff]
    %v129 = vld [vmem:[#allocation2 + $0x160] sm:$0xff]
    %v130 = vld [vmem:[#allocation2 + $0x168] sm:$0xff]
    %v131 = vld [vmem:[#allocation2 + $0x170] sm:$0xff]
    %v132 = vld [vmem:[#allocation2 + $0x178] sm:$0xff]
    %v133 = vld [vmem:[#allocation2 + $0x180] sm:$0xff]
    %v134 = vld [vmem:[#allocation2 + $0x188] sm:$0xff]
    %v135 = vld [vmem:[#allocation2 + $0x190] sm:$0xff]
    %v136 = vld [vmem:[#allocation2 + $0x198] sm:$0xff]
    %v137 = vld [vmem:[#allocation2 + $0x1a0] sm:$0xff]
    %v138 = vld [vmem:[#allocation2 + $0x1a8] sm:$0xff]
    %v139 = vld [vmem:[#allocation2 + $0x1b0] sm:$0xff]
    %v140 = vld [vmem:[#allocation2 + $0x1b8] sm:$0xff]
    %v141 = vld [vmem:[#allocation2 + $0x1c0] sm:$0xff]
    %v142 = vld [vmem:[#allocation2 + $0x1c8] sm:$0xff]
    %v143 = vld [vmem:[#allocation2 + $0x1d0] sm:$0xff]
    %v144 = vld [vmem:[#allocation2 + $0x1d8] sm:$0xff]
    %v145 = vld [vmem:[#allocation2 + $0x1e0] sm:$0xff]
    %v146 = vld [vmem:[#allocation2 + $0x1e8] sm:$0xff]
    %v147 = vld [vmem:[#allocation2 + $0x1f0] sm:$0xff]
    %v148 = vld [vmem:[#allocation2 + $0x1f8] sm:$0xff]
    %v149 = vld [vmem:[#allocation2 + $0x200] sm:$0xff]
    %v150 = vld [vmem:[#allocation2 + $0x208] sm:$0xff]
    %v151 = vld [vmem:[#allocation2 + $0x210] sm:$0xff]
    %v152 = vld [vmem:[#allocation2 + $0x218] sm:$0xff]
    %v153 = vld [vmem:[#allocation2 + $0x220] sm:$0xff]
    %v154 = vld [vmem:[#allocation2 + $0x228] sm:$0xff]
    %v155 = vld [vmem:[#allocation2 + $0x230] sm:$0xff]
    %v156 = vld [vmem:[#allocation2 + $0x238] sm:$0xff]
    %v157 = vld [vmem:[#allocation2 + $0x240] sm:$0xff]
    %v158 = vld [vmem:[#allocation2 + $0x248] sm:$0xff]
    %v159 = vld [vmem:[#allocation2 + $0x250] sm:$0xff]
    %v160 = vld [vmem:[#allocation2 + $0x258] sm:$0xff]
    %v161 = vld [vmem:[#allocation2 + $0x260] sm:$0xff]
    %v162 = vld [vmem:[#allocation2 + $0x268] sm:$0xff]
    %v163 = vld [vmem:[#allocation2 + $0x270] sm:$0xff]
    %v164 = vld [vmem:[#allocation2 + $0x278] sm:$0xff]
    %v165 = vld [vmem:[#allocation2 + $0x280] sm:$0xff]
    %v166 = vld [vmem:[#allocation2 + $0x288] sm:$0xff]
    %v167 = vld [vmem:[#allocation2 + $0x290] sm:$0xff]
    %v168 = vld [vmem:[#allocation2 + $0x298] sm:$0xff]
    %v169 = vld [vmem:[#allocation2 + $0x2a0] sm:$0xff]
    %v170 = vld [vmem:[#allocation2 + $0x2a8] sm:$0xff]
    %v171 = vld [vmem:[#allocation2 + $0x2b0] sm:$0xff]
    %v172 = vld [vmem:[#allocation2 + $0x2b8] sm:$0xff]
    %v173 = vld [vmem:[#allocation2 + $0x2c0] sm:$0xff]
    %v174 = vld [vmem:[#allocation2 + $0x2c8] sm:$0xff]
    %v175 = vld [vmem:[#allocation2 + $0x2d0] sm:$0xff]
    %v176 = vld [vmem:[#allocation2 + $0x2d8] sm:$0xff]
    %v177 = vld [vmem:[#allocation2 + $0x2e0] sm:$0xff]
    %v178 = vld [vmem:[#allocation2 + $0x2e8] sm:$0xff]
    %v179 = vld [vmem:[#allocation2 + $0x2f0] sm:$0xff]
    %v180 = vld [vmem:[#allocation2 + $0x2f8] sm:$0xff]
    %v181 = vld [vmem:[#allocation2 + $0x300] sm:$0xff]
    %v182 = vld [vmem:[#allocation2 + $0x308] sm:$0xff]
    %v183 = vld [vmem:[#allocation2 + $0x310] sm:$0xff]
    %v184 = vld [vmem:[#allocation2 + $0x318] sm:$0xff]
    %v185 = vld [vmem:[#allocation2 + $0x320] sm:$0xff]
    %v186 = vld [vmem:[#allocation2 + $0x328] sm:$0xff]
    %v187 = vld [vmem:[#allocation2 + $0x330] sm:$0xff]
    %v188 = vld [vmem:[#allocation2 + $0x338] sm:$0xff]
    %v189 = vld [vmem:[#allocation2 + $0x340] sm:$0xff]
    %v190 = vld [vmem:[#allocation2 + $0x348] sm:$0xff]
    %v191 = vld [vmem:[#allocation2 + $0x350] sm:$0xff]
    %v192 = vld [vmem:[#allocation2 + $0x358] sm:$0xff]
    %v193 = vld [vmem:[#allocation2 + $0x360] sm:$0xff]
    %v194 = vld [vmem:[#allocation2 + $0x368] sm:$0xff]
    %v195 = vld [vmem:[#allocation2 + $0x370] sm:$0xff]
    %v196 = vld [vmem:[#allocation2 + $0x378] sm:$0xff]
    %v197 = vld [vmem:[#allocation2 + $0x380] sm:$0xff]
    %v198 = vld [vmem:[#allocation2 + $0x388] sm:$0xff]
    %v199 = vld [vmem:[#allocation2 + $0x390] sm:$0xff]
    %v200 = vld [vmem:[#allocation2 + $0x398] sm:$0xff]
    %v201 = vld [vmem:[#allocation2 + $0x3a0] sm:$0xff]
    %v202 = vld [vmem:[#allocation2 + $0x3a8] sm:$0xff]
    %v203 = vld [vmem:[#allocation2 + $0x3b0] sm:$0xff]
    %v204 = vld [vmem:[#allocation2 + $0x3b8] sm:$0xff]
    %v205 = vld [vmem:[#allocation2 + $0x3c0] sm:$0xff]
    %v206 = vld [vmem:[#allocation2 + $0x3c8] sm:$0xff]
    %v207 = vld [vmem:[#allocation2 + $0x3d0] sm:$0xff]
    %v208 = vld [vmem:[#allocation2 + $0x3d8] sm:$0xff]
    %v209 = vld [vmem:[#allocation2 + $0x3e0] sm:$0xff]
    %v210 = vld [vmem:[#allocation2 + $0x3e8] sm:$0xff]
    %v211 = vld [vmem:[#allocation2 + $0x3f0] sm:$0xff]
    %v212 = vld [vmem:[#allocation2 + $0x3f8] sm:$0xff]
    %v213 = vld [vmem:[#allocation2 + $0x400] sm:$0xff]
    %v214 = vld [vmem:[#allocation2 + $0x408] sm:$0xff]
    %v215 = vld [vmem:[#allocation2 + $0x410] sm:$0xff]
    %v216 = vld [vmem:[#allocation2 + $0x418] sm:$0xff]
    %v217 = vld [vmem:[#allocation2 + $0x420] sm:$0xff]
    %v218 = vld [vmem:[#allocation2 + $0x428] sm:$0xff]
    %v219 = vld [vmem:[#allocation2 + $0x430] sm:$0xff]
    %v220 = vld [vmem:[#allocation2 + $0x438] sm:$0xff]
    %v221 = vld [vmem:[#allocation2 + $0x440] sm:$0xff]
    %v222 = vld [vmem:[#allocation2 + $0x448] sm:$0xff]
    %v223 = vld [vmem:[#allocation2 + $0x450] sm:$0xff]
    %v224 = vld [vmem:[#allocation2 + $0x458] sm:$0xff]
    %v225 = vld [vmem:[#allocation2 + $0x460] sm:$0xff]
    %v226 = vld [vmem:[#allocation2 + $0x468] sm:$0xff]
    %v227 = vld [vmem:[#allocation2 + $0x470] sm:$0xff]
    %v228 = vld [vmem:[#allocation2 + $0x478] sm:$0xff]
    %v229 = vld [vmem:[#allocation2 + $0x480] sm:$0xff]
    %v230 = vld [vmem:[#allocation2 + $0x488] sm:$0xff]
    %v231 = vld [vmem:[#allocation2 + $0x490] sm:$0xff]
    %v232 = vld [vmem:[#allocation2 + $0x498] sm:$0xff]
    %v233 = vld [vmem:[#allocation2 + $0x4a0] sm:$0xff]
    %v234 = vld [vmem:[#allocation2 + $0x4a8] sm:$0xff]
    %v235 = vld [vmem:[#allocation2 + $0x4b0] sm:$0xff]
    %v236 = vld [vmem:[#allocation2 + $0x4b8] sm:$0xff]
    %v237 = vld [vmem:[#allocation2 + $0x4c0] sm:$0xff]
    %v238 = vld [vmem:[#allocation2 + $0x4c8] sm:$0xff]
    %v239 = vld [vmem:[#allocation2 + $0x4d0] sm:$0xff]
    %v240 = vld [vmem:[#allocation2 + $0x4d8] sm:$0xff]
    %v241 = vld [vmem:[#allocation2 + $0x4e0] sm:$0xff]
    %v242 = vld [vmem:[#allocation2 + $0x4e8] sm:$0xff]
    %v243 = vld [vmem:[#allocation2 + $0x4f0] sm:$0xff]
    %v244 = vld [vmem:[#allocation2 + $0x4f8] sm:$0xff]
    %v245 = vld [vmem:[#allocation2 + $0x500] sm:$0xff]
    %v246 = vld [vmem:[#allocation2 + $0x508] sm:$0xff]
    %v247 = vld [vmem:[#allocation2 + $0x510] sm:$0xff]
    %v248 = vld [vmem:[#allocation2 + $0x518] sm:$0xff]
    %v249 = vld [vmem:[#allocation2 + $0x520] sm:$0xff]
    %v250 = vld [vmem:[#allocation2 + $0x528] sm:$0xff]
    %v251 = vld [vmem:[#allocation2 + $0x530] sm:$0xff]
    %v252 = vld [vmem:[#allocation2 + $0x538] sm:$0xff]
    %v253 = vld [vmem:[#allocation2 + $0x540] sm:$0xff]
    %v254 = vld [vmem:[#allocation2 + $0x548] sm:$0xff]
    %v255 = vld [vmem:[#allocation2 + $0x550] sm:$0xff]
    %v256 = vld [vmem:[#allocation2 + $0x558] sm:$0xff]
    %v257 = vld [vmem:[#allocation2 + $0x560] sm:$0xff]
    %v258 = vld [vmem:[#allocation2 + $0x568] sm:$0xff]
    %v259 = vld [vmem:[#allocation2 + $0x570] sm:$0xff]
    %v260 = vld [vmem:[#allocation2 + $0x578] sm:$0xff]
    %v261 = vld [vmem:[#allocation2 + $0x580] sm:$0xff]
    %v262 = vld [vmem:[#allocation2 + $0x588] sm:$0xff]
    %v263 = vld [vmem:[#allocation2 + $0x590] sm:$0xff]
    %v264 = vld [vmem:[#allocation2 + $0x598] sm:$0xff]
    %v265 = vld [vmem:[#allocation2 + $0x5a0] sm:$0xff]
    %v266 = vld [vmem:[#allocation2 + $0x5a8] sm:$0xff]
    %v267 = vld [vmem:[#allocation2 + $0x5b0] sm:$0xff]
    %v268 = vld [vmem:[#allocation2 + $0x5b8] sm:$0xff]
    %v269 = vld [vmem:[#allocation2 + $0x5c0] sm:$0xff]
    %v270 = vld [vmem:[#allocation2 + $0x5c8] sm:$0xff]
    %v271 = vld [vmem:[#allocation2 + $0x5d0] sm:$0xff]
    %v272 = vld [vmem:[#allocation2 + $0x5d8] sm:$0xff]
    %v273 = vld [vmem:[#allocation2 + $0x5e0] sm:$0xff]
    %v274 = vld [vmem:[#allocation2 + $0x5e8] sm:$0xff]
    %v275 = vld [vmem:[#allocation2 + $0x5f0] sm:$0xff]
    %v276 = vld [vmem:[#allocation2 + $0x5f8] sm:$0xff]
    %s277 = scalar_lea.vmem [#allocation2], 1536
    %v278 = vld [vmem:[%s277] ss:$8 sm:$0xf]
    %279 = vmatpush.msra.mxu0 %v209
    %280 = vmatpush.msra.mxu0 %v205
    %281 = vmatpush.msra.mxu0 %v201
    %282 = vmatpush.msra.mxu0 %v197
    %283 = vmatpush.msra.mxu0 %v193
    %284 = vmatpush.msra.mxu0 %v189
    %285 = vmatpush.msra.mxu0 %v185
    %286 = vmatpush.msra.mxu0 %v181
    %287 = vmatpush.msra.mxu0 %v177
    %288 = vmatpush.msra.mxu0 %v173
    %289 = vmatpush.msra.mxu0 %v169
    %290 = vmatpush.msra.mxu0 %v165
    %291 = vmatpush.msra.mxu0 %v161
    %292 = vmatpush.msra.mxu0 %v157
    %293 = vmatpush.msra.mxu0 %v153
    %294 = vmatpush.msra.mxu0 %v149
    %295 = vmatmul.f32.gmra.mxu0 %v83
    %v296 = vpop.f32.mrf.mxu0
    %v297 = vadd.f32 0.0, %v296
    %298 = vdwg.mxu0
    %299 = vmatpush.msra.mxu0 %v210
    %300 = vmatpush.msra.mxu0 %v206
    %301 = vmatpush.msra.mxu0 %v202
    %302 = vmatpush.msra.mxu0 %v198
    %303 = vmatpush.msra.mxu0 %v194
    %304 = vmatpush.msra.mxu0 %v190
    %305 = vmatpush.msra.mxu0 %v186
    %306 = vmatpush.msra.mxu0 %v182
    %307 = vmatpush.msra.mxu0 %v178
    %308 = vmatpush.msra.mxu0 %v174
    %309 = vmatpush.msra.mxu0 %v170
    %310 = vmatpush.msra.mxu0 %v166
    %311 = vmatpush.msra.mxu0 %v162
    %312 = vmatpush.msra.mxu0 %v158
    %313 = vmatpush.msra.mxu0 %v154
    %314 = vmatpush.msra.mxu0 %v150
    %315 = vmatmul.f32.gmra.mxu0 %v83
    %v316 = vpop.f32.mrf.mxu0
    %v317 = vadd.f32 0.0, %v316
    %318 = vdwg.mxu0
    %319 = vmatpush.msra.mxu0 %v211
    %320 = vmatpush.msra.mxu0 %v207
    %321 = vmatpush.msra.mxu0 %v203
    %322 = vmatpush.msra.mxu0 %v199
    %323 = vmatpush.msra.mxu0 %v195
    %324 = vmatpush.msra.mxu0 %v191
    %325 = vmatpush.msra.mxu0 %v187
    %326 = vmatpush.msra.mxu0 %v183
    %327 = vmatpush.msra.mxu0 %v179
    %328 = vmatpush.msra.mxu0 %v175
    %329 = vmatpush.msra.mxu0 %v171
    %330 = vmatpush.msra.mxu0 %v167
    %331 = vmatpush.msra.mxu0 %v163
    %332 = vmatpush.msra.mxu0 %v159
    %333 = vmatpush.msra.mxu0 %v155
    %334 = vmatpush.msra.mxu0 %v151
    %335 = vmatmul.f32.gmra.mxu0 %v83
    %v336 = vpop.f32.mrf.mxu0
    %v337 = vadd.f32 0.0, %v336
    %338 = vdwg.mxu0
    %339 = vmatpush.msra.mxu0 %v212
    %340 = vmatpush.msra.mxu0 %v208
    %341 = vmatpush.msra.mxu0 %v204
    %342 = vmatpush.msra.mxu0 %v200
    %343 = vmatpush.msra.mxu0 %v196
    %344 = vmatpush.msra.mxu0 %v192
    %345 = vmatpush.msra.mxu0 %v188
    %346 = vmatpush.msra.mxu0 %v184
    %347 = vmatpush.msra.mxu0 %v180
    %348 = vmatpush.msra.mxu0 %v176
    %349 = vmatpush.msra.mxu0 %v172
    %350 = vmatpush.msra.mxu0 %v168
    %351 = vmatpush.msra.mxu0 %v164
    %352 = vmatpush.msra.mxu0 %v160
    %353 = vmatpush.msra.mxu0 %v156
    %354 = vmatpush.msra.mxu0 %v152
    %355 = vmatmul.f32.gmra.mxu0 %v83
    %v356 = vpop.f32.mrf.mxu0
    %v357 = vadd.f32 0.0, %v356
    %358 = vdwg.mxu0
    %359 = vmatpush.msra.mxu0 %v145
    %360 = vmatpush.msra.mxu0 %v141
    %361 = vmatpush.msra.mxu0 %v137
    %362 = vmatpush.msra.mxu0 %v133
    %363 = vmatpush.msra.mxu0 %v129
    %364 = vmatpush.msra.mxu0 %v125
    %365 = vmatpush.msra.mxu0 %v121
    %366 = vmatpush.msra.mxu0 %v117
    %367 = vmatpush.msra.mxu0 %v113
    %368 = vmatpush.msra.mxu0 %v109
    %369 = vmatpush.msra.mxu0 %v105
    %370 = vmatpush.msra.mxu0 %v101
    %371 = vmatpush.msra.mxu0 %v97
    %372 = vmatpush.msra.mxu0 %v93
    %373 = vmatpush.msra.mxu0 %v89
    %374 = vmatpush.msra.mxu0 %v85
    %375 = vmatmul.f32.gmra.mxu0 %v55
    %v376 = vpop.f32.mrf.mxu0
    %v377 = vadd.f32 %v297, %v376
    %378 = vdwg.mxu0
    %379 = vmatpush.msra.mxu0 %v146
    %380 = vmatpush.msra.mxu0 %v142
    %381 = vmatpush.msra.mxu0 %v138
    %382 = vmatpush.msra.mxu0 %v134
    %383 = vmatpush.msra.mxu0 %v130
    %384 = vmatpush.msra.mxu0 %v126
    %385 = vmatpush.msra.mxu0 %v122
    %386 = vmatpush.msra.mxu0 %v118
    %387 = vmatpush.msra.mxu0 %v114
    %388 = vmatpush.msra.mxu0 %v110
    %389 = vmatpush.msra.mxu0 %v106
    %390 = vmatpush.msra.mxu0 %v102
    %391 = vmatpush.msra.mxu0 %v98
    %392 = vmatpush.msra.mxu0 %v94
    %393 = vmatpush.msra.mxu0 %v90
    %394 = vmatpush.msra.mxu0 %v86
    %395 = vmatmul.f32.gmra.mxu0 %v55
    %v396 = vpop.f32.mrf.mxu0
    %v397 = vadd.f32 %v317, %v396
    %398 = vdwg.mxu0
    %399 = vmatpush.msra.mxu0 %v147
    %400 = vmatpush.msra.mxu0 %v143
    %401 = vmatpush.msra.mxu0 %v139
    %402 = vmatpush.msra.mxu0 %v135
    %403 = vmatpush.msra.mxu0 %v131
    %404 = vmatpush.msra.mxu0 %v127
    %405 = vmatpush.msra.mxu0 %v123
    %406 = vmatpush.msra.mxu0 %v119
    %407 = vmatpush.msra.mxu0 %v115
    %408 = vmatpush.msra.mxu0 %v111
    %409 = vmatpush.msra.mxu0 %v107
    %410 = vmatpush.msra.mxu0 %v103
    %411 = vmatpush.msra.mxu0 %v99
    %412 = vmatpush.msra.mxu0 %v95
    %413 = vmatpush.msra.mxu0 %v91
    %414 = vmatpush.msra.mxu0 %v87
    %415 = vmatmul.f32.gmra.mxu0 %v55
    %v416 = vpop.f32.mrf.mxu0
    %v417 = vadd.f32 %v337, %v416
    %418 = vdwg.mxu0
    %419 = vmatpush.msra.mxu0 %v148
    %420 = vmatpush.msra.mxu0 %v144
    %421 = vmatpush.msra.mxu0 %v140
    %422 = vmatpush.msra.mxu0 %v136
    %423 = vmatpush.msra.mxu0 %v132
    %424 = vmatpush.msra.mxu0 %v128
    %425 = vmatpush.msra.mxu0 %v124
    %426 = vmatpush.msra.mxu0 %v120
    %427 = vmatpush.msra.mxu0 %v116
    %428 = vmatpush.msra.mxu0 %v112
    %429 = vmatpush.msra.mxu0 %v108
    %430 = vmatpush.msra.mxu0 %v104
    %431 = vmatpush.msra.mxu0 %v100
    %432 = vmatpush.msra.mxu0 %v96
    %433 = vmatpush.msra.mxu0 %v92
    %434 = vmatpush.msra.mxu0 %v88
    %435 = vmatmul.f32.gmra.mxu0 %v55
    %v436 = vpop.f32.mrf.mxu0
    %v437 = vadd.f32 %v357, %v436
    %438 = vdwg.mxu0
    %v440 = vperm.slane %v278, 0
    %v441 = vperm.slane %v278, 1
    %v442 = vperm.slane %v278, 2
    %v443 = vperm.slane %v278, 3
    %v448 = vadd.f32 %v377, %v440
    %v449 = vadd.f32 %v397, %v441
    %v450 = vadd.f32 %v417, %v442
    %v451 = vadd.f32 %v437, %v443
    %452 = vmatpush.msra.mxu0 %v273
    %453 = vmatpush.msra.mxu0 %v269
    %454 = vmatpush.msra.mxu0 %v265
    %455 = vmatpush.msra.mxu0 %v261
    %456 = vmatpush.msra.mxu0 %v257
    %457 = vmatpush.msra.mxu0 %v253
    %458 = vmatpush.msra.mxu0 %v249
    %459 = vmatpush.msra.mxu0 %v245
    %460 = vmatpush.msra.mxu0 %v241
    %461 = vmatpush.msra.mxu0 %v237
    %462 = vmatpush.msra.mxu0 %v233
    %463 = vmatpush.msra.mxu0 %v229
    %464 = vmatpush.msra.mxu0 %v225
    %465 = vmatpush.msra.mxu0 %v221
    %466 = vmatpush.msra.mxu0 %v217
    %467 = vmatpush.msra.mxu0 %v213
    %468 = vmatmul.f32.gmra.mxu0 0.0
    %v469 = vpop.f32.mrf.mxu0
    %v470 = vadd.f32 0.0, %v469
    %471 = vdwg.mxu0
    %472 = vmatpush.msra.mxu0 %v274
    %473 = vmatpush.msra.mxu0 %v270
    %474 = vmatpush.msra.mxu0 %v266
    %475 = vmatpush.msra.mxu0 %v262
    %476 = vmatpush.msra.mxu0 %v258
    %477 = vmatpush.msra.mxu0 %v254
    %478 = vmatpush.msra.mxu0 %v250
    %479 = vmatpush.msra.mxu0 %v246
    %480 = vmatpush.msra.mxu0 %v242
    %481 = vmatpush.msra.mxu0 %v238
    %482 = vmatpush.msra.mxu0 %v234
    %483 = vmatpush.msra.mxu0 %v230
    %484 = vmatpush.msra.mxu0 %v226
    %485 = vmatpush.msra.mxu0 %v222
    %486 = vmatpush.msra.mxu0 %v218
    %487 = vmatpush.msra.mxu0 %v214
    %488 = vmatmul.f32.gmra.mxu0 0.0
    %v489 = vpop.f32.mrf.mxu0
    %v490 = vadd.f32 0.0, %v489
    %491 = vdwg.mxu0
    %492 = vmatpush.msra.mxu0 %v275
    %493 = vmatpush.msra.mxu0 %v271
    %494 = vmatpush.msra.mxu0 %v267
    %495 = vmatpush.msra.mxu0 %v263
    %496 = vmatpush.msra.mxu0 %v259
    %497 = vmatpush.msra.mxu0 %v255
    %498 = vmatpush.msra.mxu0 %v251
    %499 = vmatpush.msra.mxu0 %v247
    %500 = vmatpush.msra.mxu0 %v243
    %501 = vmatpush.msra.mxu0 %v239
    %502 = vmatpush.msra.mxu0 %v235
    %503 = vmatpush.msra.mxu0 %v231
    %504 = vmatpush.msra.mxu0 %v227
    %505 = vmatpush.msra.mxu0 %v223
    %506 = vmatpush.msra.mxu0 %v219
    %507 = vmatpush.msra.mxu0 %v215
    %508 = vmatmul.f32.gmra.mxu0 0.0
    %v509 = vpop.f32.mrf.mxu0
    %v510 = vadd.f32 0.0, %v509
    %511 = vdwg.mxu0
    %512 = vmatpush.msra.mxu0 %v276
    %513 = vmatpush.msra.mxu0 %v272
    %514 = vmatpush.msra.mxu0 %v268
    %515 = vmatpush.msra.mxu0 %v264
    %516 = vmatpush.msra.mxu0 %v260
    %517 = vmatpush.msra.mxu0 %v256
    %518 = vmatpush.msra.mxu0 %v252
    %519 = vmatpush.msra.mxu0 %v248
    %520 = vmatpush.msra.mxu0 %v244
    %521 = vmatpush.msra.mxu0 %v240
    %522 = vmatpush.msra.mxu0 %v236
    %523 = vmatpush.msra.mxu0 %v232
    %524 = vmatpush.msra.mxu0 %v228
    %525 = vmatpush.msra.mxu0 %v224
    %526 = vmatpush.msra.mxu0 %v220
    %527 = vmatpush.msra.mxu0 %v216
    %528 = vmatmul.f32.gmra.mxu0 0.0
    %v529 = vpop.f32.mrf.mxu0
    %v530 = vadd.f32 0.0, %v529
    %531 = vdwg.mxu0
    %v532 = vadd.f32 %v448, %v470
    %v533 = vadd.f32 %v449, %v490
    %v534 = vadd.f32 %v450, %v510
    %v535 = vadd.f32 %v451, %v530
    %v536 = vxor.u32 %v532, 2147483648
    %v537 = vmul.f32 %v536, 1.442695
    %v538 = vpow.pop %v537
    %v539 = vadd.f32 %v538, 1.0
    %v540 = vrcp.pop %v539
    %v541 = vmul.f32 %v539, %v540
    %v542 = vsub.f32 1.0, %v541
    %v543 = vmul.f32 %v540, %v542
    %v544 = vadd.f32 %v540, %v543
    %vm545 = vweird.f32 %v539
    %vm546 = vweird.f32 %v540
    %vm547 = vmor %vm545, %vm546
    %v548 = vsel %vm547, %v540, %v544
    %v549 = vand.u32 2147483647, %v539
    %vm550 = vcmp.eq.f32.partialorder %v549, 8.507059e+37
    %v551 = vand.u32 %v539, 2147483648
    %v552 = vor.u32 1.1754944e-38, %v551
    %v553 = vsel %vm550, %v552, %v548
    %v554 = vmul.f32 1.0, %v553
    %v555 = vxor.u32 %v533, 2147483648
    %v556 = vmul.f32 %v555, 1.442695
    %v557 = vpow.pop %v556
    %v558 = vadd.f32 %v557, 1.0
    %v559 = vrcp.pop %v558
    %v560 = vmul.f32 %v558, %v559
    %v561 = vsub.f32 1.0, %v560
    %v562 = vmul.f32 %v559, %v561
    %v563 = vadd.f32 %v559, %v562
    %vm564 = vweird.f32 %v558
    %vm565 = vweird.f32 %v559
    %vm566 = vmor %vm564, %vm565
    %v567 = vsel %vm566, %v559, %v563
    %v568 = vand.u32 2147483647, %v558
    %vm569 = vcmp.eq.f32.partialorder %v568, 8.507059e+37
    %v570 = vand.u32 %v558, 2147483648
    %v571 = vor.u32 1.1754944e-38, %v570
    %v572 = vsel %vm569, %v571, %v567
    %v573 = vmul.f32 1.0, %v572
    %v574 = vtanh.pop %v534
    %v575 = vxor.u32 %v535, 2147483648
    %v576 = vmul.f32 %v575, 1.442695
    %v577 = vpow.pop %v576
    %v578 = vadd.f32 %v577, 1.0
    %v579 = vrcp.pop %v578
    %v580 = vmul.f32 %v578, %v579
    %v581 = vsub.f32 1.0, %v580
    %v582 = vmul.f32 %v579, %v581
    %v583 = vadd.f32 %v579, %v582
    %vm584 = vweird.f32 %v578
    %vm585 = vweird.f32 %v579
    %vm586 = vmor %vm584, %vm585
    %v587 = vsel %vm586, %v579, %v583
    %v588 = vand.u32 2147483647, %v578
    %vm589 = vcmp.eq.f32.partialorder %v588, 8.507059e+37
    %v590 = vand.u32 %v578, 2147483648
    %v591 = vor.u32 1.1754944e-38, %v590
    %v592 = vsel %vm589, %v591, %v587
    %v593 = vmul.f32 1.0, %v592
    %v594 = vmul.f32 %v573, 0.0
    %v595 = vmul.f32 %v554, %v574
    %v596 = vadd.f32 %v594, %v595
    %v597 = vtanh.pop %v596
    %v598 = vmul.f32 %v593, %v597
    %599 = vmatpush.msra.mxu0 %v273
    %600 = vmatpush.msra.mxu0 %v269
    %601 = vmatpush.msra.mxu0 %v265
    %602 = vmatpush.msra.mxu0 %v261
    %603 = vmatpush.msra.mxu0 %v257
    %604 = vmatpush.msra.mxu0 %v253
    %605 = vmatpush.msra.mxu0 %v249
    %606 = vmatpush.msra.mxu0 %v245
    %607 = vmatpush.msra.mxu0 %v241
    %608 = vmatpush.msra.mxu0 %v237
    %609 = vmatpush.msra.mxu0 %v233
    %610 = vmatpush.msra.mxu0 %v229
    %611 = vmatpush.msra.mxu0 %v225
    %612 = vmatpush.msra.mxu0 %v221
    %613 = vmatpush.msra.mxu0 %v217
    %614 = vmatpush.msra.mxu0 %v213
    %615 = vmatmul.f32.gmra.mxu0 %v598
    %v616 = vpop.f32.mrf.mxu0
    %v617 = vadd.f32 0.0, %v616
    %618 = vdwg.mxu0
    %619 = vmatpush.msra.mxu0 %v274
    %620 = vmatpush.msra.mxu0 %v270
    %621 = vmatpush.msra.mxu0 %v266
    %622 = vmatpush.msra.mxu0 %v262
    %623 = vmatpush.msra.mxu0 %v258
    %624 = vmatpush.msra.mxu0 %v254
    %625 = vmatpush.msra.mxu0 %v250
    %626 = vmatpush.msra.mxu0 %v246
    %627 = vmatpush.msra.mxu0 %v242
    %628 = vmatpush.msra.mxu0 %v238
    %629 = vmatpush.msra.mxu0 %v234
    %630 = vmatpush.msra.mxu0 %v230
    %631 = vmatpush.msra.mxu0 %v226
    %632 = vmatpush.msra.mxu0 %v222
    %633 = vmatpush.msra.mxu0 %v218
    %634 = vmatpush.msra.mxu0 %v214
    %635 = vmatmul.f32.gmra.mxu0 %v598
    %v636 = vpop.f32.mrf.mxu0
    %v637 = vadd.f32 0.0, %v636
    %638 = vdwg.mxu0
    %639 = vmatpush.msra.mxu0 %v275
    %640 = vmatpush.msra.mxu0 %v271
    %641 = vmatpush.msra.mxu0 %v267
    %642 = vmatpush.msra.mxu0 %v263
    %643 = vmatpush.msra.mxu0 %v259
    %644 = vmatpush.msra.mxu0 %v255
    %645 = vmatpush.msra.mxu0 %v251
    %646 = vmatpush.msra.mxu0 %v247
    %647 = vmatpush.msra.mxu0 %v243
    %648 = vmatpush.msra.mxu0 %v239
    %649 = vmatpush.msra.mxu0 %v235
    %650 = vmatpush.msra.mxu0 %v231
    %651 = vmatpush.msra.mxu0 %v227
    %652 = vmatpush.msra.mxu0 %v223
    %653 = vmatpush.msra.mxu0 %v219
    %654 = vmatpush.msra.mxu0 %v215
    %655 = vmatmul.f32.gmra.mxu0 %v598
    %v656 = vpop.f32.mrf.mxu0
    %v657 = vadd.f32 0.0, %v656
    %658 = vdwg.mxu0
    %659 = vmatpush.msra.mxu0 %v276
    %660 = vmatpush.msra.mxu0 %v272
    %661 = vmatpush.msra.mxu0 %v268
    %662 = vmatpush.msra.mxu0 %v264
    %663 = vmatpush.msra.mxu0 %v260
    %664 = vmatpush.msra.mxu0 %v256
    %665 = vmatpush.msra.mxu0 %v252
    %666 = vmatpush.msra.mxu0 %v248
    %667 = vmatpush.msra.mxu0 %v244
    %668 = vmatpush.msra.mxu0 %v240
    %669 = vmatpush.msra.mxu0 %v236
    %670 = vmatpush.msra.mxu0 %v232
    %671 = vmatpush.msra.mxu0 %v228
    %672 = vmatpush.msra.mxu0 %v224
    %673 = vmatpush.msra.mxu0 %v220
    %674 = vmatpush.msra.mxu0 %v216
    %675 = vmatmul.f32.gmra.mxu0 %v598
    %v676 = vpop.f32.mrf.mxu0
    %v677 = vadd.f32 0.0, %v676
    %678 = vdwg.mxu0
    %v683 = vrot.slane %v617, 7
    %v684 = vrot.slane %v637, 7
    %v685 = vrot.slane %v657, 7
    %v686 = vrot.slane %v677, 7
    %v691 = vadd.f32 %v448, %v683
    %v692 = vadd.f32 %v449, %v684
    %v693 = vadd.f32 %v450, %v685
    %v694 = vadd.f32 %v451, %v686
    %v695 = vxor.u32 %v691, 2147483648
    %v696 = vmul.f32 %v695, 1.442695
    %v697 = vpow.pop %v696
    %v698 = vadd.f32 %v697, 1.0
    %v699 = vrcp.pop %v698
    %v700 = vmul.f32 %v698, %v699
    %v701 = vsub.f32 1.0, %v700
    %v702 = vmul.f32 %v699, %v701
    %v703 = vadd.f32 %v699, %v702
    %vm704 = vweird.f32 %v698
    %vm705 = vweird.f32 %v699
    %vm706 = vmor %vm704, %vm705
    %v707 = vsel %vm706, %v699, %v703
    %v708 = vand.u32 2147483647, %v698
    %vm709 = vcmp.eq.f32.partialorder %v708, 8.507059e+37
    %v710 = vand.u32 %v698, 2147483648
    %v711 = vor.u32 1.1754944e-38, %v710
    %v712 = vsel %vm709, %v711, %v707
    %v713 = vmul.f32 1.0, %v712
    %v714 = vxor.u32 %v692, 2147483648
    %v715 = vmul.f32 %v714, 1.442695
    %v716 = vpow.pop %v715
    %v717 = vadd.f32 %v716, 1.0
    %v718 = vrcp.pop %v717
    %v719 = vmul.f32 %v717, %v718
    %v720 = vsub.f32 1.0, %v719
    %v721 = vmul.f32 %v718, %v720
    %v722 = vadd.f32 %v718, %v721
    %vm723 = vweird.f32 %v717
    %vm724 = vweird.f32 %v718
    %vm725 = vmor %vm723, %vm724
    %v726 = vsel %vm725, %v718, %v722
    %v727 = vand.u32 2147483647, %v717
    %vm728 = vcmp.eq.f32.partialorder %v727, 8.507059e+37
    %v729 = vand.u32 %v717, 2147483648
    %v730 = vor.u32 1.1754944e-38, %v729
    %v731 = vsel %vm728, %v730, %v726
    %v732 = vmul.f32 1.0, %v731
    %v733 = vtanh.pop %v693
    %v734 = vxor.u32 %v694, 2147483648
    %v735 = vmul.f32 %v734, 1.442695
    %v736 = vpow.pop %v735
    %v737 = vadd.f32 %v736, 1.0
    %v738 = vrcp.pop %v737
    %v739 = vmul.f32 %v737, %v738
    %v740 = vsub.f32 1.0, %v739
    %v741 = vmul.f32 %v738, %v740
    %v742 = vadd.f32 %v738, %v741
    %vm743 = vweird.f32 %v737
    %vm744 = vweird.f32 %v738
    %vm745 = vmor %vm743, %vm744
    %v746 = vsel %vm745, %v738, %v742
    %v747 = vand.u32 2147483647, %v737
    %vm748 = vcmp.eq.f32.partialorder %v747, 8.507059e+37
    %v749 = vand.u32 %v737, 2147483648
    %v750 = vor.u32 1.1754944e-38, %v749
    %v751 = vsel %vm748, %v750, %v746
    %v752 = vmul.f32 1.0, %v751
    %v754 = vrot.slane %v596, 7
    %v756 = vmul.f32 %v732, %v754
    %v757 = vmul.f32 %v713, %v733
    %v758 = vadd.f32 %v756, %v757
    %v759 = vtanh.pop %v758
    %v760 = vmul.f32 %v752, %v759
    %v762 = vrot.slane %v760, 1
    %764 = vmatpush.msra.mxu0 %v273
    %765 = vmatpush.msra.mxu0 %v269
    %766 = vmatpush.msra.mxu0 %v265
    %767 = vmatpush.msra.mxu0 %v261
    %768 = vmatpush.msra.mxu0 %v257
    %769 = vmatpush.msra.mxu0 %v253
    %770 = vmatpush.msra.mxu0 %v249
    %771 = vmatpush.msra.mxu0 %v245
    %772 = vmatpush.msra.mxu0 %v241
    %773 = vmatpush.msra.mxu0 %v237
    %774 = vmatpush.msra.mxu0 %v233
    %775 = vmatpush.msra.mxu0 %v229
    %776 = vmatpush.msra.mxu0 %v225
    %777 = vmatpush.msra.mxu0 %v221
    %778 = vmatpush.msra.mxu0 %v217
    %779 = vmatpush.msra.mxu0 %v213
    %780 = vmatmul.f32.gmra.mxu0 %v762
    %v781 = vpop.f32.mrf.mxu0
    %v782 = vadd.f32 0.0, %v781
    %783 = vdwg.mxu0
    %784 = vmatpush.msra.mxu0 %v274
    %785 = vmatpush.msra.mxu0 %v270
    %786 = vmatpush.msra.mxu0 %v266
    %787 = vmatpush.msra.mxu0 %v262
    %788 = vmatpush.msra.mxu0 %v258
    %789 = vmatpush.msra.mxu0 %v254
    %790 = vmatpush.msra.mxu0 %v250
    %791 = vmatpush.msra.mxu0 %v246
    %792 = vmatpush.msra.mxu0 %v242
    %793 = vmatpush.msra.mxu0 %v238
    %794 = vmatpush.msra.mxu0 %v234
    %795 = vmatpush.msra.mxu0 %v230
    %796 = vmatpush.msra.mxu0 %v226
    %797 = vmatpush.msra.mxu0 %v222
    %798 = vmatpush.msra.mxu0 %v218
    %799 = vmatpush.msra.mxu0 %v214
    %800 = vmatmul.f32.gmra.mxu0 %v762
    %v801 = vpop.f32.mrf.mxu0
    %v802 = vadd.f32 0.0, %v801
    %803 = vdwg.mxu0
    %804 = vmatpush.msra.mxu0 %v275
    %805 = vmatpush.msra.mxu0 %v271
    %806 = vmatpush.msra.mxu0 %v267
    %807 = vmatpush.msra.mxu0 %v263
    %808 = vmatpush.msra.mxu0 %v259
    %809 = vmatpush.msra.mxu0 %v255
    %810 = vmatpush.msra.mxu0 %v251
    %811 = vmatpush.msra.mxu0 %v247
    %812 = vmatpush.msra.mxu0 %v243
    %813 = vmatpush.msra.mxu0 %v239
    %814 = vmatpush.msra.mxu0 %v235
    %815 = vmatpush.msra.mxu0 %v231
    %816 = vmatpush.msra.mxu0 %v227
    %817 = vmatpush.msra.mxu0 %v223
    %818 = vmatpush.msra.mxu0 %v219
    %819 = vmatpush.msra.mxu0 %v215
    %820 = vmatmul.f32.gmra.mxu0 %v762
    %v821 = vpop.f32.mrf.mxu0
    %v822 = vadd.f32 0.0, %v821
    %823 = vdwg.mxu0
    %824 = vmatpush.msra.mxu0 %v276
    %825 = vmatpush.msra.mxu0 %v272
    %826 = vmatpush.msra.mxu0 %v268
    %827 = vmatpush.msra.mxu0 %v264
    %828 = vmatpush.msra.mxu0 %v260
    %829 = vmatpush.msra.mxu0 %v256
    %830 = vmatpush.msra.mxu0 %v252
    %831 = vmatpush.msra.mxu0 %v248
    %832 = vmatpush.msra.mxu0 %v244
    %833 = vmatpush.msra.mxu0 %v240
    %834 = vmatpush.msra.mxu0 %v236
    %835 = vmatpush.msra.mxu0 %v232
    %836 = vmatpush.msra.mxu0 %v228
    %837 = vmatpush.msra.mxu0 %v224
    %838 = vmatpush.msra.mxu0 %v220
    %839 = vmatpush.msra.mxu0 %v216
    %840 = vmatmul.f32.gmra.mxu0 %v762
    %v841 = vpop.f32.mrf.mxu0
    %v842 = vadd.f32 0.0, %v841
    %843 = vdwg.mxu0
    %v848 = vrot.slane %v782, 6
    %v849 = vrot.slane %v802, 6
    %v850 = vrot.slane %v822, 6
    %v851 = vrot.slane %v842, 6
    %v856 = vadd.f32 %v448, %v848
    %v857 = vadd.f32 %v449, %v849
    %v858 = vadd.f32 %v450, %v850
    %v859 = vadd.f32 %v451, %v851
    %v860 = vxor.u32 %v856, 2147483648
    %v861 = vmul.f32 %v860, 1.442695
    %v862 = vpow.pop %v861
    %v863 = vadd.f32 %v862, 1.0
    %v864 = vrcp.pop %v863
    %v865 = vmul.f32 %v863, %v864
    %v866 = vsub.f32 1.0, %v865
    %v867 = vmul.f32 %v864, %v866
    %v868 = vadd.f32 %v864, %v867
    %vm869 = vweird.f32 %v863
    %vm870 = vweird.f32 %v864
    %vm871 = vmor %vm869, %vm870
    %v872 = vsel %vm871, %v864, %v868
    %v873 = vand.u32 2147483647, %v863
    %vm874 = vcmp.eq.f32.partialorder %v873, 8.507059e+37
    %v875 = vand.u32 %v863, 2147483648
    %v876 = vor.u32 1.1754944e-38, %v875
    %v877 = vsel %vm874, %v876, %v872
    %v878 = vmul.f32 1.0, %v877
    %v879 = vxor.u32 %v857, 2147483648
    %v880 = vmul.f32 %v879, 1.442695
    %v881 = vpow.pop %v880
    %v882 = vadd.f32 %v881, 1.0
    %v883 = vrcp.pop %v882
    %v884 = vmul.f32 %v882, %v883
    %v885 = vsub.f32 1.0, %v884
    %v886 = vmul.f32 %v883, %v885
    %v887 = vadd.f32 %v883, %v886
    %vm888 = vweird.f32 %v882
    %vm889 = vweird.f32 %v883
    %vm890 = vmor %vm888, %vm889
    %v891 = vsel %vm890, %v883, %v887
    %v892 = vand.u32 2147483647, %v882
    %vm893 = vcmp.eq.f32.partialorder %v892, 8.507059e+37
    %v894 = vand.u32 %v882, 2147483648
    %v895 = vor.u32 1.1754944e-38, %v894
    %v896 = vsel %vm893, %v895, %v891
    %v897 = vmul.f32 1.0, %v896
    %v898 = vtanh.pop %v858
    %v899 = vxor.u32 %v859, 2147483648
    %v900 = vmul.f32 %v899, 1.442695
    %v901 = vpow.pop %v900
    %v902 = vadd.f32 %v901, 1.0
    %v903 = vrcp.pop %v902
    %v904 = vmul.f32 %v902, %v903
    %v905 = vsub.f32 1.0, %v904
    %v906 = vmul.f32 %v903, %v905
    %v907 = vadd.f32 %v903, %v906
    %vm908 = vweird.f32 %v902
    %vm909 = vweird.f32 %v903
    %vm910 = vmor %vm908, %vm909
    %v911 = vsel %vm910, %v903, %v907
    %v912 = vand.u32 2147483647, %v902
    %vm913 = vcmp.eq.f32.partialorder %v912, 8.507059e+37
    %v914 = vand.u32 %v902, 2147483648
    %v915 = vor.u32 1.1754944e-38, %v914
    %v916 = vsel %vm913, %v915, %v911
    %v917 = vmul.f32 1.0, %v916
    %v919 = vrot.slane %v758, 7
    %v921 = vmul.f32 %v897, %v919
    %v922 = vmul.f32 %v878, %v898
    %v923 = vadd.f32 %v921, %v922
    %v924 = vtanh.pop %v923
    %v925 = vmul.f32 %v917, %v924
    %v927 = vrot.slane %v925, 2
    %929 = vmatpush.msra.mxu0 %v273
    %930 = vmatpush.msra.mxu0 %v269
    %931 = vmatpush.msra.mxu0 %v265
    %932 = vmatpush.msra.mxu0 %v261
    %933 = vmatpush.msra.mxu0 %v257
    %934 = vmatpush.msra.mxu0 %v253
    %935 = vmatpush.msra.mxu0 %v249
    %936 = vmatpush.msra.mxu0 %v245
    %937 = vmatpush.msra.mxu0 %v241
    %938 = vmatpush.msra.mxu0 %v237
    %939 = vmatpush.msra.mxu0 %v233
    %940 = vmatpush.msra.mxu0 %v229
    %941 = vmatpush.msra.mxu0 %v225
    %942 = vmatpush.msra.mxu0 %v221
    %943 = vmatpush.msra.mxu0 %v217
    %944 = vmatpush.msra.mxu0 %v213
    %945 = vmatmul.f32.gmra.mxu0 %v927
    %v946 = vpop.f32.mrf.mxu0
    %v947 = vadd.f32 0.0, %v946
    %948 = vdwg.mxu0
    %949 = vmatpush.msra.mxu0 %v274
    %950 = vmatpush.msra.mxu0 %v270
    %951 = vmatpush.msra.mxu0 %v266
    %952 = vmatpush.msra.mxu0 %v262
    %953 = vmatpush.msra.mxu0 %v258
    %954 = vmatpush.msra.mxu0 %v254
    %955 = vmatpush.msra.mxu0 %v250
    %956 = vmatpush.msra.mxu0 %v246
    %957 = vmatpush.msra.mxu0 %v242
    %958 = vmatpush.msra.mxu0 %v238
    %959 = vmatpush.msra.mxu0 %v234
    %960 = vmatpush.msra.mxu0 %v230
    %961 = vmatpush.msra.mxu0 %v226
    %962 = vmatpush.msra.mxu0 %v222
    %963 = vmatpush.msra.mxu0 %v218
    %964 = vmatpush.msra.mxu0 %v214
    %965 = vmatmul.f32.gmra.mxu0 %v927
    %v966 = vpop.f32.mrf.mxu0
    %v967 = vadd.f32 0.0, %v966
    %968 = vdwg.mxu0
    %969 = vmatpush.msra.mxu0 %v275
    %970 = vmatpush.msra.mxu0 %v271
    %971 = vmatpush.msra.mxu0 %v267
    %972 = vmatpush.msra.mxu0 %v263
    %973 = vmatpush.msra.mxu0 %v259
    %974 = vmatpush.msra.mxu0 %v255
    %975 = vmatpush.msra.mxu0 %v251
    %976 = vmatpush.msra.mxu0 %v247
    %977 = vmatpush.msra.mxu0 %v243
    %978 = vmatpush.msra.mxu0 %v239
    %979 = vmatpush.msra.mxu0 %v235
    %980 = vmatpush.msra.mxu0 %v231
    %981 = vmatpush.msra.mxu0 %v227
    %982 = vmatpush.msra.mxu0 %v223
    %983 = vmatpush.msra.mxu0 %v219
    %984 = vmatpush.msra.mxu0 %v215
    %985 = vmatmul.f32.gmra.mxu0 %v927
    %v986 = vpop.f32.mrf.mxu0
    %v987 = vadd.f32 0.0, %v986
    %988 = vdwg.mxu0
    %989 = vmatpush.msra.mxu0 %v276
    %990 = vmatpush.msra.mxu0 %v272
    %991 = vmatpush.msra.mxu0 %v268
    %992 = vmatpush.msra.mxu0 %v264
    %993 = vmatpush.msra.mxu0 %v260
    %994 = vmatpush.msra.mxu0 %v256
    %995 = vmatpush.msra.mxu0 %v252
    %996 = vmatpush.msra.mxu0 %v248
    %997 = vmatpush.msra.mxu0 %v244
    %998 = vmatpush.msra.mxu0 %v240
    %999 = vmatpush.msra.mxu0 %v236
    %1000 = vmatpush.msra.mxu0 %v232
    %1001 = vmatpush.msra.mxu0 %v228
    %1002 = vmatpush.msra.mxu0 %v224
    %1003 = vmatpush.msra.mxu0 %v220
    %1004 = vmatpush.msra.mxu0 %v216
    %1005 = vmatmul.f32.gmra.mxu0 %v927
    %v1006 = vpop.f32.mrf.mxu0
    %v1007 = vadd.f32 0.0, %v1006
    %1008 = vdwg.mxu0
    %v1013 = vrot.slane %v947, 5
    %v1014 = vrot.slane %v967, 5
    %v1015 = vrot.slane %v987, 5
    %v1016 = vrot.slane %v1007, 5
    %v1021 = vadd.f32 %v448, %v1013
    %v1022 = vadd.f32 %v449, %v1014
    %v1023 = vadd.f32 %v450, %v1015
    %v1024 = vadd.f32 %v451, %v1016
    %v1025 = vxor.u32 %v1021, 2147483648
    %v1026 = vmul.f32 %v1025, 1.442695
    %v1027 = vpow.pop %v1026
    %v1028 = vadd.f32 %v1027, 1.0
    %v1029 = vrcp.pop %v1028
    %v1030 = vmul.f32 %v1028, %v1029
    %v1031 = vsub.f32 1.0, %v1030
    %v1032 = vmul.f32 %v1029, %v1031
    %v1033 = vadd.f32 %v1029, %v1032
    %vm1034 = vweird.f32 %v1028
    %vm1035 = vweird.f32 %v1029
    %vm1036 = vmor %vm1034, %vm1035
    %v1037 = vsel %vm1036, %v1029, %v1033
    %v1038 = vand.u32 2147483647, %v1028
    %vm1039 = vcmp.eq.f32.partialorder %v1038, 8.507059e+37
    %v1040 = vand.u32 %v1028, 2147483648
    %v1041 = vor.u32 1.1754944e-38, %v1040
    %v1042 = vsel %vm1039, %v1041, %v1037
    %v1043 = vmul.f32 1.0, %v1042
    %v1044 = vxor.u32 %v1022, 2147483648
    %v1045 = vmul.f32 %v1044, 1.442695
    %v1046 = vpow.pop %v1045
    %v1047 = vadd.f32 %v1046, 1.0
    %v1048 = vrcp.pop %v1047
    %v1049 = vmul.f32 %v1047, %v1048
    %v1050 = vsub.f32 1.0, %v1049
    %v1051 = vmul.f32 %v1048, %v1050
    %v1052 = vadd.f32 %v1048, %v1051
    %vm1053 = vweird.f32 %v1047
    %vm1054 = vweird.f32 %v1048
    %vm1055 = vmor %vm1053, %vm1054
    %v1056 = vsel %vm1055, %v1048, %v1052
    %v1057 = vand.u32 2147483647, %v1047
    %vm1058 = vcmp.eq.f32.partialorder %v1057, 8.507059e+37
    %v1059 = vand.u32 %v1047, 2147483648
    %v1060 = vor.u32 1.1754944e-38, %v1059
    %v1061 = vsel %vm1058, %v1060, %v1056
    %v1062 = vmul.f32 1.0, %v1061
    %v1063 = vtanh.pop %v1023
    %v1064 = vxor.u32 %v1024, 2147483648
    %v1065 = vmul.f32 %v1064, 1.442695
    %v1066 = vpow.pop %v1065
    %v1067 = vadd.f32 %v1066, 1.0
    %v1068 = vrcp.pop %v1067
    %v1069 = vmul.f32 %v1067, %v1068
    %v1070 = vsub.f32 1.0, %v1069
    %v1071 = vmul.f32 %v1068, %v1070
    %v1072 = vadd.f32 %v1068, %v1071
    %vm1073 = vweird.f32 %v1067
    %vm1074 = vweird.f32 %v1068
    %vm1075 = vmor %vm1073, %vm1074
    %v1076 = vsel %vm1075, %v1068, %v1072
    %v1077 = vand.u32 2147483647, %v1067
    %vm1078 = vcmp.eq.f32.partialorder %v1077, 8.507059e+37
    %v1079 = vand.u32 %v1067, 2147483648
    %v1080 = vor.u32 1.1754944e-38, %v1079
    %v1081 = vsel %vm1078, %v1080, %v1076
    %v1082 = vmul.f32 1.0, %v1081
    %v1084 = vrot.slane %v923, 7
    %v1086 = vmul.f32 %v1062, %v1084
    %v1087 = vmul.f32 %v1043, %v1063
    %v1088 = vadd.f32 %v1086, %v1087
    %v1089 = vtanh.pop %v1088
    %v1090 = vmul.f32 %v1082, %v1089
    %v1092 = vrot.slane %v1090, 3
    %1094 = vmatpush.msra.mxu0 %v273
    %1095 = vmatpush.msra.mxu0 %v269
    %1096 = vmatpush.msra.mxu0 %v265
    %1097 = vmatpush.msra.mxu0 %v261
    %1098 = vmatpush.msra.mxu0 %v257
    %1099 = vmatpush.msra.mxu0 %v253
    %1100 = vmatpush.msra.mxu0 %v249
    %1101 = vmatpush.msra.mxu0 %v245
    %1102 = vmatpush.msra.mxu0 %v241
    %1103 = vmatpush.msra.mxu0 %v237
    %1104 = vmatpush.msra.mxu0 %v233
    %1105 = vmatpush.msra.mxu0 %v229
    %1106 = vmatpush.msra.mxu0 %v225
    %1107 = vmatpush.msra.mxu0 %v221
    %1108 = vmatpush.msra.mxu0 %v217
    %1109 = vmatpush.msra.mxu0 %v213
    %1110 = vmatmul.f32.gmra.mxu0 %v1092
    %v1111 = vpop.f32.mrf.mxu0
    %v1112 = vadd.f32 0.0, %v1111
    %1113 = vdwg.mxu0
    %1114 = vmatpush.msra.mxu0 %v274
    %1115 = vmatpush.msra.mxu0 %v270
    %1116 = vmatpush.msra.mxu0 %v266
    %1117 = vmatpush.msra.mxu0 %v262
    %1118 = vmatpush.msra.mxu0 %v258
    %1119 = vmatpush.msra.mxu0 %v254
    %1120 = vmatpush.msra.mxu0 %v250
    %1121 = vmatpush.msra.mxu0 %v246
    %1122 = vmatpush.msra.mxu0 %v242
    %1123 = vmatpush.msra.mxu0 %v238
    %1124 = vmatpush.msra.mxu0 %v234
    %1125 = vmatpush.msra.mxu0 %v230
    %1126 = vmatpush.msra.mxu0 %v226
    %1127 = vmatpush.msra.mxu0 %v222
    %1128 = vmatpush.msra.mxu0 %v218
    %1129 = vmatpush.msra.mxu0 %v214
    %1130 = vmatmul.f32.gmra.mxu0 %v1092
    %v1131 = vpop.f32.mrf.mxu0
    %v1132 = vadd.f32 0.0, %v1131
    %1133 = vdwg.mxu0
    %1134 = vmatpush.msra.mxu0 %v275
    %1135 = vmatpush.msra.mxu0 %v271
    %1136 = vmatpush.msra.mxu0 %v267
    %1137 = vmatpush.msra.mxu0 %v263
    %1138 = vmatpush.msra.mxu0 %v259
    %1139 = vmatpush.msra.mxu0 %v255
    %1140 = vmatpush.msra.mxu0 %v251
    %1141 = vmatpush.msra.mxu0 %v247
    %1142 = vmatpush.msra.mxu0 %v243
    %1143 = vmatpush.msra.mxu0 %v239
    %1144 = vmatpush.msra.mxu0 %v235
    %1145 = vmatpush.msra.mxu0 %v231
    %1146 = vmatpush.msra.mxu0 %v227
    %1147 = vmatpush.msra.mxu0 %v223
    %1148 = vmatpush.msra.mxu0 %v219
    %1149 = vmatpush.msra.mxu0 %v215
    %1150 = vmatmul.f32.gmra.mxu0 %v1092
    %v1151 = vpop.f32.mrf.mxu0
    %v1152 = vadd.f32 0.0, %v1151
    %1153 = vdwg.mxu0
    %1154 = vmatpush.msra.mxu0 %v276
    %1155 = vmatpush.msra.mxu0 %v272
    %1156 = vmatpush.msra.mxu0 %v268
    %1157 = vmatpush.msra.mxu0 %v264
    %1158 = vmatpush.msra.mxu0 %v260
    %1159 = vmatpush.msra.mxu0 %v256
    %1160 = vmatpush.msra.mxu0 %v252
    %1161 = vmatpush.msra.mxu0 %v248
    %1162 = vmatpush.msra.mxu0 %v244
    %1163 = vmatpush.msra.mxu0 %v240
    %1164 = vmatpush.msra.mxu0 %v236
    %1165 = vmatpush.msra.mxu0 %v232
    %1166 = vmatpush.msra.mxu0 %v228
    %1167 = vmatpush.msra.mxu0 %v224
    %1168 = vmatpush.msra.mxu0 %v220
    %1169 = vmatpush.msra.mxu0 %v216
    %1170 = vmatmul.f32.gmra.mxu0 %v1092
    %v1171 = vpop.f32.mrf.mxu0
    %v1172 = vadd.f32 0.0, %v1171
    %1173 = vdwg.mxu0
    %v1178 = vrot.slane %v1112, 4
    %v1179 = vrot.slane %v1132, 4
    %v1180 = vrot.slane %v1152, 4
    %v1181 = vrot.slane %v1172, 4
    %v1186 = vadd.f32 %v448, %v1178
    %v1187 = vadd.f32 %v449, %v1179
    %v1188 = vadd.f32 %v450, %v1180
    %v1189 = vadd.f32 %v451, %v1181
    %v1190 = vxor.u32 %v1186, 2147483648
    %v1191 = vmul.f32 %v1190, 1.442695
    %v1192 = vpow.pop %v1191
    %v1193 = vadd.f32 %v1192, 1.0
    %v1194 = vrcp.pop %v1193
    %v1195 = vmul.f32 %v1193, %v1194
    %v1196 = vsub.f32 1.0, %v1195
    %v1197 = vmul.f32 %v1194, %v1196
    %v1198 = vadd.f32 %v1194, %v1197
    %vm1199 = vweird.f32 %v1193
    %vm1200 = vweird.f32 %v1194
    %vm1201 = vmor %vm1199, %vm1200
    %v1202 = vsel %vm1201, %v1194, %v1198
    %v1203 = vand.u32 2147483647, %v1193
    %vm1204 = vcmp.eq.f32.partialorder %v1203, 8.507059e+37
    %v1205 = vand.u32 %v1193, 2147483648
    %v1206 = vor.u32 1.1754944e-38, %v1205
    %v1207 = vsel %vm1204, %v1206, %v1202
    %v1208 = vmul.f32 1.0, %v1207
    %v1209 = vxor.u32 %v1187, 2147483648
    %v1210 = vmul.f32 %v1209, 1.442695
    %v1211 = vpow.pop %v1210
    %v1212 = vadd.f32 %v1211, 1.0
    %v1213 = vrcp.pop %v1212
    %v1214 = vmul.f32 %v1212, %v1213
    %v1215 = vsub.f32 1.0, %v1214
    %v1216 = vmul.f32 %v1213, %v1215
    %v1217 = vadd.f32 %v1213, %v1216
    %vm1218 = vweird.f32 %v1212
    %vm1219 = vweird.f32 %v1213
    %vm1220 = vmor %vm1218, %vm1219
    %v1221 = vsel %vm1220, %v1213, %v1217
    %v1222 = vand.u32 2147483647, %v1212
    %vm1223 = vcmp.eq.f32.partialorder %v1222, 8.507059e+37
    %v1224 = vand.u32 %v1212, 2147483648
    %v1225 = vor.u32 1.1754944e-38, %v1224
    %v1226 = vsel %vm1223, %v1225, %v1221
    %v1227 = vmul.f32 1.0, %v1226
    %v1228 = vtanh.pop %v1188
    %v1229 = vxor.u32 %v1189, 2147483648
    %v1230 = vmul.f32 %v1229, 1.442695
    %v1231 = vpow.pop %v1230
    %v1232 = vadd.f32 %v1231, 1.0
    %v1233 = vrcp.pop %v1232
    %v1234 = vmul.f32 %v1232, %v1233
    %v1235 = vsub.f32 1.0, %v1234
    %v1236 = vmul.f32 %v1233, %v1235
    %v1237 = vadd.f32 %v1233, %v1236
    %vm1238 = vweird.f32 %v1232
    %vm1239 = vweird.f32 %v1233
    %vm1240 = vmor %vm1238, %vm1239
    %v1241 = vsel %vm1240, %v1233, %v1237
    %v1242 = vand.u32 2147483647, %v1232
    %vm1243 = vcmp.eq.f32.partialorder %v1242, 8.507059e+37
    %v1244 = vand.u32 %v1232, 2147483648
    %v1245 = vor.u32 1.1754944e-38, %v1244
    %v1246 = vsel %vm1243, %v1245, %v1241
    %v1247 = vmul.f32 1.0, %v1246
    %v1249 = vrot.slane %v1088, 7
    %v1251 = vmul.f32 %v1227, %v1249
    %v1252 = vmul.f32 %v1208, %v1228
    %v1253 = vadd.f32 %v1251, %v1252
    %v1254 = vtanh.pop %v1253
    %v1255 = vmul.f32 %v1247, %v1254
    %v1257 = vrot.slane %v1255, 4
    %1259 = vmatpush.msra.mxu0 %v273
    %1260 = vmatpush.msra.mxu0 %v269
    %1261 = vmatpush.msra.mxu0 %v265
    %1262 = vmatpush.msra.mxu0 %v261
    %1263 = vmatpush.msra.mxu0 %v257
    %1264 = vmatpush.msra.mxu0 %v253
    %1265 = vmatpush.msra.mxu0 %v249
    %1266 = vmatpush.msra.mxu0 %v245
    %1267 = vmatpush.msra.mxu0 %v241
    %1268 = vmatpush.msra.mxu0 %v237
    %1269 = vmatpush.msra.mxu0 %v233
    %1270 = vmatpush.msra.mxu0 %v229
    %1271 = vmatpush.msra.mxu0 %v225
    %1272 = vmatpush.msra.mxu0 %v221
    %1273 = vmatpush.msra.mxu0 %v217
    %1274 = vmatpush.msra.mxu0 %v213
    %1275 = vmatmul.f32.gmra.mxu0 %v1257
    %v1276 = vpop.f32.mrf.mxu0
    %v1277 = vadd.f32 0.0, %v1276
    %1278 = vdwg.mxu0
    %1279 = vmatpush.msra.mxu0 %v274
    %1280 = vmatpush.msra.mxu0 %v270
    %1281 = vmatpush.msra.mxu0 %v266
    %1282 = vmatpush.msra.mxu0 %v262
    %1283 = vmatpush.msra.mxu0 %v258
    %1284 = vmatpush.msra.mxu0 %v254
    %1285 = vmatpush.msra.mxu0 %v250
    %1286 = vmatpush.msra.mxu0 %v246
    %1287 = vmatpush.msra.mxu0 %v242
    %1288 = vmatpush.msra.mxu0 %v238
    %1289 = vmatpush.msra.mxu0 %v234
    %1290 = vmatpush.msra.mxu0 %v230
    %1291 = vmatpush.msra.mxu0 %v226
    %1292 = vmatpush.msra.mxu0 %v222
    %1293 = vmatpush.msra.mxu0 %v218
    %1294 = vmatpush.msra.mxu0 %v214
    %1295 = vmatmul.f32.gmra.mxu0 %v1257
    %v1296 = vpop.f32.mrf.mxu0
    %v1297 = vadd.f32 0.0, %v1296
    %1298 = vdwg.mxu0
    %1299 = vmatpush.msra.mxu0 %v275
    %1300 = vmatpush.msra.mxu0 %v271
    %1301 = vmatpush.msra.mxu0 %v267
    %1302 = vmatpush.msra.mxu0 %v263
    %1303 = vmatpush.msra.mxu0 %v259
    %1304 = vmatpush.msra.mxu0 %v255
    %1305 = vmatpush.msra.mxu0 %v251
    %1306 = vmatpush.msra.mxu0 %v247
    %1307 = vmatpush.msra.mxu0 %v243
    %1308 = vmatpush.msra.mxu0 %v239
    %1309 = vmatpush.msra.mxu0 %v235
    %1310 = vmatpush.msra.mxu0 %v231
    %1311 = vmatpush.msra.mxu0 %v227
    %1312 = vmatpush.msra.mxu0 %v223
    %1313 = vmatpush.msra.mxu0 %v219
    %1314 = vmatpush.msra.mxu0 %v215
    %1315 = vmatmul.f32.gmra.mxu0 %v1257
    %v1316 = vpop.f32.mrf.mxu0
    %v1317 = vadd.f32 0.0, %v1316
    %1318 = vdwg.mxu0
    %1319 = vmatpush.msra.mxu0 %v276
    %1320 = vmatpush.msra.mxu0 %v272
    %1321 = vmatpush.msra.mxu0 %v268
    %1322 = vmatpush.msra.mxu0 %v264
    %1323 = vmatpush.msra.mxu0 %v260
    %1324 = vmatpush.msra.mxu0 %v256
    %1325 = vmatpush.msra.mxu0 %v252
    %1326 = vmatpush.msra.mxu0 %v248
    %1327 = vmatpush.msra.mxu0 %v244
    %1328 = vmatpush.msra.mxu0 %v240
    %1329 = vmatpush.msra.mxu0 %v236
    %1330 = vmatpush.msra.mxu0 %v232
    %1331 = vmatpush.msra.mxu0 %v228
    %1332 = vmatpush.msra.mxu0 %v224
    %1333 = vmatpush.msra.mxu0 %v220
    %1334 = vmatpush.msra.mxu0 %v216
    %1335 = vmatmul.f32.gmra.mxu0 %v1257
    %v1336 = vpop.f32.mrf.mxu0
    %v1337 = vadd.f32 0.0, %v1336
    %1338 = vdwg.mxu0
    %v1343 = vrot.slane %v1277, 3
    %v1344 = vrot.slane %v1297, 3
    %v1345 = vrot.slane %v1317, 3
    %v1346 = vrot.slane %v1337, 3
    %v1351 = vadd.f32 %v448, %v1343
    %v1352 = vadd.f32 %v449, %v1344
    %v1353 = vadd.f32 %v450, %v1345
    %v1354 = vadd.f32 %v451, %v1346
    %v1355 = vxor.u32 %v1351, 2147483648
    %v1356 = vmul.f32 %v1355, 1.442695
    %v1357 = vpow.pop %v1356
    %v1358 = vadd.f32 %v1357, 1.0
    %v1359 = vrcp.pop %v1358
    %v1360 = vmul.f32 %v1358, %v1359
    %v1361 = vsub.f32 1.0, %v1360
    %v1362 = vmul.f32 %v1359, %v1361
    %v1363 = vadd.f32 %v1359, %v1362
    %vm1364 = vweird.f32 %v1358
    %vm1365 = vweird.f32 %v1359
    %vm1366 = vmor %vm1364, %vm1365
    %v1367 = vsel %vm1366, %v1359, %v1363
    %v1368 = vand.u32 2147483647, %v1358
    %vm1369 = vcmp.eq.f32.partialorder %v1368, 8.507059e+37
    %v1370 = vand.u32 %v1358, 2147483648
    %v1371 = vor.u32 1.1754944e-38, %v1370
    %v1372 = vsel %vm1369, %v1371, %v1367
    %v1373 = vmul.f32 1.0, %v1372
    %v1374 = vxor.u32 %v1352, 2147483648
    %v1375 = vmul.f32 %v1374, 1.442695
    %v1376 = vpow.pop %v1375
    %v1377 = vadd.f32 %v1376, 1.0
    %v1378 = vrcp.pop %v1377
    %v1379 = vmul.f32 %v1377, %v1378
    %v1380 = vsub.f32 1.0, %v1379
    %v1381 = vmul.f32 %v1378, %v1380
    %v1382 = vadd.f32 %v1378, %v1381
    %vm1383 = vweird.f32 %v1377
    %vm1384 = vweird.f32 %v1378
    %vm1385 = vmor %vm1383, %vm1384
    %v1386 = vsel %vm1385, %v1378, %v1382
    %v1387 = vand.u32 2147483647, %v1377
    %vm1388 = vcmp.eq.f32.partialorder %v1387, 8.507059e+37
    %v1389 = vand.u32 %v1377, 2147483648
    %v1390 = vor.u32 1.1754944e-38, %v1389
    %v1391 = vsel %vm1388, %v1390, %v1386
    %v1392 = vmul.f32 1.0, %v1391
    %v1393 = vtanh.pop %v1353
    %v1394 = vxor.u32 %v1354, 2147483648
    %v1395 = vmul.f32 %v1394, 1.442695
    %v1396 = vpow.pop %v1395
    %v1397 = vadd.f32 %v1396, 1.0
    %v1398 = vrcp.pop %v1397
    %v1399 = vmul.f32 %v1397, %v1398
    %v1400 = vsub.f32 1.0, %v1399
    %v1401 = vmul.f32 %v1398, %v1400
    %v1402 = vadd.f32 %v1398, %v1401
    %vm1403 = vweird.f32 %v1397
    %vm1404 = vweird.f32 %v1398
    %vm1405 = vmor %vm1403, %vm1404
    %v1406 = vsel %vm1405, %v1398, %v1402
    %v1407 = vand.u32 2147483647, %v1397
    %vm1408 = vcmp.eq.f32.partialorder %v1407, 8.507059e+37
    %v1409 = vand.u32 %v1397, 2147483648
    %v1410 = vor.u32 1.1754944e-38, %v1409
    %v1411 = vsel %vm1408, %v1410, %v1406
    %v1412 = vmul.f32 1.0, %v1411
    %v1414 = vrot.slane %v1253, 7
    %v1416 = vmul.f32 %v1392, %v1414
    %v1417 = vmul.f32 %v1373, %v1393
    %v1418 = vadd.f32 %v1416, %v1417
    %v1419 = vtanh.pop %v1418
    %v1420 = vmul.f32 %v1412, %v1419
    %vm1421 = vcmask 1040384
    %v1422 = vsel %vm1421, %v598, %v760
    %vm1423 = vcmask 1041408
    %v1424 = vsel %vm1423, %v1422, %v925
    %vm1425 = vcmask 1042432
    %v1426 = vsel %vm1425, %v1424, %v1090
    %vm1427 = vcmask 1043456
    %v1428 = vsel %vm1427, %v1426, %v1255
    %vm1429 = vcmask 1044480
    %v1430 = vsel %vm1429, %v1428, %v1420
    %v1432 = vsel %vm61, %v1430, 0
    %1434 = vmatpush.msra.mxu0 0.0
    %1435 = vmatpush.msra.mxu0 0.0
    %1436 = vmatpush.msra.mxu0 0.0
    %1437 = vmatpush.msra.mxu0 0.0
    %1438 = vmatpush.msra.mxu0 0.0
    %1439 = vmatpush.msra.mxu0 0.0
    %1440 = vmatpush.msra.mxu0 0.0
    %1441 = vmatpush.msra.mxu0 0.0
    %1442 = vmatpush.msra.mxu0 0.0
    %1443 = vmatpush.msra.mxu0 0.0
    %1444 = vmatpush.msra.mxu0 0.0
    %1445 = vmatpush.msra.mxu0 0.0
    %1446 = vmatpush.msra.mxu0 0.0
    %1447 = vmatpush.msra.mxu0 0.0
    %1448 = vmatpush.msra.mxu0 0.0
    %1449 = vmatpush.msra.mxu0 %v1432
    %1450 = vmatmul.f32.gmra.mxu0 %v59
    %v1451 = vpop.f32.mrf.mxu0
    %v1452 = vadd.f32 0.0, %v1451
    %1453 = vdwg.mxu0
    %v1454 = vld [vmem:[%s3 + $0x4] sm:$0x1]
    %v1455 = vperm.slane %v1454, 0
    %v1456 = vmul.f32 %v1430, %v1455
    %v1457 = vsub.f32 1.0, %v1454
    %v1458 = vperm.slane %v1457, 0
    %v1459 = vmul.f32 %v1452, %v1458
    %v1460 = vadd.f32 %v1456, %v1459
    %v1461 = vld [vmem:[#allocation4] sm:$0xff]
    %v1462 = vld [vmem:[#allocation4 + $0x8] sm:$0xff]
    %v1463 = vld [vmem:[#allocation4 + $0x10] sm:$0xff]
    %v1464 = vld [vmem:[#allocation4 + $0x18] sm:$0xff]
    %v1465 = vld [vmem:[#allocation4 + $0x20] sm:$0xff]
    %v1466 = vld [vmem:[#allocation4 + $0x28] sm:$0xff]
    %v1467 = vld [vmem:[#allocation4 + $0x30] sm:$0xff]
    %v1468 = vld [vmem:[#allocation4 + $0x38] sm:$0xff]
    %v1469 = vld [vmem:[#allocation4 + $0x40] sm:$0xff]
    %v1470 = vld [vmem:[#allocation4 + $0x48] sm:$0xff]
    %v1471 = vld [vmem:[#allocation4 + $0x50] sm:$0xff]
    %v1472 = vld [vmem:[#allocation4 + $0x58] sm:$0xff]
    %v1473 = vld [vmem:[#allocation4 + $0x60] sm:$0xff]
    %v1474 = vld [vmem:[#allocation4 + $0x68] sm:$0xff]
    %v1475 = vld [vmem:[#allocation4 + $0x70] sm:$0xff]
    %v1476 = vld [vmem:[#allocation4 + $0x78] sm:$0xff]
    %v1477 = vld [vmem:[#allocation4 + $0x80] sm:$0xff]
    %v1478 = vld [vmem:[#allocation4 + $0x88] sm:$0xff]
    %v1479 = vld [vmem:[#allocation4 + $0x90] sm:$0xff]
    %v1480 = vld [vmem:[#allocation4 + $0x98] sm:$0xff]
    %v1481 = vld [vmem:[#allocation4 + $0xa0] sm:$0xff]
    %v1482 = vld [vmem:[#allocation4 + $0xa8] sm:$0xff]
    %v1483 = vld [vmem:[#allocation4 + $0xb0] sm:$0xff]
    %v1484 = vld [vmem:[#allocation4 + $0xb8] sm:$0xff]
    %v1485 = vld [vmem:[#allocation4 + $0xc0] sm:$0xff]
    %v1486 = vld [vmem:[#allocation4 + $0xc8] sm:$0xff]
    %v1487 = vld [vmem:[#allocation4 + $0xd0] sm:$0xff]
    %v1488 = vld [vmem:[#allocation4 + $0xd8] sm:$0xff]
    %v1489 = vld [vmem:[#allocation4 + $0xe0] sm:$0xff]
    %v1490 = vld [vmem:[#allocation4 + $0xe8] sm:$0xff]
    %v1491 = vld [vmem:[#allocation4 + $0xf0] sm:$0xff]
    %v1492 = vld [vmem:[#allocation4 + $0xf8] sm:$0xff]
    %v1493 = vld [vmem:[#allocation4 + $0x100] sm:$0xff]
    %v1494 = vld [vmem:[#allocation4 + $0x108] sm:$0xff]
    %v1495 = vld [vmem:[#allocation4 + $0x110] sm:$0xff]
    %v1496 = vld [vmem:[#allocation4 + $0x118] sm:$0xff]
    %v1497 = vld [vmem:[#allocation4 + $0x120] sm:$0xff]
    %v1498 = vld [vmem:[#allocation4 + $0x128] sm:$0xff]
    %v1499 = vld [vmem:[#allocation4 + $0x130] sm:$0xff]
    %v1500 = vld [vmem:[#allocation4 + $0x138] sm:$0xff]
    %v1501 = vld [vmem:[#allocation4 + $0x140] sm:$0xff]
    %v1502 = vld [vmem:[#allocation4 + $0x148] sm:$0xff]
    %v1503 = vld [vmem:[#allocation4 + $0x150] sm:$0xff]
    %v1504 = vld [vmem:[#allocation4 + $0x158] sm:$0xff]
    %v1505 = vld [vmem:[#allocation4 + $0x160] sm:$0xff]
    %v1506 = vld [vmem:[#allocation4 + $0x168] sm:$0xff]
    %v1507 = vld [vmem:[#allocation4 + $0x170] sm:$0xff]
    %v1508 = vld [vmem:[#allocation4 + $0x178] sm:$0xff]
    %v1509 = vld [vmem:[%s3] sm:$0x1]
    %v1510 = vld [vmem:[%s3 + $0x1] sm:$0x1]
    %v1511 = vld [vmem:[%s3 + $0x2] sm:$0x1]
    %v1512 = vld [vmem:[%s3 + $0x3] sm:$0x1]
    %v1513 = vld [vmem:[%s4] sm:$0x1]
    %v1514 = vld [vmem:[%s4 + $0x1] sm:$0x1]
    %v1515 = vperm.slane %v1509, 0
    %1516 = vmatpush.msra.mxu0 %v1476
    %1517 = vmatpush.msra.mxu0 %v1475
    %1518 = vmatpush.msra.mxu0 %v1474
    %1519 = vmatpush.msra.mxu0 %v1473
    %1520 = vmatpush.msra.mxu0 %v1472
    %1521 = vmatpush.msra.mxu0 %v1471
    %1522 = vmatpush.msra.mxu0 %v1470
    %1523 = vmatpush.msra.mxu0 %v1469
    %1524 = vmatpush.msra.mxu0 %v1468
    %1525 = vmatpush.msra.mxu0 %v1467
    %1526 = vmatpush.msra.mxu0 %v1466
    %1527 = vmatpush.msra.mxu0 %v1465
    %1528 = vmatpush.msra.mxu0 %v1464
    %1529 = vmatpush.msra.mxu0 %v1463
    %1530 = vmatpush.msra.mxu0 %v1462
    %1531 = vmatpush.msra.mxu0 %v1461
    %1532 = vmatmul.f32.gmra.mxu0 %v1460
    %v1533 = vpop.f32.mrf.mxu0
    %v1534 = vadd.f32 %v1515, %v1533
    %1535 = vdwg.mxu0
    %v1536 = vmul.f32 %v1534, 0.5
    %v1537 = vmul.f32 %v1534, 0.70710677
    %v1538 = vand.u32 2147483647, %v1537
    %v1539 = vmul.f32 %v1538, 0.3275911
    %v1540 = vadd.f32 %v1539, 1.0
    %v1541 = vrcp.pop %v1540
    %v1542 = vmul.f32 %v1540, %v1541
    %v1543 = vsub.f32 1.0, %v1542
    %v1544 = vmul.f32 %v1541, %v1543
    %v1545 = vadd.f32 %v1541, %v1544
    %vm1546 = vweird.f32 %v1540
    %vm1547 = vweird.f32 %v1541
    %vm1548 = vmor %vm1546, %vm1547
    %v1549 = vsel %vm1548, %v1541, %v1545
    %v1550 = vand.u32 2147483647, %v1540
    %vm1551 = vcmp.eq.f32.partialorder %v1550, 8.507059e+37
    %v1552 = vand.u32 %v1540, 2147483648
    %v1553 = vor.u32 1.1754944e-38, %v1552
    %v1554 = vsel %vm1551, %v1553, %v1549
    %v1555 = vmul.f32 1.0, %v1554
    %v1556 = vmul.f32 %v1555, 1.0614054
    %v1557 = vadd.f32 %v1556, -1.4531521
    %v1558 = vmul.f32 %v1555, %v1557
    %v1559 = vadd.f32 %v1558, 1.4214138
    %v1560 = vmul.f32 %v1555, %v1559
    %v1561 = vadd.f32 %v1560, -0.28449672
    %v1562 = vmul.f32 %v1555, %v1561
    %v1563 = vadd.f32 %v1562, 0.2548296
    %v1564 = vmul.f32 %v1555, %v1563
    %v1565 = vsub.f32 0.0, %v1538
    %v1566 = vmul.f32 %v1565, %v1538
    %v1567 = vmul.f32 %v1566, 1.442695
    %v1568 = vpow.pop %v1567
    %v1569 = vmul.f32 %v1564, %v1568
    %v1570 = vsub.f32 1.0, %v1569
    %vm1571 = vcmp.ge.f32.partialorder %v1537, 0.0
    %v1572 = vsub.f32 0.0, %v1570
    %v1573 = vsel %vm1571, %v1570, %v1572
    %v1574 = vadd.f32 %v1573, 1.0
    %v1575 = vmul.f32 %v1536, %v1574
    %v1576 = vperm.slane %v1514, 0
    %v1577 = vmul.f32 %v1575, %v1576
    %1578 = vmatpush.msra.mxu0 %v1508
    %1579 = vmatpush.msra.mxu0 %v1507
    %1580 = vmatpush.msra.mxu0 %v1506
    %1581 = vmatpush.msra.mxu0 %v1505
    %1582 = vmatpush.msra.mxu0 %v1504
    %1583 = vmatpush.msra.mxu0 %v1503
    %1584 = vmatpush.msra.mxu0 %v1502
    %1585 = vmatpush.msra.mxu0 %v1501
    %1586 = vmatpush.msra.mxu0 %v1500
    %1587 = vmatpush.msra.mxu0 %v1499
    %1588 = vmatpush.msra.mxu0 %v1498
    %1589 = vmatpush.msra.mxu0 %v1497
    %1590 = vmatpush.msra.mxu0 %v1496
    %1591 = vmatpush.msra.mxu0 %v1495
    %1592 = vmatpush.msra.mxu0 %v1494
    %1593 = vmatpush.msra.mxu0 %v1493
    %1594 = vmatmul.f32.gmra.mxu0 %v1577
    %v1595 = vpop.f32.mrf.mxu0
    %v1596 = vadd.f32 0.0, %v1595
    %1597 = vdwg.mxu0
    %v1598 = vmul.f32 %v1596, 0.03125
    %v1599 = vperm.slane %v1513, 0
    %v1600 = vmul.f32 %v1599, %v1598
    %v1601 = vperm.slane %v1510, 0
    %1602 = vmatpush.msra.mxu0 %v1492
    %1603 = vmatpush.msra.mxu0 %v1491
    %1604 = vmatpush.msra.mxu0 %v1490
    %1605 = vmatpush.msra.mxu0 %v1489
    %1606 = vmatpush.msra.mxu0 %v1488
    %1607 = vmatpush.msra.mxu0 %v1487
    %1608 = vmatpush.msra.mxu0 %v1486
    %1609 = vmatpush.msra.mxu0 %v1485
    %1610 = vmatpush.msra.mxu0 %v1484
    %1611 = vmatpush.msra.mxu0 %v1483
    %1612 = vmatpush.msra.mxu0 %v1482
    %1613 = vmatpush.msra.mxu0 %v1481
    %1614 = vmatpush.msra.mxu0 %v1480
    %1615 = vmatpush.msra.mxu0 %v1479
    %1616 = vmatpush.msra.mxu0 %v1478
    %1617 = vmatpush.msra.mxu0 %v1477
    %1618 = vmatmul.f32.gmra.mxu0 %v1575
    %v1619 = vpop.f32.mrf.mxu0
    %v1620 = vadd.f32 %v1601, %v1619
    %1621 = vdwg.mxu0
    %v1622 = vadd.f32 %v1620, %v1600
    %v1623 = vmul.f32 %v1622, 0.5
    %v1624 = vmul.f32 %v1622, 0.70710677
    %v1625 = vand.u32 2147483647, %v1624
    %v1626 = vmul.f32 %v1625, 0.3275911
    %v1627 = vadd.f32 %v1626, 1.0
    %v1628 = vrcp.pop %v1627
    %v1629 = vmul.f32 %v1627, %v1628
    %v1630 = vsub.f32 1.0, %v1629
    %v1631 = vmul.f32 %v1628, %v1630
    %v1632 = vadd.f32 %v1628, %v1631
    %vm1633 = vweird.f32 %v1627
    %vm1634 = vweird.f32 %v1628
    %vm1635 = vmor %vm1633, %vm1634
    %v1636 = vsel %vm1635, %v1628, %v1632
    %v1637 = vand.u32 2147483647, %v1627
    %vm1638 = vcmp.eq.f32.partialorder %v1637, 8.507059e+37
    %v1639 = vand.u32 %v1627, 2147483648
    %v1640 = vor.u32 1.1754944e-38, %v1639
    %v1641 = vsel %vm1638, %v1640, %v1636
    %v1642 = vmul.f32 1.0, %v1641
    %v1643 = vmul.f32 %v1642, 1.0614054
    %v1644 = vadd.f32 %v1643, -1.4531521
    %v1645 = vmul.f32 %v1642, %v1644
    %v1646 = vadd.f32 %v1645, 1.4214138
    %v1647 = vmul.f32 %v1642, %v1646
    %v1648 = vadd.f32 %v1647, -0.28449672
    %v1649 = vmul.f32 %v1642, %v1648
    %v1650 = vadd.f32 %v1649, 0.2548296
    %v1651 = vmul.f32 %v1642, %v1650
    %v1652 = vsub.f32 0.0, %v1625
    %v1653 = vmul.f32 %v1652, %v1625
    %v1654 = vmul.f32 %v1653, 1.442695
    %v1655 = vpow.pop %v1654
    %v1656 = vmul.f32 %v1651, %v1655
    %v1657 = vsub.f32 1.0, %v1656
    %vm1658 = vcmp.ge.f32.partialorder %v1624, 0.0
    %v1659 = vsub.f32 0.0, %v1657
    %v1660 = vsel %vm1658, %v1657, %v1659
    %v1661 = vadd.f32 %v1660, 1.0
    %v1662 = vmul.f32 %v1623, %v1661
    %1663 = vmatpush.msra.mxu0 %v1508
    %1664 = vmatpush.msra.mxu0 %v1507
    %1665 = vmatpush.msra.mxu0 %v1506
    %1666 = vmatpush.msra.mxu0 %v1505
    %1667 = vmatpush.msra.mxu0 %v1504
    %1668 = vmatpush.msra.mxu0 %v1503
    %1669 = vmatpush.msra.mxu0 %v1502
    %1670 = vmatpush.msra.mxu0 %v1501
    %1671 = vmatpush.msra.mxu0 %v1500
    %1672 = vmatpush.msra.mxu0 %v1499
    %1673 = vmatpush.msra.mxu0 %v1498
    %1674 = vmatpush.msra.mxu0 %v1497
    %1675 = vmatpush.msra.mxu0 %v1496
    %1676 = vmatpush.msra.mxu0 %v1495
    %1677 = vmatpush.msra.mxu0 %v1494
    %1678 = vmatpush.msra.mxu0 %v1493
    %1679 = vmatmul.f32.gmra.mxu0 %v1662
    %v1680 = vpop.f32.mrf.mxu0
    %v1681 = vadd.f32 0.0, %v1680
    %1682 = vdwg.mxu0
    %v1683 = vmul.f32 %v1681, 0.03125
    %v1684 = vsub.f32 %v1662, %v1683
    %v1685 = vmul.f32 %v1684, %v1684
    %1686 = vmatpush.msra.mxu0 %v1508
    %1687 = vmatpush.msra.mxu0 %v1507
    %1688 = vmatpush.msra.mxu0 %v1506
    %1689 = vmatpush.msra.mxu0 %v1505
    %1690 = vmatpush.msra.mxu0 %v1504
    %1691 = vmatpush.msra.mxu0 %v1503
    %1692 = vmatpush.msra.mxu0 %v1502
    %1693 = vmatpush.msra.mxu0 %v1501
    %1694 = vmatpush.msra.mxu0 %v1500
    %1695 = vmatpush.msra.mxu0 %v1499
    %1696 = vmatpush.msra.mxu0 %v1498
    %1697 = vmatpush.msra.mxu0 %v1497
    %1698 = vmatpush.msra.mxu0 %v1496
    %1699 = vmatpush.msra.mxu0 %v1495
    %1700 = vmatpush.msra.mxu0 %v1494
    %1701 = vmatpush.msra.mxu0 %v1493
    %1702 = vmatmul.f32.gmra.mxu0 %v1685
    %v1703 = vpop.f32.mrf.mxu0
    %v1704 = vadd.f32 0.0, %v1703
    %1705 = vdwg.mxu0
    %v1706 = vmul.f32 %v1704, 0.03125
    %v1707 = vadd.f32 %v1706, 1e-05
    %v1708 = vrsqrt.pop %v1707
    %v1709 = vmul.f32 %v1708, %v1707
    %v1710 = vmul.f32 %v1709, %v1708
    %v1711 = vmul.f32 0.5, %v1710
    %v1712 = vsub.f32 1.5, %v1711
    %v1713 = vmul.f32 %v1708, %v1712
    %vm1714 = vweird.f32 %v1707
    %vm1715 = vweird.f32 %v1708
    %vm1716 = vmor %vm1714, %vm1715
    %v1717 = vsel %vm1716, %v1708, %v1713
    %v1718 = vmul.f32 %v1684, %v1717
    %v1719 = vperm.slane %v1511, 0
    %v1720 = vmul.f32 %v1718, %v1719
    %v1721 = vperm.slane %v1512, 0
    %v1722 = vadd.f32 %v1720, %v1721
    %v1723 = vadd.f32 %v55, %v1722
    %1724 = vst [vmem:[%s6] sm:$0x3f] %v1723
    // Predicated region
    $region34: #{forward.4} parent=1 // pred_check
      _
    $region35: #{forward.4} parent=1 // pred_check_branch
      %1726 = sbr.rel (0) target = $region37
    $region36: #{forward.4} parent=1 // pred_region
      _
    $region37: #{forward.4} parent=1 // pred_fallthru
      _
    // Predicated region
    $region38: #{forward.4} parent=1 // pred_check
      _
    $region39: #{forward.4} parent=1 // pred_check_branch
      %1728 = sbr.rel (0) target = $region41
    $region40: #{forward.4} parent=1 // pred_region
      _
    $region41: #{forward.4} parent=1 // pred_fallthru
      _
    %1729 = vsyncpa [#allocation3], 1
    %1730 = vsyncpa [#allocation5], 1

</llo_original>
